<compile_context>
chip_gen: v7x
topology: tpu7x:2x2x1
jax: 0.10.0
libtpu: 0.0.40
codegen_flags: <defaults>
</compile_context>

<pallas_src>
import jax
import jax.numpy as jnp
from jax.experimental import pallas as pl
from jax.experimental.pallas import tpu as pltpu


# ------------------------- network constants --------------------------------
H1, W1 = 8, 8            # spatial size of the conv1 / conv2 stage
H2, W2 = 4, 4            # spatial size of the conv3 / conv4 stage (post pool)
C1, C2, C3, C4 = 16, 32, 64, 64
FC1, FC2 = 256, 128


# =============================================================================
# Fused kernel: conv1..conv4 (+BN+ReLU, 2 max-pools) + fc1/fc2/fc3
# =============================================================================
def _fused_kernel(x_ref,
                  bw1_ref, cs1_ref, cb1_ref,
                  bw2_ref, cs2_ref, cb2_ref,
                  bw3_ref, cs3_ref, cb3_ref,
                  bw4_ref, cs4_ref, cb4_ref,
                  w1a_ref, w1b_ref, fs1_ref, fb1_ref,
                  w2_ref, fs2_ref, fb2_ref,
                  w3_ref, fb3_ref,
                  o_ref,
                  p1, p2, p3, p4, s2, s4):
    Nb = x_ref.shape[0]
    R1 = Nb * (H1 + 2)          # padded-row count, 8x8 stage
    M1 = R1 - 2                 # conv output rows, 8x8 stage
    R2 = Nb * (H2 + 2)          # padded-row count, 4x4 stage
    M2 = R2 - 2

    def conv_bn_relu(pad_ref, bw_ref, scale_ref, shift_ref, M):
        # 3x3 conv == 3 row-shifted matmuls against block-banded weights.
        acc = jnp.dot(pad_ref[0:M, :], bw_ref[0],
                      preferred_element_type=jnp.float32)
        acc = acc + jnp.dot(pad_ref[1:M + 1, :], bw_ref[1],
                            preferred_element_type=jnp.float32)
        acc = acc + jnp.dot(pad_ref[2:M + 2, :], bw_ref[2],
                            preferred_element_type=jnp.float32)
        # folded BatchNorm (scale/shift hoisted: loaded once per layer) + ReLU
        return jnp.maximum(acc * scale_ref[...] + shift_ref[...], 0.0)

    # Padded scratch slabs: the h-halo rows must be zero every grid step.
    p1[...] = jnp.zeros_like(p1)
    p2[...] = jnp.zeros_like(p2)
    p3[...] = jnp.zeros_like(p3)
    p4[...] = jnp.zeros_like(p4)

    # ---- stage the input block (rows=(n,h), lanes=(w,c)) into p1 -----------
    for n in range(Nb):
        p1[n * (H1 + 2) + 1: n * (H1 + 2) + 1 + H1, :] = x_ref[n]

    # ---- conv1 + BN + ReLU --------------------------------------------------
    y1 = conv_bn_relu(p1, bw1_ref, cs1_ref, cb1_ref, M1)       # (M1, W1*C1)
    for n in range(Nb):                                        # interior only
        p2[n * (H1 + 2) + 1: n * (H1 + 2) + 1 + H1, :] = \
            y1[n * (H1 + 2): n * (H1 + 2) + H1, :]

    # ---- conv2 + BN + ReLU + 2x2 max pool -----------------------------------
    y2 = conv_bn_relu(p2, bw2_ref, cs2_ref, cb2_ref, M1)       # (M1, W1*C2)
    # W-direction pool inside the lane dimension (lanes are (w, c)).
    for j in range(W1 // 2):
        s2[:, j * C2:(j + 1) * C2] = jnp.maximum(
            y2[:, (2 * j) * C2:(2 * j + 1) * C2],
            y2[:, (2 * j + 1) * C2:(2 * j + 2) * C2])
    # H-direction pool via stride-2 row reads, stored straight into p3 interior.
    for n in range(Nb):
        a = s2[pl.ds(n * (H1 + 2), H2, 2), :]       # rows h = 0,2,4,6
        b = s2[pl.ds(n * (H1 + 2) + 1, H2, 2), :]   # rows h = 1,3,5,7
        p3[n * (H2 + 2) + 1: n * (H2 + 2) + 1 + H2, :] = jnp.maximum(a, b)

    # ---- conv3 + BN + ReLU --------------------------------------------------
    y3 = conv_bn_relu(p3, bw3_ref, cs3_ref, cb3_ref, M2)       # (M2, W2*C3)
    for n in range(Nb):
        p4[n * (H2 + 2) + 1: n * (H2 + 2) + 1 + H2, :] = \
            y3[n * (H2 + 2): n * (H2 + 2) + H2, :]

    # ---- conv4 + BN + ReLU + 2x2 max pool -----------------------------------
    y4 = conv_bn_relu(p4, bw4_ref, cs4_ref, cb4_ref, M2)       # (M2, W2*C4)
    for j in range(W2 // 2):
        s4[:, j * C4:(j + 1) * C4] = jnp.maximum(
            y4[:, (2 * j) * C4:(2 * j + 1) * C4],
            y4[:, (2 * j + 1) * C4:(2 * j + 2) * C4])
    # H-direction pool, vectorized over the whole batch block (strided reads):
    # rows n*(H2+2)+{0,1} -> pooled row i=0,  rows n*(H2+2)+{2,3} -> i=1.
    h0 = jnp.maximum(s4[pl.ds(0, Nb, H2 + 2), :],
                     s4[pl.ds(1, Nb, H2 + 2), :])              # (Nb, 2*C4)
    h1 = jnp.maximum(s4[pl.ds(2, Nb, H2 + 2), :],
                     s4[pl.ds(3, Nb, H2 + 2), :])              # (Nb, 2*C4)

    # ---- fc1 / fc2 / fc3 (NCHW-flatten permutation folded into w1a/w1b) ----
    z = (jnp.dot(h0, w1a_ref[...], preferred_element_type=jnp.float32) +
         jnp.dot(h1, w1b_ref[...], preferred_element_type=jnp.float32))
    z = jnp.maximum(z * fs1_ref[...] + fb1_ref[...], 0.0)       # (Nb, 256)
    z = jnp.dot(z, w2_ref[...], preferred_element_type=jnp.float32)
    z = jnp.maximum(z * fs2_ref[...] + fb2_ref[...], 0.0)       # (Nb, 128)
    z = jnp.dot(z, w3_ref[...], preferred_element_type=jnp.float32) + fb3_ref[...]
    o_ref[...] = z.astype(o_ref.dtype)                          # (Nb, classes)


def _const_spec(shape):
    zeros = (0,) * len(shape)
    return pl.BlockSpec(shape, lambda i, _z=zeros: _z)


# =============================================================================
# Forward pass wrapper (single pallas_call)
# =============================================================================
def image_8x8_forward(x_nchw, params, block_n=8):
    N, cin = x_nchw.shape[0], x_nchw.shape[1]
    num_classes = params["fb3"].shape[-1]

    # One tiny input-layout prep (NCHW -> rows=(n,h), lanes=(w,c)).
    x = jnp.transpose(x_nchw.astype(jnp.float32), (0, 2, 3, 1))   # (N,8,8,cin)
    x = x.reshape(N, H1, W1 * cin)                                # (N,8,W1*cin)
    n_pad = (-N) % block_n
    if n_pad:
        x = jnp.pad(x, ((0, n_pad), (0, 0), (0, 0)))
    n_total = N + n_pad

    R1 = block_n * (H1 + 2)
    M1 = R1 - 2
    R2 = block_n * (H2 + 2)
    M2 = R2 - 2

    operands = (x,
                params["bw1"], params["cs1"], params["cb1"],
                params["bw2"], params["cs2"], params["cb2"],
                params["bw3"], params["cs3"], params["cb3"],
                params["bw4"], params["cs4"], params["cb4"],
                params["w1a"], params["w1b"], params["fs1"], params["fb1"],
                params["w2"], params["fs2"], params["fb2"],
                params["w3"], params["fb3"])

    in_specs = [pl.BlockSpec((block_n, H1, W1 * cin), lambda i: (i, 0, 0))]
    in_specs += [_const_spec(op.shape) for op in operands[1:]]

    out = pl.pallas_call(
        _fused_kernel,
        out_shape=jax.ShapeDtypeStruct((n_total, num_classes), jnp.float32),
        grid=(n_total // block_n,),
        in_specs=in_specs,
        out_specs=pl.BlockSpec((block_n, num_classes), lambda i: (i, 0)),
        scratch_shapes=[
            pltpu.VMEM((R1, W1 * cin), jnp.float32),          # p1 (padded in)
            pltpu.VMEM((R1, W1 * C1), jnp.float32),           # p2
            pltpu.VMEM((R2, W2 * C2), jnp.float32),           # p3
            pltpu.VMEM((R2, W2 * C3), jnp.float32),           # p4
            pltpu.VMEM((M1, (W1 // 2) * C2), jnp.float32),    # s2 (W-pooled)
            pltpu.VMEM((M2, (W2 // 2) * C4), jnp.float32),    # s4 (W-pooled)
        ],
        compiler_params=pltpu.CompilerParams(
            dimension_semantics=("parallel",)),
    )(*operands)
    return out[:N]


# =============================================================================
# Parameters: synthetic init, BN folded, conv weights banded, fc1 permuted
# =============================================================================
def init_params(key, in_channels=3, num_classes=10, eps=1e-5):
    def fold_bn(bias, gamma, beta, mean, var):
        s = gamma / jnp.sqrt(var + eps)
        return s, (bias - mean) * s + beta

    def make_banded(k_hwio, W):
        # 3x3 HWIO kernel -> 3 block-banded matrices (W*Cin, W*Cout); taps
        # that fall outside [0, W) are dropped (== the zero padding in W).
        _, _, cin, cout = k_hwio.shape
        bw = jnp.zeros((3, W * cin, W * cout), jnp.float32)
        for kh in range(3):
            for wo in range(W):
                for kw in range(3):
                    wi = wo + kw - 1
                    if 0 <= wi < W:
                        bw = bw.at[kh, wi * cin:(wi + 1) * cin,
                                   wo * cout:(wo + 1) * cout].set(k_hwio[kh, kw])
        return bw

    def conv_p(k, cin, cout, W):
        kw_, kb, kg, kbt, km, kv = jax.random.split(k, 6)
        w = 0.1 * jax.random.normal(kw_, (3, 3, cin, cout), jnp.float32)
        b = 0.1 * jax.random.normal(kb, (cout,), jnp.float32)
        gamma = jax.random.uniform(kg, (cout,), jnp.float32, 0.5, 1.5)
        beta = 0.1 * jax.random.normal(kbt, (cout,), jnp.float32)
        mean = 0.1 * jax.random.normal(km, (cout,), jnp.float32)
        var = jax.random.uniform(kv, (cout,), jnp.float32, 0.5, 1.5)
        s, sh = fold_bn(b, gamma, beta, mean, var)
        kernel_ready = (make_banded(w, W),
                        jnp.tile(s, W).reshape(1, W * cout),
                        jnp.tile(sh, W).reshape(1, W * cout))
        return kernel_ready, (w, s, sh)

    def fc_p(k, din, dout, bn=True):
        kw_, kb, kg, kbt, km, kv = jax.random.split(k, 6)
        w = 0.1 * jax.random.normal(kw_, (din, dout), jnp.float32)
        b = 0.1 * jax.random.normal(kb, (dout,), jnp.float32)
        if bn:
            gamma = jax.random.uniform(kg, (dout,), jnp.float32, 0.5, 1.5)
            beta = 0.1 * jax.random.normal(kbt, (dout,), jnp.float32)
            mean = 0.1 * jax.random.normal(km, (dout,), jnp.float32)
            var = jax.random.uniform(kv, (dout,), jnp.float32, 0.5, 1.5)
            s, sh = fold_bn(b, gamma, beta, mean, var)
        else:
            s, sh = jnp.ones((dout,), jnp.float32), b
        return w, s.reshape(1, dout), sh.reshape(1, dout)

    ks = jax.random.split(key, 7)
    p, rp = {}, {}
    (p["bw1"], p["cs1"], p["cb1"]), (rp["k1"], rp["s1"], rp["b1"]) = \
        conv_p(ks[0], in_channels, C1, W1)
    (p["bw2"], p["cs2"], p["cb2"]), (rp["k2"], rp["s2"], rp["b2"]) = \
        conv_p(ks[1], C1, C2, W1)
    (p["bw3"], p["cs3"], p["cb3"]), (rp["k3"], rp["s3"], rp["b3"]) = \
        conv_p(ks[2], C2, C3, W2)
    (p["bw4"], p["cs4"], p["cb4"]), (rp["k4"], rp["s4"], rp["b4"]) = \
        conv_p(ks[3], C3, C4, W2)

    # fc1: created in PyTorch NCHW-flatten row order (c*4 + i*2 + j), then
    # permuted ONCE here to the kernel's NHWC-flatten order (i*128 + j*64 + c)
    # and split into the i=0 / i=1 halves the kernel consumes.
    fw1, p["fs1"], p["fb1"] = fc_p(ks[4], C4 * 2 * 2, FC1)
    rp["fw1"], rp["fs1"], rp["fb1"] = fw1, p["fs1"], p["fb1"]
    idx = jnp.arange(C4 * 2 * 2)
    i_, j_, c_ = idx // (2 * C4), (idx // C4) % 2, idx % C4
    fw1_nhwc = fw1[c_ * 4 + i_ * 2 + j_, :]
    p["w1a"], p["w1b"] = fw1_nhwc[:2 * C4], fw1_nhwc[2 * C4:]

    p["w2"], p["fs2"], p["fb2"] = fc_p(ks[5], FC1, FC2)
    rp["fw2"], rp["fs2"], rp["fb2"] = p["w2"], p["fs2"], p["fb2"]
    p["w3"], _, p["fb3"] = fc_p(ks[6], FC2, num_classes, bn=False)
    rp["fw3"], rp["fb3"] = p["w3"], p["fb3"]
    return p, rp


# Pure-JAX reference (same folded-BN inference math) for a correctness check.
def reference_forward(x_nchw, rp):
    x = jnp.transpose(x_nchw.astype(jnp.float32), (0, 2, 3, 1))   # NHWC

    def conv(x, k, s, b, pool):
        y = jax.lax.conv_general_dilated(
            x, k, window_strides=(1, 1), padding="SAME",
            dimension_numbers=("NHWC", "HWIO", "NHWC"))
        y = jnp.maximum(y * s + b, 0.0)
        if pool:
            y = jax.lax.reduce_window(y, -jnp.inf, jax.lax.max,
                                      (1, 2, 2, 1), (1, 2, 2, 1), "VALID")
        return y

    x = conv(x, rp["k1"], rp["s1"], rp["b1"], False)
    x = conv(x, rp["k2"], rp["s2"], rp["b2"], True)
    x = conv(x, rp["k3"], rp["s3"], rp["b3"], False)
    x = conv(x, rp["k4"], rp["s4"], rp["b4"], True)
    n = x.shape[0]
    x = jnp.transpose(x, (0, 3, 1, 2)).reshape(n, -1)             # NCHW flatten
    x = jnp.maximum((x @ rp["fw1"]) * rp["fs1"] + rp["fb1"], 0.0)
    x = jnp.maximum((x @ rp["fw2"]) * rp["fs2"] + rp["fb2"], 0.0)
    return x @ rp["fw3"] + rp["fb3"]


if __name__ == "__main__":
    key = jax.random.PRNGKey(0)
    pkey, xkey = jax.random.split(key)
    params, ref_params = init_params(pkey, in_channels=3, num_classes=10)
    x = jax.random.normal(xkey, (16, 3, 8, 8), jnp.float32)   # NCHW 8x8 images

    fwd = jax.jit(lambda inp: image_8x8_forward(inp, params))
    logits = fwd(x)
    jax.block_until_ready(logits)

    assert logits.shape == (16, 10), logits.shape
    assert bool(jnp.all(jnp.isfinite(logits)))
    ref = reference_forward(x, ref_params)
    err = float(jnp.max(jnp.abs(logits - ref)))
    assert err < 5e-3, f"mismatch vs reference, max abs err = {err}"
    print("KERNEL_OK")
</pallas_src>

<mosaic_0001>
module attributes {stable_mosaic.version = 11 : i64} {
  func.func @_fused_kernel(%arg0: i32, %arg1: memref<8x8x24xf32, #tpu.memory_space<vmem>>, %arg2: memref<3x24x128xf32, #tpu.memory_space<vmem>>, %arg3: memref<1x128xf32, #tpu.memory_space<vmem>>, %arg4: memref<1x128xf32, #tpu.memory_space<vmem>>, %arg5: memref<3x128x256xf32, #tpu.memory_space<vmem>>, %arg6: memref<1x256xf32, #tpu.memory_space<vmem>>, %arg7: memref<1x256xf32, #tpu.memory_space<vmem>>, %arg8: memref<3x128x256xf32, #tpu.memory_space<vmem>>, %arg9: memref<1x256xf32, #tpu.memory_space<vmem>>, %arg10: memref<1x256xf32, #tpu.memory_space<vmem>>, %arg11: memref<3x256x256xf32, #tpu.memory_space<vmem>>, %arg12: memref<1x256xf32, #tpu.memory_space<vmem>>, %arg13: memref<1x256xf32, #tpu.memory_space<vmem>>, %arg14: memref<128x256xf32, #tpu.memory_space<vmem>>, %arg15: memref<128x256xf32, #tpu.memory_space<vmem>>, %arg16: memref<1x256xf32, #tpu.memory_space<vmem>>, %arg17: memref<1x256xf32, #tpu.memory_space<vmem>>, %arg18: memref<256x128xf32, #tpu.memory_space<vmem>>, %arg19: memref<1x128xf32, #tpu.memory_space<vmem>>, %arg20: memref<1x128xf32, #tpu.memory_space<vmem>>, %arg21: memref<128x10xf32, #tpu.memory_space<vmem>>, %arg22: memref<1x10xf32, #tpu.memory_space<vmem>>, %arg23: memref<8x10xf32, #tpu.memory_space<vmem>>, %arg24: memref<80x24xf32, #tpu.memory_space<vmem>>, %arg25: memref<80x128xf32, #tpu.memory_space<vmem>>, %arg26: memref<48x128xf32, #tpu.memory_space<vmem>>, %arg27: memref<48x256xf32, #tpu.memory_space<vmem>>, %arg28: memref<78x128xf32, #tpu.memory_space<vmem>>, %arg29: memref<46x128xf32, #tpu.memory_space<vmem>>) attributes {dimension_semantics = [#tpu.dimension_semantics<parallel>], iteration_bounds = array<i64: 2>, scalar_prefetch = 0 : i64, scratch_operands = 6 : i64, tpu.core_type = #tpu.core_type<tc>, window_params = [{transform_indices = @transform_0, window_bounds = array<i64: 8, 8, 24>}, {pipeline_mode = #tpu.pipeline_mode<synchronous>, transform_indices = @transform_1, window_bounds = array<i64: 3, 24, 128>}, {pipeline_mode = #tpu.pipeline_mode<synchronous>, transform_indices = @transform_2, window_bounds = array<i64: 1, 128>}, {pipeline_mode = #tpu.pipeline_mode<synchronous>, transform_indices = @transform_3, window_bounds = array<i64: 1, 128>}, {pipeline_mode = #tpu.pipeline_mode<synchronous>, transform_indices = @transform_4, window_bounds = array<i64: 3, 128, 256>}, {pipeline_mode = #tpu.pipeline_mode<synchronous>, transform_indices = @transform_5, window_bounds = array<i64: 1, 256>}, {pipeline_mode = #tpu.pipeline_mode<synchronous>, transform_indices = @transform_6, window_bounds = array<i64: 1, 256>}, {pipeline_mode = #tpu.pipeline_mode<synchronous>, transform_indices = @transform_7, window_bounds = array<i64: 3, 128, 256>}, {pipeline_mode = #tpu.pipeline_mode<synchronous>, transform_indices = @transform_8, window_bounds = array<i64: 1, 256>}, {pipeline_mode = #tpu.pipeline_mode<synchronous>, transform_indices = @transform_9, window_bounds = array<i64: 1, 256>}, {pipeline_mode = #tpu.pipeline_mode<synchronous>, transform_indices = @transform_10, window_bounds = array<i64: 3, 256, 256>}, {pipeline_mode = #tpu.pipeline_mode<synchronous>, transform_indices = @transform_11, window_bounds = array<i64: 1, 256>}, {pipeline_mode = #tpu.pipeline_mode<synchronous>, transform_indices = @transform_12, window_bounds = array<i64: 1, 256>}, {pipeline_mode = #tpu.pipeline_mode<synchronous>, transform_indices = @transform_13, window_bounds = array<i64: 128, 256>}, {pipeline_mode = #tpu.pipeline_mode<synchronous>, transform_indices = @transform_14, window_bounds = array<i64: 128, 256>}, {pipeline_mode = #tpu.pipeline_mode<synchronous>, transform_indices = @transform_15, window_bounds = array<i64: 1, 256>}, {pipeline_mode = #tpu.pipeline_mode<synchronous>, transform_indices = @transform_16, window_bounds = array<i64: 1, 256>}, {pipeline_mode = #tpu.pipeline_mode<synchronous>, transform_indices = @transform_17, window_bounds = array<i64: 256, 128>}, {pipeline_mode = #tpu.pipeline_mode<synchronous>, transform_indices = @transform_18, window_bounds = array<i64: 1, 128>}, {pipeline_mode = #tpu.pipeline_mode<synchronous>, transform_indices = @transform_19, window_bounds = array<i64: 1, 128>}, {pipeline_mode = #tpu.pipeline_mode<synchronous>, transform_indices = @transform_20, window_bounds = array<i64: 128, 10>}, {pipeline_mode = #tpu.pipeline_mode<synchronous>, transform_indices = @transform_21, window_bounds = array<i64: 1, 10>}, {transform_indices = @transform_22, window_bounds = array<i64: 8, 10>}]} {
    %cst = arith.constant 0.000000e+00 : f32
    %0 = vector.broadcast %cst : f32 to vector<80x24xf32>
    %c0 = arith.constant 0 : index
    %c0_0 = arith.constant 0 : index
    %1 = vector.load %arg24[%c0, %c0_0] : memref<80x24xf32, #tpu.memory_space<vmem>>, vector<80x24xf32>
    tpu.vector_store %arg24[%c0, %c0_0], %0 {strides = array<i32>} : memref<80x24xf32, #tpu.memory_space<vmem>>, vector<80x24xf32>,
    %cst_1 = arith.constant 0.000000e+00 : f32
    %2 = vector.broadcast %cst_1 : f32 to vector<80x128xf32>
    %c0_2 = arith.constant 0 : index
    %c0_3 = arith.constant 0 : index
    %3 = vector.load %arg25[%c0_2, %c0_3] : memref<80x128xf32, #tpu.memory_space<vmem>>, vector<80x128xf32>
    tpu.vector_store %arg25[%c0_2, %c0_3], %2 {strides = array<i32>} : memref<80x128xf32, #tpu.memory_space<vmem>>, vector<80x128xf32>,
    %cst_4 = arith.constant 0.000000e+00 : f32
    %4 = vector.broadcast %cst_4 : f32 to vector<48x128xf32>
    %c0_5 = arith.constant 0 : index
    %c0_6 = arith.constant 0 : index
    %5 = vector.load %arg26[%c0_5, %c0_6] : memref<48x128xf32, #tpu.memory_space<vmem>>, vector<48x128xf32>
    tpu.vector_store %arg26[%c0_5, %c0_6], %4 {strides = array<i32>} : memref<48x128xf32, #tpu.memory_space<vmem>>, vector<48x128xf32>,
    %cst_7 = arith.constant 0.000000e+00 : f32
    %6 = vector.broadcast %cst_7 : f32 to vector<48x256xf32>
    %c0_8 = arith.constant 0 : index
    %c0_9 = arith.constant 0 : index
    %7 = vector.load %arg27[%c0_8, %c0_9] : memref<48x256xf32, #tpu.memory_space<vmem>>, vector<48x256xf32>
    tpu.vector_store %arg27[%c0_8, %c0_9], %6 {strides = array<i32>} : memref<48x256xf32, #tpu.memory_space<vmem>>, vector<48x256xf32>,
    %c0_10 = arith.constant 0 : index
    %c0_11 = arith.constant 0 : index
    %c0_12 = arith.constant 0 : index
    %8 = vector.load %arg1[%c0_10, %c0_11, %c0_12] : memref<8x8x24xf32, #tpu.memory_space<vmem>>, vector<1x8x24xf32>
    %9 = vector.shape_cast %8 : vector<1x8x24xf32> to vector<8x24xf32>
    %c1 = arith.constant 1 : index
    %c0_13 = arith.constant 0 : index
    %10 = vector.load %arg24[%c1, %c0_13] : memref<80x24xf32, #tpu.memory_space<vmem>>, vector<8x24xf32>
    tpu.vector_store %arg24[%c1, %c0_13], %9 {strides = array<i32>} : memref<80x24xf32, #tpu.memory_space<vmem>>, vector<8x24xf32>,
    %c1_14 = arith.constant 1 : index
    %c0_15 = arith.constant 0 : index
    %c0_16 = arith.constant 0 : index
    %11 = vector.load %arg1[%c1_14, %c0_15, %c0_16] : memref<8x8x24xf32, #tpu.memory_space<vmem>>, vector<1x8x24xf32>
    %12 = vector.shape_cast %11 : vector<1x8x24xf32> to vector<8x24xf32>
    %c11 = arith.constant 11 : index
    %c0_17 = arith.constant 0 : index
    %13 = vector.load %arg24[%c11, %c0_17] : memref<80x24xf32, #tpu.memory_space<vmem>>, vector<8x24xf32>
    tpu.vector_store %arg24[%c11, %c0_17], %12 {strides = array<i32>} : memref<80x24xf32, #tpu.memory_space<vmem>>, vector<8x24xf32>,
    %c2 = arith.constant 2 : index
    %c0_18 = arith.constant 0 : index
    %c0_19 = arith.constant 0 : index
    %14 = vector.load %arg1[%c2, %c0_18, %c0_19] : memref<8x8x24xf32, #tpu.memory_space<vmem>>, vector<1x8x24xf32>
    %15 = vector.shape_cast %14 : vector<1x8x24xf32> to vector<8x24xf32>
    %c21 = arith.constant 21 : index
    %c0_20 = arith.constant 0 : index
    %16 = vector.load %arg24[%c21, %c0_20] : memref<80x24xf32, #tpu.memory_space<vmem>>, vector<8x24xf32>
    tpu.vector_store %arg24[%c21, %c0_20], %15 {strides = array<i32>} : memref<80x24xf32, #tpu.memory_space<vmem>>, vector<8x24xf32>,
    %c3 = arith.constant 3 : index
    %c0_21 = arith.constant 0 : index
    %c0_22 = arith.constant 0 : index
    %17 = vector.load %arg1[%c3, %c0_21, %c0_22] : memref<8x8x24xf32, #tpu.memory_space<vmem>>, vector<1x8x24xf32>
    %18 = vector.shape_cast %17 : vector<1x8x24xf32> to vector<8x24xf32>
    %c31 = arith.constant 31 : index
    %c0_23 = arith.constant 0 : index
    %19 = vector.load %arg24[%c31, %c0_23] : memref<80x24xf32, #tpu.memory_space<vmem>>, vector<8x24xf32>
    tpu.vector_store %arg24[%c31, %c0_23], %18 {strides = array<i32>} : memref<80x24xf32, #tpu.memory_space<vmem>>, vector<8x24xf32>,
    %c4 = arith.constant 4 : index
    %c0_24 = arith.constant 0 : index
    %c0_25 = arith.constant 0 : index
    %20 = vector.load %arg1[%c4, %c0_24, %c0_25] : memref<8x8x24xf32, #tpu.memory_space<vmem>>, vector<1x8x24xf32>
    %21 = vector.shape_cast %20 : vector<1x8x24xf32> to vector<8x24xf32>
    %c41 = arith.constant 41 : index
    %c0_26 = arith.constant 0 : index
    %22 = vector.load %arg24[%c41, %c0_26] : memref<80x24xf32, #tpu.memory_space<vmem>>, vector<8x24xf32>
    tpu.vector_store %arg24[%c41, %c0_26], %21 {strides = array<i32>} : memref<80x24xf32, #tpu.memory_space<vmem>>, vector<8x24xf32>,
    %c5 = arith.constant 5 : index
    %c0_27 = arith.constant 0 : index
    %c0_28 = arith.constant 0 : index
    %23 = vector.load %arg1[%c5, %c0_27, %c0_28] : memref<8x8x24xf32, #tpu.memory_space<vmem>>, vector<1x8x24xf32>
    %24 = vector.shape_cast %23 : vector<1x8x24xf32> to vector<8x24xf32>
    %c51 = arith.constant 51 : index
    %c0_29 = arith.constant 0 : index
    %25 = vector.load %arg24[%c51, %c0_29] : memref<80x24xf32, #tpu.memory_space<vmem>>, vector<8x24xf32>
    tpu.vector_store %arg24[%c51, %c0_29], %24 {strides = array<i32>} : memref<80x24xf32, #tpu.memory_space<vmem>>, vector<8x24xf32>,
    %c6 = arith.constant 6 : index
    %c0_30 = arith.constant 0 : index
    %c0_31 = arith.constant 0 : index
    %26 = vector.load %arg1[%c6, %c0_30, %c0_31] : memref<8x8x24xf32, #tpu.memory_space<vmem>>, vector<1x8x24xf32>
    %27 = vector.shape_cast %26 : vector<1x8x24xf32> to vector<8x24xf32>
    %c61 = arith.constant 61 : index
    %c0_32 = arith.constant 0 : index
    %28 = vector.load %arg24[%c61, %c0_32] : memref<80x24xf32, #tpu.memory_space<vmem>>, vector<8x24xf32>
    tpu.vector_store %arg24[%c61, %c0_32], %27 {strides = array<i32>} : memref<80x24xf32, #tpu.memory_space<vmem>>, vector<8x24xf32>,
    %c7 = arith.constant 7 : index
    %c0_33 = arith.constant 0 : index
    %c0_34 = arith.constant 0 : index
    %29 = vector.load %arg1[%c7, %c0_33, %c0_34] : memref<8x8x24xf32, #tpu.memory_space<vmem>>, vector<1x8x24xf32>
    %30 = vector.shape_cast %29 : vector<1x8x24xf32> to vector<8x24xf32>
    %c71 = arith.constant 71 : index
    %c0_35 = arith.constant 0 : index
    %31 = vector.load %arg24[%c71, %c0_35] : memref<80x24xf32, #tpu.memory_space<vmem>>, vector<8x24xf32>
    tpu.vector_store %arg24[%c71, %c0_35], %30 {strides = array<i32>} : memref<80x24xf32, #tpu.memory_space<vmem>>, vector<8x24xf32>,
    %c0_36 = arith.constant 0 : index
    %c0_37 = arith.constant 0 : index
    %32 = vector.load %arg24[%c0_36, %c0_37] : memref<80x24xf32, #tpu.memory_space<vmem>>, vector<78x24xf32>
    %c0_38 = arith.constant 0 : index
    %c0_39 = arith.constant 0 : index
    %c0_40 = arith.constant 0 : index
    %33 = vector.load %arg2[%c0_38, %c0_39, %c0_40] : memref<3x24x128xf32, #tpu.memory_space<vmem>>, vector<1x24x128xf32>
    %34 = vector.shape_cast %33 : vector<1x24x128xf32> to vector<24x128xf32>
    %cst_41 = arith.constant dense<0.000000e+00> : vector<78x128xf32>
    %35 = tpu.matmul %32, %34, %cst_41 {dimension_numbers = #tpu.dot_dimension_numbers<[1], [0], [0], [1], [0, 0, 1, 1], [], []>} : vector<78x24xf32>, vector<24x128xf32>, vector<78x128xf32> -> vector<78x128xf32>
    %c1_42 = arith.constant 1 : index
    %c0_43 = arith.constant 0 : index
    %36 = vector.load %arg24[%c1_42, %c0_43] : memref<80x24xf32, #tpu.memory_space<vmem>>, vector<78x24xf32>
    %c1_44 = arith.constant 1 : index
    %c0_45 = arith.constant 0 : index
    %c0_46 = arith.constant 0 : index
    %37 = vector.load %arg2[%c1_44, %c0_45, %c0_46] : memref<3x24x128xf32, #tpu.memory_space<vmem>>, vector<1x24x128xf32>
    %38 = vector.shape_cast %37 : vector<1x24x128xf32> to vector<24x128xf32>
    %cst_47 = arith.constant dense<0.000000e+00> : vector<78x128xf32>
    %39 = tpu.matmul %36, %38, %cst_47 {dimension_numbers = #tpu.dot_dimension_numbers<[1], [0], [0], [1], [0, 0, 1, 1], [], []>} : vector<78x24xf32>, vector<24x128xf32>, vector<78x128xf32> -> vector<78x128xf32>
    %40 = arith.addf %35, %39 : vector<78x128xf32>
    %c2_48 = arith.constant 2 : index
    %c0_49 = arith.constant 0 : index
    %41 = vector.load %arg24[%c2_48, %c0_49] : memref<80x24xf32, #tpu.memory_space<vmem>>, vector<78x24xf32>
    %c2_50 = arith.constant 2 : index
    %c0_51 = arith.constant 0 : index
    %c0_52 = arith.constant 0 : index
    %42 = vector.load %arg2[%c2_50, %c0_51, %c0_52] : memref<3x24x128xf32, #tpu.memory_space<vmem>>, vector<1x24x128xf32>
    %43 = vector.shape_cast %42 : vector<1x24x128xf32> to vector<24x128xf32>
    %cst_53 = arith.constant dense<0.000000e+00> : vector<78x128xf32>
    %44 = tpu.matmul %41, %43, %cst_53 {dimension_numbers = #tpu.dot_dimension_numbers<[1], [0], [0], [1], [0, 0, 1, 1], [], []>} : vector<78x24xf32>, vector<24x128xf32>, vector<78x128xf32> -> vector<78x128xf32>
    %45 = arith.addf %40, %44 : vector<78x128xf32>
    %c0_54 = arith.constant 0 : index
    %c0_55 = arith.constant 0 : index
    %46 = vector.load %arg3[%c0_54, %c0_55] : memref<1x128xf32, #tpu.memory_space<vmem>>, vector<1x128xf32>
    %47 = vector.broadcast %46 : vector<1x128xf32> to vector<78x128xf32>
    %48 = arith.mulf %45, %47 : vector<78x128xf32>
    %c0_56 = arith.constant 0 : index
    %c0_57 = arith.constant 0 : index
    %49 = vector.load %arg4[%c0_56, %c0_57] : memref<1x128xf32, #tpu.memory_space<vmem>>, vector<1x128xf32>
    %50 = vector.broadcast %49 : vector<1x128xf32> to vector<78x128xf32>
    %51 = arith.addf %48, %50 : vector<78x128xf32>
    %cst_58 = arith.constant 0.000000e+00 : f32
    %52 = vector.broadcast %cst_58 : f32 to vector<78x128xf32>
    %53 = arith.maximumf %51, %52 : vector<78x128xf32>
    %54 = vector.extract_strided_slice %53 {offsets = [0, 0], sizes = [8, 128], strides = [1, 1]} : vector<78x128xf32> to vector<8x128xf32>
    %c1_59 = arith.constant 1 : index
    %c0_60 = arith.constant 0 : index
    %55 = vector.load %arg25[%c1_59, %c0_60] : memref<80x128xf32, #tpu.memory_space<vmem>>, vector<8x128xf32>
    tpu.vector_store %arg25[%c1_59, %c0_60], %54 {strides = array<i32>} : memref<80x128xf32, #tpu.memory_space<vmem>>, vector<8x128xf32>,
    %56 = vector.extract_strided_slice %53 {offsets = [10, 0], sizes = [8, 128], strides = [1, 1]} : vector<78x128xf32> to vector<8x128xf32>
    %c11_61 = arith.constant 11 : index
    %c0_62 = arith.constant 0 : index
    %57 = vector.load %arg25[%c11_61, %c0_62] : memref<80x128xf32, #tpu.memory_space<vmem>>, vector<8x128xf32>
    tpu.vector_store %arg25[%c11_61, %c0_62], %56 {strides = array<i32>} : memref<80x128xf32, #tpu.memory_space<vmem>>, vector<8x128xf32>,
    %58 = vector.extract_strided_slice %53 {offsets = [20, 0], sizes = [8, 128], strides = [1, 1]} : vector<78x128xf32> to vector<8x128xf32>
    %c21_63 = arith.constant 21 : index
    %c0_64 = arith.constant 0 : index
    %59 = vector.load %arg25[%c21_63, %c0_64] : memref<80x128xf32, #tpu.memory_space<vmem>>, vector<8x128xf32>
    tpu.vector_store %arg25[%c21_63, %c0_64], %58 {strides = array<i32>} : memref<80x128xf32, #tpu.memory_space<vmem>>, vector<8x128xf32>,
    %60 = vector.extract_strided_slice %53 {offsets = [30, 0], sizes = [8, 128], strides = [1, 1]} : vector<78x128xf32> to vector<8x128xf32>
    %c31_65 = arith.constant 31 : index
    %c0_66 = arith.constant 0 : index
    %61 = vector.load %arg25[%c31_65, %c0_66] : memref<80x128xf32, #tpu.memory_space<vmem>>, vector<8x128xf32>
    tpu.vector_store %arg25[%c31_65, %c0_66], %60 {strides = array<i32>} : memref<80x128xf32, #tpu.memory_space<vmem>>, vector<8x128xf32>,
    %62 = vector.extract_strided_slice %53 {offsets = [40, 0], sizes = [8, 128], strides = [1, 1]} : vector<78x128xf32> to vector<8x128xf32>
    %c41_67 = arith.constant 41 : index
    %c0_68 = arith.constant 0 : index
    %63 = vector.load %arg25[%c41_67, %c0_68] : memref<80x128xf32, #tpu.memory_space<vmem>>, vector<8x128xf32>
    tpu.vector_store %arg25[%c41_67, %c0_68], %62 {strides = array<i32>} : memref<80x128xf32, #tpu.memory_space<vmem>>, vector<8x128xf32>,
    %64 = vector.extract_strided_slice %53 {offsets = [50, 0], sizes = [8, 128], strides = [1, 1]} : vector<78x128xf32> to vector<8x128xf32>
    %c51_69 = arith.constant 51 : index
    %c0_70 = arith.constant 0 : index
    %65 = vector.load %arg25[%c51_69, %c0_70] : memref<80x128xf32, #tpu.memory_space<vmem>>, vector<8x128xf32>
    tpu.vector_store %arg25[%c51_69, %c0_70], %64 {strides = array<i32>} : memref<80x128xf32, #tpu.memory_space<vmem>>, vector<8x128xf32>,
    %66 = vector.extract_strided_slice %53 {offsets = [60, 0], sizes = [8, 128], strides = [1, 1]} : vector<78x128xf32> to vector<8x128xf32>
    %c61_71 = arith.constant 61 : index
    %c0_72 = arith.constant 0 : index
    %67 = vector.load %arg25[%c61_71, %c0_72] : memref<80x128xf32, #tpu.memory_space<vmem>>, vector<8x128xf32>
    tpu.vector_store %arg25[%c61_71, %c0_72], %66 {strides = array<i32>} : memref<80x128xf32, #tpu.memory_space<vmem>>, vector<8x128xf32>,
    %68 = vector.extract_strided_slice %53 {offsets = [70, 0], sizes = [8, 128], strides = [1, 1]} : vector<78x128xf32> to vector<8x128xf32>
    %c71_73 = arith.constant 71 : index
    %c0_74 = arith.constant 0 : index
    %69 = vector.load %arg25[%c71_73, %c0_74] : memref<80x128xf32, #tpu.memory_space<vmem>>, vector<8x128xf32>
    tpu.vector_store %arg25[%c71_73, %c0_74], %68 {strides = array<i32>} : memref<80x128xf32, #tpu.memory_space<vmem>>, vector<8x128xf32>,
    %c0_75 = arith.constant 0 : index
    %c0_76 = arith.constant 0 : index
    %70 = vector.load %arg25[%c0_75, %c0_76] : memref<80x128xf32, #tpu.memory_space<vmem>>, vector<78x128xf32>
    %c0_77 = arith.constant 0 : index
    %c0_78 = arith.constant 0 : index
    %c0_79 = arith.constant 0 : index
    %71 = vector.load %arg5[%c0_77, %c0_78, %c0_79] : memref<3x128x256xf32, #tpu.memory_space<vmem>>, vector<1x128x256xf32>
    %72 = vector.shape_cast %71 : vector<1x128x256xf32> to vector<128x256xf32>
    %cst_80 = arith.constant dense<0.000000e+00> : vector<78x256xf32>
    %73 = tpu.matmul %70, %72, %cst_80 {dimension_numbers = #tpu.dot_dimension_numbers<[1], [0], [0], [1], [0, 0, 1, 1], [], []>} : vector<78x128xf32>, vector<128x256xf32>, vector<78x256xf32> -> vector<78x256xf32>
    %c1_81 = arith.constant 1 : index
    %c0_82 = arith.constant 0 : index
    %74 = vector.load %arg25[%c1_81, %c0_82] : memref<80x128xf32, #tpu.memory_space<vmem>>, vector<78x128xf32>
    %c1_83 = arith.constant 1 : index
    %c0_84 = arith.constant 0 : index
    %c0_85 = arith.constant 0 : index
    %75 = vector.load %arg5[%c1_83, %c0_84, %c0_85] : memref<3x128x256xf32, #tpu.memory_space<vmem>>, vector<1x128x256xf32>
    %76 = vector.shape_cast %75 : vector<1x128x256xf32> to vector<128x256xf32>
    %cst_86 = arith.constant dense<0.000000e+00> : vector<78x256xf32>
    %77 = tpu.matmul %74, %76, %cst_86 {dimension_numbers = #tpu.dot_dimension_numbers<[1], [0], [0], [1], [0, 0, 1, 1], [], []>} : vector<78x128xf32>, vector<128x256xf32>, vector<78x256xf32> -> vector<78x256xf32>
    %78 = arith.addf %73, %77 : vector<78x256xf32>
    %c2_87 = arith.constant 2 : index
    %c0_88 = arith.constant 0 : index
    %79 = vector.load %arg25[%c2_87, %c0_88] : memref<80x128xf32, #tpu.memory_space<vmem>>, vector<78x128xf32>
    %c2_89 = arith.constant 2 : index
    %c0_90 = arith.constant 0 : index
    %c0_91 = arith.constant 0 : index
    %80 = vector.load %arg5[%c2_89, %c0_90, %c0_91] : memref<3x128x256xf32, #tpu.memory_space<vmem>>, vector<1x128x256xf32>
    %81 = vector.shape_cast %80 : vector<1x128x256xf32> to vector<128x256xf32>
    %cst_92 = arith.constant dense<0.000000e+00> : vector<78x256xf32>
    %82 = tpu.matmul %79, %81, %cst_92 {dimension_numbers = #tpu.dot_dimension_numbers<[1], [0], [0], [1], [0, 0, 1, 1], [], []>} : vector<78x128xf32>, vector<128x256xf32>, vector<78x256xf32> -> vector<78x256xf32>
    %83 = arith.addf %78, %82 : vector<78x256xf32>
    %c0_93 = arith.constant 0 : index
    %c0_94 = arith.constant 0 : index
    %84 = vector.load %arg6[%c0_93, %c0_94] : memref<1x256xf32, #tpu.memory_space<vmem>>, vector<1x256xf32>
    %85 = vector.broadcast %84 : vector<1x256xf32> to vector<78x256xf32>
    %86 = arith.mulf %83, %85 : vector<78x256xf32>
    %c0_95 = arith.constant 0 : index
    %c0_96 = arith.constant 0 : index
    %87 = vector.load %arg7[%c0_95, %c0_96] : memref<1x256xf32, #tpu.memory_space<vmem>>, vector<1x256xf32>
    %88 = vector.broadcast %87 : vector<1x256xf32> to vector<78x256xf32>
    %89 = arith.addf %86, %88 : vector<78x256xf32>
    %cst_97 = arith.constant 0.000000e+00 : f32
    %90 = vector.broadcast %cst_97 : f32 to vector<78x256xf32>
    %91 = arith.maximumf %89, %90 : vector<78x256xf32>
    %92 = vector.extract_strided_slice %91 {offsets = [0, 0], sizes = [78, 32], strides = [1, 1]} : vector<78x256xf32> to vector<78x32xf32>
    %93 = vector.extract_strided_slice %91 {offsets = [0, 32], sizes = [78, 32], strides = [1, 1]} : vector<78x256xf32> to vector<78x32xf32>
    %94 = arith.maximumf %92, %93 : vector<78x32xf32>
    %c0_98 = arith.constant 0 : index
    %c0_99 = arith.constant 0 : index
    %95 = vector.load %arg28[%c0_98, %c0_99] : memref<78x128xf32, #tpu.memory_space<vmem>>, vector<78x32xf32>
    tpu.vector_store %arg28[%c0_98, %c0_99], %94 {strides = array<i32>} : memref<78x128xf32, #tpu.memory_space<vmem>>, vector<78x32xf32>,
    %96 = vector.extract_strided_slice %91 {offsets = [0, 64], sizes = [78, 32], strides = [1, 1]} : vector<78x256xf32> to vector<78x32xf32>
    %97 = vector.extract_strided_slice %91 {offsets = [0, 96], sizes = [78, 32], strides = [1, 1]} : vector<78x256xf32> to vector<78x32xf32>
    %98 = arith.maximumf %96, %97 : vector<78x32xf32>
    %c0_100 = arith.constant 0 : index
    %c32 = arith.constant 32 : index
    %99 = vector.load %arg28[%c0_100, %c32] : memref<78x128xf32, #tpu.memory_space<vmem>>, vector<78x32xf32>
    tpu.vector_store %arg28[%c0_100, %c32], %98 {strides = array<i32>} : memref<78x128xf32, #tpu.memory_space<vmem>>, vector<78x32xf32>,
    %100 = vector.extract_strided_slice %91 {offsets = [0, 128], sizes = [78, 32], strides = [1, 1]} : vector<78x256xf32> to vector<78x32xf32>
    %101 = vector.extract_strided_slice %91 {offsets = [0, 160], sizes = [78, 32], strides = [1, 1]} : vector<78x256xf32> to vector<78x32xf32>
    %102 = arith.maximumf %100, %101 : vector<78x32xf32>
    %c0_101 = arith.constant 0 : index
    %c64 = arith.constant 64 : index
    %103 = vector.load %arg28[%c0_101, %c64] : memref<78x128xf32, #tpu.memory_space<vmem>>, vector<78x32xf32>
    tpu.vector_store %arg28[%c0_101, %c64], %102 {strides = array<i32>} : memref<78x128xf32, #tpu.memory_space<vmem>>, vector<78x32xf32>,
    %104 = vector.extract_strided_slice %91 {offsets = [0, 192], sizes = [78, 32], strides = [1, 1]} : vector<78x256xf32> to vector<78x32xf32>
    %105 = vector.extract_strided_slice %91 {offsets = [0, 224], sizes = [78, 32], strides = [1, 1]} : vector<78x256xf32> to vector<78x32xf32>
    %106 = arith.maximumf %104, %105 : vector<78x32xf32>
    %c0_102 = arith.constant 0 : index
    %c96 = arith.constant 96 : index
    %107 = vector.load %arg28[%c0_102, %c96] : memref<78x128xf32, #tpu.memory_space<vmem>>, vector<78x32xf32>
    tpu.vector_store %arg28[%c0_102, %c96], %106 {strides = array<i32>} : memref<78x128xf32, #tpu.memory_space<vmem>>, vector<78x32xf32>,
    %c0_103 = arith.constant 0 : index
    %c0_104 = arith.constant 0 : index
    %108 = tpu.strided_load %arg28[%c0_103, %c0_104] {strides = array<i32: 2, 1>} : memref<78x128xf32, #tpu.memory_space<vmem>>, vector<4x128xf32>
    %c1_105 = arith.constant 1 : index
    %c0_106 = arith.constant 0 : index
    %109 = tpu.strided_load %arg28[%c1_105, %c0_106] {strides = array<i32: 2, 1>} : memref<78x128xf32, #tpu.memory_space<vmem>>, vector<4x128xf32>
    %110 = arith.maximumf %108, %109 : vector<4x128xf32>
    %c1_107 = arith.constant 1 : index
    %c0_108 = arith.constant 0 : index
    %111 = vector.load %arg26[%c1_107, %c0_108] : memref<48x128xf32, #tpu.memory_space<vmem>>, vector<4x128xf32>
    tpu.vector_store %arg26[%c1_107, %c0_108], %110 {strides = array<i32>} : memref<48x128xf32, #tpu.memory_space<vmem>>, vector<4x128xf32>,
    %c10 = arith.constant 10 : index
    %c0_109 = arith.constant 0 : index
    %112 = tpu.strided_load %arg28[%c10, %c0_109] {strides = array<i32: 2, 1>} : memref<78x128xf32, #tpu.memory_space<vmem>>, vector<4x128xf32>
    %c11_110 = arith.constant 11 : index
    %c0_111 = arith.constant 0 : index
    %113 = tpu.strided_load %arg28[%c11_110, %c0_111] {strides = array<i32: 2, 1>} : memref<78x128xf32, #tpu.memory_space<vmem>>, vector<4x128xf32>
    %114 = arith.maximumf %112, %113 : vector<4x128xf32>
    %c7_112 = arith.constant 7 : index
    %c0_113 = arith.constant 0 : index
    %115 = vector.load %arg26[%c7_112, %c0_113] : memref<48x128xf32, #tpu.memory_space<vmem>>, vector<4x128xf32>
    tpu.vector_store %arg26[%c7_112, %c0_113], %114 {strides = array<i32>} : memref<48x128xf32, #tpu.memory_space<vmem>>, vector<4x128xf32>,
    %c20 = arith.constant 20 : index
    %c0_114 = arith.constant 0 : index
    %116 = tpu.strided_load %arg28[%c20, %c0_114] {strides = array<i32: 2, 1>} : memref<78x128xf32, #tpu.memory_space<vmem>>, vector<4x128xf32>
    %c21_115 = arith.constant 21 : index
    %c0_116 = arith.constant 0 : index
    %117 = tpu.strided_load %arg28[%c21_115, %c0_116] {strides = array<i32: 2, 1>} : memref<78x128xf32, #tpu.memory_space<vmem>>, vector<4x128xf32>
    %118 = arith.maximumf %116, %117 : vector<4x128xf32>
    %c13 = arith.constant 13 : index
    %c0_117 = arith.constant 0 : index
    %119 = vector.load %arg26[%c13, %c0_117] : memref<48x128xf32, #tpu.memory_space<vmem>>, vector<4x128xf32>
    tpu.vector_store %arg26[%c13, %c0_117], %118 {strides = array<i32>} : memref<48x128xf32, #tpu.memory_space<vmem>>, vector<4x128xf32>,
    %c30 = arith.constant 30 : index
    %c0_118 = arith.constant 0 : index
    %120 = tpu.strided_load %arg28[%c30, %c0_118] {strides = array<i32: 2, 1>} : memref<78x128xf32, #tpu.memory_space<vmem>>, vector<4x128xf32>
    %c31_119 = arith.constant 31 : index
    %c0_120 = arith.constant 0 : index
    %121 = tpu.strided_load %arg28[%c31_119, %c0_120] {strides = array<i32: 2, 1>} : memref<78x128xf32, #tpu.memory_space<vmem>>, vector<4x128xf32>
    %122 = arith.maximumf %120, %121 : vector<4x128xf32>
    %c19 = arith.constant 19 : index
    %c0_121 = arith.constant 0 : index
    %123 = vector.load %arg26[%c19, %c0_121] : memref<48x128xf32, #tpu.memory_space<vmem>>, vector<4x128xf32>
    tpu.vector_store %arg26[%c19, %c0_121], %122 {strides = array<i32>} : memref<48x128xf32, #tpu.memory_space<vmem>>, vector<4x128xf32>,
    %c40 = arith.constant 40 : index
    %c0_122 = arith.constant 0 : index
    %124 = tpu.strided_load %arg28[%c40, %c0_122] {strides = array<i32: 2, 1>} : memref<78x128xf32, #tpu.memory_space<vmem>>, vector<4x128xf32>
    %c41_123 = arith.constant 41 : index
    %c0_124 = arith.constant 0 : index
    %125 = tpu.strided_load %arg28[%c41_123, %c0_124] {strides = array<i32: 2, 1>} : memref<78x128xf32, #tpu.memory_space<vmem>>, vector<4x128xf32>
    %126 = arith.maximumf %124, %125 : vector<4x128xf32>
    %c25 = arith.constant 25 : index
    %c0_125 = arith.constant 0 : index
    %127 = vector.load %arg26[%c25, %c0_125] : memref<48x128xf32, #tpu.memory_space<vmem>>, vector<4x128xf32>
    tpu.vector_store %arg26[%c25, %c0_125], %126 {strides = array<i32>} : memref<48x128xf32, #tpu.memory_space<vmem>>, vector<4x128xf32>,
    %c50 = arith.constant 50 : index
    %c0_126 = arith.constant 0 : index
    %128 = tpu.strided_load %arg28[%c50, %c0_126] {strides = array<i32: 2, 1>} : memref<78x128xf32, #tpu.memory_space<vmem>>, vector<4x128xf32>
    %c51_127 = arith.constant 51 : index
    %c0_128 = arith.constant 0 : index
    %129 = tpu.strided_load %arg28[%c51_127, %c0_128] {strides = array<i32: 2, 1>} : memref<78x128xf32, #tpu.memory_space<vmem>>, vector<4x128xf32>
    %130 = arith.maximumf %128, %129 : vector<4x128xf32>
    %c31_129 = arith.constant 31 : index
    %c0_130 = arith.constant 0 : index
    %131 = vector.load %arg26[%c31_129, %c0_130] : memref<48x128xf32, #tpu.memory_space<vmem>>, vector<4x128xf32>
    tpu.vector_store %arg26[%c31_129, %c0_130], %130 {strides = array<i32>} : memref<48x128xf32, #tpu.memory_space<vmem>>, vector<4x128xf32>,
    %c60 = arith.constant 60 : index
    %c0_131 = arith.constant 0 : index
    %132 = tpu.strided_load %arg28[%c60, %c0_131] {strides = array<i32: 2, 1>} : memref<78x128xf32, #tpu.memory_space<vmem>>, vector<4x128xf32>
    %c61_132 = arith.constant 61 : index
    %c0_133 = arith.constant 0 : index
    %133 = tpu.strided_load %arg28[%c61_132, %c0_133] {strides = array<i32: 2, 1>} : memref<78x128xf32, #tpu.memory_space<vmem>>, vector<4x128xf32>
    %134 = arith.maximumf %132, %133 : vector<4x128xf32>
    %c37 = arith.constant 37 : index
    %c0_134 = arith.constant 0 : index
    %135 = vector.load %arg26[%c37, %c0_134] : memref<48x128xf32, #tpu.memory_space<vmem>>, vector<4x128xf32>
    tpu.vector_store %arg26[%c37, %c0_134], %134 {strides = array<i32>} : memref<48x128xf32, #tpu.memory_space<vmem>>, vector<4x128xf32>,
    %c70 = arith.constant 70 : index
    %c0_135 = arith.constant 0 : index
    %136 = tpu.strided_load %arg28[%c70, %c0_135] {strides = array<i32: 2, 1>} : memref<78x128xf32, #tpu.memory_space<vmem>>, vector<4x128xf32>
    %c71_136 = arith.constant 71 : index
    %c0_137 = arith.constant 0 : index
    %137 = tpu.strided_load %arg28[%c71_136, %c0_137] {strides = array<i32: 2, 1>} : memref<78x128xf32, #tpu.memory_space<vmem>>, vector<4x128xf32>
    %138 = arith.maximumf %136, %137 : vector<4x128xf32>
    %c43 = arith.constant 43 : index
    %c0_138 = arith.constant 0 : index
    %139 = vector.load %arg26[%c43, %c0_138] : memref<48x128xf32, #tpu.memory_space<vmem>>, vector<4x128xf32>
    tpu.vector_store %arg26[%c43, %c0_138], %138 {strides = array<i32>} : memref<48x128xf32, #tpu.memory_space<vmem>>, vector<4x128xf32>,
    %c0_139 = arith.constant 0 : index
    %c0_140 = arith.constant 0 : index
    %140 = vector.load %arg26[%c0_139, %c0_140] : memref<48x128xf32, #tpu.memory_space<vmem>>, vector<46x128xf32>
    %c0_141 = arith.constant 0 : index
    %c0_142 = arith.constant 0 : index
    %c0_143 = arith.constant 0 : index
    %141 = vector.load %arg8[%c0_141, %c0_142, %c0_143] : memref<3x128x256xf32, #tpu.memory_space<vmem>>, vector<1x128x256xf32>
    %142 = vector.shape_cast %141 : vector<1x128x256xf32> to vector<128x256xf32>
    %cst_144 = arith.constant dense<0.000000e+00> : vector<46x256xf32>
    %143 = tpu.matmul %140, %142, %cst_144 {dimension_numbers = #tpu.dot_dimension_numbers<[1], [0], [0], [1], [0, 0, 1, 1], [], []>} : vector<46x128xf32>, vector<128x256xf32>, vector<46x256xf32> -> vector<46x256xf32>
    %c1_145 = arith.constant 1 : index
    %c0_146 = arith.constant 0 : index
    %144 = vector.load %arg26[%c1_145, %c0_146] : memref<48x128xf32, #tpu.memory_space<vmem>>, vector<46x128xf32>
    %c1_147 = arith.constant 1 : index
    %c0_148 = arith.constant 0 : index
    %c0_149 = arith.constant 0 : index
    %145 = vector.load %arg8[%c1_147, %c0_148, %c0_149] : memref<3x128x256xf32, #tpu.memory_space<vmem>>, vector<1x128x256xf32>
    %146 = vector.shape_cast %145 : vector<1x128x256xf32> to vector<128x256xf32>
    %cst_150 = arith.constant dense<0.000000e+00> : vector<46x256xf32>
    %147 = tpu.matmul %144, %146, %cst_150 {dimension_numbers = #tpu.dot_dimension_numbers<[1], [0], [0], [1], [0, 0, 1, 1], [], []>} : vector<46x128xf32>, vector<128x256xf32>, vector<46x256xf32> -> vector<46x256xf32>
    %148 = arith.addf %143, %147 : vector<46x256xf32>
    %c2_151 = arith.constant 2 : index
    %c0_152 = arith.constant 0 : index
    %149 = vector.load %arg26[%c2_151, %c0_152] : memref<48x128xf32, #tpu.memory_space<vmem>>, vector<46x128xf32>
    %c2_153 = arith.constant 2 : index
    %c0_154 = arith.constant 0 : index
    %c0_155 = arith.constant 0 : index
    %150 = vector.load %arg8[%c2_153, %c0_154, %c0_155] : memref<3x128x256xf32, #tpu.memory_space<vmem>>, vector<1x128x256xf32>
    %151 = vector.shape_cast %150 : vector<1x128x256xf32> to vector<128x256xf32>
    %cst_156 = arith.constant dense<0.000000e+00> : vector<46x256xf32>
    %152 = tpu.matmul %149, %151, %cst_156 {dimension_numbers = #tpu.dot_dimension_numbers<[1], [0], [0], [1], [0, 0, 1, 1], [], []>} : vector<46x128xf32>, vector<128x256xf32>, vector<46x256xf32> -> vector<46x256xf32>
    %153 = arith.addf %148, %152 : vector<46x256xf32>
    %c0_157 = arith.constant 0 : index
    %c0_158 = arith.constant 0 : index
    %154 = vector.load %arg9[%c0_157, %c0_158] : memref<1x256xf32, #tpu.memory_space<vmem>>, vector<1x256xf32>
    %155 = vector.broadcast %154 : vector<1x256xf32> to vector<46x256xf32>
    %156 = arith.mulf %153, %155 : vector<46x256xf32>
    %c0_159 = arith.constant 0 : index
    %c0_160 = arith.constant 0 : index
    %157 = vector.load %arg10[%c0_159, %c0_160] : memref<1x256xf32, #tpu.memory_space<vmem>>, vector<1x256xf32>
    %158 = vector.broadcast %157 : vector<1x256xf32> to vector<46x256xf32>
    %159 = arith.addf %156, %158 : vector<46x256xf32>
    %cst_161 = arith.constant 0.000000e+00 : f32
    %160 = vector.broadcast %cst_161 : f32 to vector<46x256xf32>
    %161 = arith.maximumf %159, %160 : vector<46x256xf32>
    %162 = vector.extract_strided_slice %161 {offsets = [0, 0], sizes = [4, 256], strides = [1, 1]} : vector<46x256xf32> to vector<4x256xf32>
    %c1_162 = arith.constant 1 : index
    %c0_163 = arith.constant 0 : index
    %163 = vector.load %arg27[%c1_162, %c0_163] : memref<48x256xf32, #tpu.memory_space<vmem>>, vector<4x256xf32>
    tpu.vector_store %arg27[%c1_162, %c0_163], %162 {strides = array<i32>} : memref<48x256xf32, #tpu.memory_space<vmem>>, vector<4x256xf32>,
    %164 = vector.extract_strided_slice %161 {offsets = [6, 0], sizes = [4, 256], strides = [1, 1]} : vector<46x256xf32> to vector<4x256xf32>
    %c7_164 = arith.constant 7 : index
    %c0_165 = arith.constant 0 : index
    %165 = vector.load %arg27[%c7_164, %c0_165] : memref<48x256xf32, #tpu.memory_space<vmem>>, vector<4x256xf32>
    tpu.vector_store %arg27[%c7_164, %c0_165], %164 {strides = array<i32>} : memref<48x256xf32, #tpu.memory_space<vmem>>, vector<4x256xf32>,
    %166 = vector.extract_strided_slice %161 {offsets = [12, 0], sizes = [4, 256], strides = [1, 1]} : vector<46x256xf32> to vector<4x256xf32>
    %c13_166 = arith.constant 13 : index
    %c0_167 = arith.constant 0 : index
    %167 = vector.load %arg27[%c13_166, %c0_167] : memref<48x256xf32, #tpu.memory_space<vmem>>, vector<4x256xf32>
    tpu.vector_store %arg27[%c13_166, %c0_167], %166 {strides = array<i32>} : memref<48x256xf32, #tpu.memory_space<vmem>>, vector<4x256xf32>,
    %168 = vector.extract_strided_slice %161 {offsets = [18, 0], sizes = [4, 256], strides = [1, 1]} : vector<46x256xf32> to vector<4x256xf32>
    %c19_168 = arith.constant 19 : index
    %c0_169 = arith.constant 0 : index
    %169 = vector.load %arg27[%c19_168, %c0_169] : memref<48x256xf32, #tpu.memory_space<vmem>>, vector<4x256xf32>
    tpu.vector_store %arg27[%c19_168, %c0_169], %168 {strides = array<i32>} : memref<48x256xf32, #tpu.memory_space<vmem>>, vector<4x256xf32>,
    %170 = vector.extract_strided_slice %161 {offsets = [24, 0], sizes = [4, 256], strides = [1, 1]} : vector<46x256xf32> to vector<4x256xf32>
    %c25_170 = arith.constant 25 : index
    %c0_171 = arith.constant 0 : index
    %171 = vector.load %arg27[%c25_170, %c0_171] : memref<48x256xf32, #tpu.memory_space<vmem>>, vector<4x256xf32>
    tpu.vector_store %arg27[%c25_170, %c0_171], %170 {strides = array<i32>} : memref<48x256xf32, #tpu.memory_space<vmem>>, vector<4x256xf32>,
    %172 = vector.extract_strided_slice %161 {offsets = [30, 0], sizes = [4, 256], strides = [1, 1]} : vector<46x256xf32> to vector<4x256xf32>
    %c31_172 = arith.constant 31 : index
    %c0_173 = arith.constant 0 : index
    %173 = vector.load %arg27[%c31_172, %c0_173] : memref<48x256xf32, #tpu.memory_space<vmem>>, vector<4x256xf32>
    tpu.vector_store %arg27[%c31_172, %c0_173], %172 {strides = array<i32>} : memref<48x256xf32, #tpu.memory_space<vmem>>, vector<4x256xf32>,
    %174 = vector.extract_strided_slice %161 {offsets = [36, 0], sizes = [4, 256], strides = [1, 1]} : vector<46x256xf32> to vector<4x256xf32>
    %c37_174 = arith.constant 37 : index
    %c0_175 = arith.constant 0 : index
    %175 = vector.load %arg27[%c37_174, %c0_175] : memref<48x256xf32, #tpu.memory_space<vmem>>, vector<4x256xf32>
    tpu.vector_store %arg27[%c37_174, %c0_175], %174 {strides = array<i32>} : memref<48x256xf32, #tpu.memory_space<vmem>>, vector<4x256xf32>,
    %176 = vector.extract_strided_slice %161 {offsets = [42, 0], sizes = [4, 256], strides = [1, 1]} : vector<46x256xf32> to vector<4x256xf32>
    %c43_176 = arith.constant 43 : index
    %c0_177 = arith.constant 0 : index
    %177 = vector.load %arg27[%c43_176, %c0_177] : memref<48x256xf32, #tpu.memory_space<vmem>>, vector<4x256xf32>
    tpu.vector_store %arg27[%c43_176, %c0_177], %176 {strides = array<i32>} : memref<48x256xf32, #tpu.memory_space<vmem>>, vector<4x256xf32>,
    %c0_178 = arith.constant 0 : index
    %c0_179 = arith.constant 0 : index
    %178 = vector.load %arg27[%c0_178, %c0_179] : memref<48x256xf32, #tpu.memory_space<vmem>>, vector<46x256xf32>
    %c0_180 = arith.constant 0 : index
    %c0_181 = arith.constant 0 : index
    %c0_182 = arith.constant 0 : index
    %179 = vector.load %arg11[%c0_180, %c0_181, %c0_182] : memref<3x256x256xf32, #tpu.memory_space<vmem>>, vector<1x256x256xf32>
    %180 = vector.shape_cast %179 : vector<1x256x256xf32> to vector<256x256xf32>
    %cst_183 = arith.constant dense<0.000000e+00> : vector<46x256xf32>
    %181 = tpu.matmul %178, %180, %cst_183 {dimension_numbers = #tpu.dot_dimension_numbers<[1], [0], [0], [1], [0, 0, 1, 1], [], []>} : vector<46x256xf32>, vector<256x256xf32>, vector<46x256xf32> -> vector<46x256xf32>
    %c1_184 = arith.constant 1 : index
    %c0_185 = arith.constant 0 : index
    %182 = vector.load %arg27[%c1_184, %c0_185] : memref<48x256xf32, #tpu.memory_space<vmem>>, vector<46x256xf32>
    %c1_186 = arith.constant 1 : index
    %c0_187 = arith.constant 0 : index
    %c0_188 = arith.constant 0 : index
    %183 = vector.load %arg11[%c1_186, %c0_187, %c0_188] : memref<3x256x256xf32, #tpu.memory_space<vmem>>, vector<1x256x256xf32>
    %184 = vector.shape_cast %183 : vector<1x256x256xf32> to vector<256x256xf32>
    %cst_189 = arith.constant dense<0.000000e+00> : vector<46x256xf32>
    %185 = tpu.matmul %182, %184, %cst_189 {dimension_numbers = #tpu.dot_dimension_numbers<[1], [0], [0], [1], [0, 0, 1, 1], [], []>} : vector<46x256xf32>, vector<256x256xf32>, vector<46x256xf32> -> vector<46x256xf32>
    %186 = arith.addf %181, %185 : vector<46x256xf32>
    %c2_190 = arith.constant 2 : index
    %c0_191 = arith.constant 0 : index
    %187 = vector.load %arg27[%c2_190, %c0_191] : memref<48x256xf32, #tpu.memory_space<vmem>>, vector<46x256xf32>
    %c2_192 = arith.constant 2 : index
    %c0_193 = arith.constant 0 : index
    %c0_194 = arith.constant 0 : index
    %188 = vector.load %arg11[%c2_192, %c0_193, %c0_194] : memref<3x256x256xf32, #tpu.memory_space<vmem>>, vector<1x256x256xf32>
    %189 = vector.shape_cast %188 : vector<1x256x256xf32> to vector<256x256xf32>
    %cst_195 = arith.constant dense<0.000000e+00> : vector<46x256xf32>
    %190 = tpu.matmul %187, %189, %cst_195 {dimension_numbers = #tpu.dot_dimension_numbers<[1], [0], [0], [1], [0, 0, 1, 1], [], []>} : vector<46x256xf32>, vector<256x256xf32>, vector<46x256xf32> -> vector<46x256xf32>
    %191 = arith.addf %186, %190 : vector<46x256xf32>
    %c0_196 = arith.constant 0 : index
    %c0_197 = arith.constant 0 : index
    %192 = vector.load %arg12[%c0_196, %c0_197] : memref<1x256xf32, #tpu.memory_space<vmem>>, vector<1x256xf32>
    %193 = vector.broadcast %192 : vector<1x256xf32> to vector<46x256xf32>
    %194 = arith.mulf %191, %193 : vector<46x256xf32>
    %c0_198 = arith.constant 0 : index
    %c0_199 = arith.constant 0 : index
    %195 = vector.load %arg13[%c0_198, %c0_199] : memref<1x256xf32, #tpu.memory_space<vmem>>, vector<1x256xf32>
    %196 = vector.broadcast %195 : vector<1x256xf32> to vector<46x256xf32>
    %197 = arith.addf %194, %196 : vector<46x256xf32>
    %cst_200 = arith.constant 0.000000e+00 : f32
    %198 = vector.broadcast %cst_200 : f32 to vector<46x256xf32>
    %199 = arith.maximumf %197, %198 : vector<46x256xf32>
    %200 = vector.extract_strided_slice %199 {offsets = [0, 0], sizes = [46, 64], strides = [1, 1]} : vector<46x256xf32> to vector<46x64xf32>
    %201 = vector.extract_strided_slice %199 {offsets = [0, 64], sizes = [46, 64], strides = [1, 1]} : vector<46x256xf32> to vector<46x64xf32>
    %202 = arith.maximumf %200, %201 : vector<46x64xf32>
    %c0_201 = arith.constant 0 : index
    %c0_202 = arith.constant 0 : index
    %203 = vector.load %arg29[%c0_201, %c0_202] : memref<46x128xf32, #tpu.memory_space<vmem>>, vector<46x64xf32>
    tpu.vector_store %arg29[%c0_201, %c0_202], %202 {strides = array<i32>} : memref<46x128xf32, #tpu.memory_space<vmem>>, vector<46x64xf32>,
    %204 = vector.extract_strided_slice %199 {offsets = [0, 128], sizes = [46, 64], strides = [1, 1]} : vector<46x256xf32> to vector<46x64xf32>
    %205 = vector.extract_strided_slice %199 {offsets = [0, 192], sizes = [46, 64], strides = [1, 1]} : vector<46x256xf32> to vector<46x64xf32>
    %206 = arith.maximumf %204, %205 : vector<46x64xf32>
    %c0_203 = arith.constant 0 : index
    %c64_204 = arith.constant 64 : index
    %207 = vector.load %arg29[%c0_203, %c64_204] : memref<46x128xf32, #tpu.memory_space<vmem>>, vector<46x64xf32>
    tpu.vector_store %arg29[%c0_203, %c64_204], %206 {strides = array<i32>} : memref<46x128xf32, #tpu.memory_space<vmem>>, vector<46x64xf32>,
    %c0_205 = arith.constant 0 : index
    %c0_206 = arith.constant 0 : index
    %208 = tpu.strided_load %arg29[%c0_205, %c0_206] {strides = array<i32: 6, 1>} : memref<46x128xf32, #tpu.memory_space<vmem>>, vector<8x128xf32>
    %c1_207 = arith.constant 1 : index
    %c0_208 = arith.constant 0 : index
    %209 = tpu.strided_load %arg29[%c1_207, %c0_208] {strides = array<i32: 6, 1>} : memref<46x128xf32, #tpu.memory_space<vmem>>, vector<8x128xf32>
    %210 = arith.maximumf %208, %209 : vector<8x128xf32>
    %c2_209 = arith.constant 2 : index
    %c0_210 = arith.constant 0 : index
    %211 = tpu.strided_load %arg29[%c2_209, %c0_210] {strides = array<i32: 6, 1>} : memref<46x128xf32, #tpu.memory_space<vmem>>, vector<8x128xf32>
    %c3_211 = arith.constant 3 : index
    %c0_212 = arith.constant 0 : index
    %212 = tpu.strided_load %arg29[%c3_211, %c0_212] {strides = array<i32: 6, 1>} : memref<46x128xf32, #tpu.memory_space<vmem>>, vector<8x128xf32>
    %213 = arith.maximumf %211, %212 : vector<8x128xf32>
    %c0_213 = arith.constant 0 : index
    %c0_214 = arith.constant 0 : index
    %214 = vector.load %arg14[%c0_213, %c0_214] : memref<128x256xf32, #tpu.memory_space<vmem>>, vector<128x256xf32>
    %cst_215 = arith.constant dense<0.000000e+00> : vector<8x256xf32>
    %215 = tpu.matmul %210, %214, %cst_215 {dimension_numbers = #tpu.dot_dimension_numbers<[1], [0], [0], [1], [0, 0, 1, 1], [], []>} : vector<8x128xf32>, vector<128x256xf32>, vector<8x256xf32> -> vector<8x256xf32>
    %c0_216 = arith.constant 0 : index
    %c0_217 = arith.constant 0 : index
    %216 = vector.load %arg15[%c0_216, %c0_217] : memref<128x256xf32, #tpu.memory_space<vmem>>, vector<128x256xf32>
    %cst_218 = arith.constant dense<0.000000e+00> : vector<8x256xf32>
    %217 = tpu.matmul %213, %216, %cst_218 {dimension_numbers = #tpu.dot_dimension_numbers<[1], [0], [0], [1], [0, 0, 1, 1], [], []>} : vector<8x128xf32>, vector<128x256xf32>, vector<8x256xf32> -> vector<8x256xf32>
    %218 = arith.addf %215, %217 : vector<8x256xf32>
    %c0_219 = arith.constant 0 : index
    %c0_220 = arith.constant 0 : index
    %219 = vector.load %arg16[%c0_219, %c0_220] : memref<1x256xf32, #tpu.memory_space<vmem>>, vector<1x256xf32>
    %220 = vector.broadcast %219 : vector<1x256xf32> to vector<8x256xf32>
    %221 = arith.mulf %218, %220 : vector<8x256xf32>
    %c0_221 = arith.constant 0 : index
    %c0_222 = arith.constant 0 : index
    %222 = vector.load %arg17[%c0_221, %c0_222] : memref<1x256xf32, #tpu.memory_space<vmem>>, vector<1x256xf32>
    %223 = vector.broadcast %222 : vector<1x256xf32> to vector<8x256xf32>
    %224 = arith.addf %221, %223 : vector<8x256xf32>
    %cst_223 = arith.constant 0.000000e+00 : f32
    %225 = vector.broadcast %cst_223 : f32 to vector<8x256xf32>
    %226 = arith.maximumf %224, %225 : vector<8x256xf32>
    %c0_224 = arith.constant 0 : index
    %c0_225 = arith.constant 0 : index
    %227 = vector.load %arg18[%c0_224, %c0_225] : memref<256x128xf32, #tpu.memory_space<vmem>>, vector<256x128xf32>
    %cst_226 = arith.constant dense<0.000000e+00> : vector<8x128xf32>
    %228 = tpu.matmul %226, %227, %cst_226 {dimension_numbers = #tpu.dot_dimension_numbers<[1], [0], [0], [1], [0, 0, 1, 1], [], []>} : vector<8x256xf32>, vector<256x128xf32>, vector<8x128xf32> -> vector<8x128xf32>
    %c0_227 = arith.constant 0 : index
    %c0_228 = arith.constant 0 : index
    %229 = vector.load %arg19[%c0_227, %c0_228] : memref<1x128xf32, #tpu.memory_space<vmem>>, vector<1x128xf32>
    %230 = vector.broadcast %229 : vector<1x128xf32> to vector<8x128xf32>
    %231 = arith.mulf %228, %230 : vector<8x128xf32>
    %c0_229 = arith.constant 0 : index
    %c0_230 = arith.constant 0 : index
    %232 = vector.load %arg20[%c0_229, %c0_230] : memref<1x128xf32, #tpu.memory_space<vmem>>, vector<1x128xf32>
    %233 = vector.broadcast %232 : vector<1x128xf32> to vector<8x128xf32>
    %234 = arith.addf %231, %233 : vector<8x128xf32>
    %cst_231 = arith.constant 0.000000e+00 : f32
    %235 = vector.broadcast %cst_231 : f32 to vector<8x128xf32>
    %236 = arith.maximumf %234, %235 : vector<8x128xf32>
    %c0_232 = arith.constant 0 : index
    %c0_233 = arith.constant 0 : index
    %237 = vector.load %arg21[%c0_232, %c0_233] : memref<128x10xf32, #tpu.memory_space<vmem>>, vector<128x10xf32>
    %cst_234 = arith.constant dense<0.000000e+00> : vector<8x10xf32>
    %238 = tpu.matmul %236, %237, %cst_234 {dimension_numbers = #tpu.dot_dimension_numbers<[1], [0], [0], [1], [0, 0, 1, 1], [], []>} : vector<8x128xf32>, vector<128x10xf32>, vector<8x10xf32> -> vector<8x10xf32>
    %c0_235 = arith.constant 0 : index
    %c0_236 = arith.constant 0 : index
    %239 = vector.load %arg22[%c0_235, %c0_236] : memref<1x10xf32, #tpu.memory_space<vmem>>, vector<1x10xf32>
    %240 = vector.broadcast %239 : vector<1x10xf32> to vector<8x10xf32>
    %241 = arith.addf %238, %240 : vector<8x10xf32>
    %c0_237 = arith.constant 0 : index
    %c0_238 = arith.constant 0 : index
    %242 = vector.load %arg23[%c0_237, %c0_238] : memref<8x10xf32, #tpu.memory_space<vmem>>, vector<8x10xf32>
    tpu.vector_store %arg23[%c0_237, %c0_238], %241 {strides = array<i32>} : memref<8x10xf32, #tpu.memory_space<vmem>>, vector<8x10xf32>,
    return
  }
  func.func @transform_0(%arg0: i32) -> (i32, i32, i32) {
    %c0_i32 = arith.constant 0 : i32
    %c0_i32_0 = arith.constant 0 : i32
    %c0_i32_1 = arith.constant 0 : i32
    return %arg0, %c0_i32, %c0_i32_0 : i32, i32, i32
  }
  func.func @transform_1(%arg0: i32) -> (i32, i32, i32) {
    %c0_i32 = arith.constant 0 : i32
    %c0_i32_0 = arith.constant 0 : i32
    %c0_i32_1 = arith.constant 0 : i32
    %c0_i32_2 = arith.constant 0 : i32
    return %c0_i32, %c0_i32_0, %c0_i32_1 : i32, i32, i32
  }
  func.func @transform_2(%arg0: i32) -> (i32, i32) {
    %c0_i32 = arith.constant 0 : i32
    %c0_i32_0 = arith.constant 0 : i32
    %c0_i32_1 = arith.constant 0 : i32
    return %c0_i32, %c0_i32_0 : i32, i32
  }
  func.func @transform_3(%arg0: i32) -> (i32, i32) {
    %c0_i32 = arith.constant 0 : i32
    %c0_i32_0 = arith.constant 0 : i32
    %c0_i32_1 = arith.constant 0 : i32
    return %c0_i32, %c0_i32_0 : i32, i32
  }
  func.func @transform_4(%arg0: i32) -> (i32, i32, i32) {
    %c0_i32 = arith.constant 0 : i32
    %c0_i32_0 = arith.constant 0 : i32
    %c0_i32_1 = arith.constant 0 : i32
    %c0_i32_2 = arith.constant 0 : i32
    return %c0_i32, %c0_i32_0, %c0_i32_1 : i32, i32, i32
  }
  func.func @transform_5(%arg0: i32) -> (i32, i32) {
    %c0_i32 = arith.constant 0 : i32
    %c0_i32_0 = arith.constant 0 : i32
    %c0_i32_1 = arith.constant 0 : i32
    return %c0_i32, %c0_i32_0 : i32, i32
  }
  func.func @transform_6(%arg0: i32) -> (i32, i32) {
    %c0_i32 = arith.constant 0 : i32
    %c0_i32_0 = arith.constant 0 : i32
    %c0_i32_1 = arith.constant 0 : i32
    return %c0_i32, %c0_i32_0 : i32, i32
  }
  func.func @transform_7(%arg0: i32) -> (i32, i32, i32) {
    %c0_i32 = arith.constant 0 : i32
    %c0_i32_0 = arith.constant 0 : i32
    %c0_i32_1 = arith.constant 0 : i32
    %c0_i32_2 = arith.constant 0 : i32
    return %c0_i32, %c0_i32_0, %c0_i32_1 : i32, i32, i32
  }
  func.func @transform_8(%arg0: i32) -> (i32, i32) {
    %c0_i32 = arith.constant 0 : i32
    %c0_i32_0 = arith.constant 0 : i32
    %c0_i32_1 = arith.constant 0 : i32
    return %c0_i32, %c0_i32_0 : i32, i32
  }
  func.func @transform_9(%arg0: i32) -> (i32, i32) {
    %c0_i32 = arith.constant 0 : i32
    %c0_i32_0 = arith.constant 0 : i32
    %c0_i32_1 = arith.constant 0 : i32
    return %c0_i32, %c0_i32_0 : i32, i32
  }
  func.func @transform_10(%arg0: i32) -> (i32, i32, i32) {
    %c0_i32 = arith.constant 0 : i32
    %c0_i32_0 = arith.constant 0 : i32
    %c0_i32_1 = arith.constant 0 : i32
    %c0_i32_2 = arith.constant 0 : i32
    return %c0_i32, %c0_i32_0, %c0_i32_1 : i32, i32, i32
  }
  func.func @transform_11(%arg0: i32) -> (i32, i32) {
    %c0_i32 = arith.constant 0 : i32
    %c0_i32_0 = arith.constant 0 : i32
    %c0_i32_1 = arith.constant 0 : i32
    return %c0_i32, %c0_i32_0 : i32, i32
  }
  func.func @transform_12(%arg0: i32) -> (i32, i32) {
    %c0_i32 = arith.constant 0 : i32
    %c0_i32_0 = arith.constant 0 : i32
    %c0_i32_1 = arith.constant 0 : i32
    return %c0_i32, %c0_i32_0 : i32, i32
  }
  func.func @transform_13(%arg0: i32) -> (i32, i32) {
    %c0_i32 = arith.constant 0 : i32
    %c0_i32_0 = arith.constant 0 : i32
    %c0_i32_1 = arith.constant 0 : i32
    return %c0_i32, %c0_i32_0 : i32, i32
  }
  func.func @transform_14(%arg0: i32) -> (i32, i32) {
    %c0_i32 = arith.constant 0 : i32
    %c0_i32_0 = arith.constant 0 : i32
    %c0_i32_1 = arith.constant 0 : i32
    return %c0_i32, %c0_i32_0 : i32, i32
  }
  func.func @transform_15(%arg0: i32) -> (i32, i32) {
    %c0_i32 = arith.constant 0 : i32
    %c0_i32_0 = arith.constant 0 : i32
    %c0_i32_1 = arith.constant 0 : i32
    return %c0_i32, %c0_i32_0 : i32, i32
  }
  func.func @transform_16(%arg0: i32) -> (i32, i32) {
    %c0_i32 = arith.constant 0 : i32
    %c0_i32_0 = arith.constant 0 : i32
    %c0_i32_1 = arith.constant 0 : i32
    return %c0_i32, %c0_i32_0 : i32, i32
  }
  func.func @transform_17(%arg0: i32) -> (i32, i32) {
    %c0_i32 = arith.constant 0 : i32
    %c0_i32_0 = arith.constant 0 : i32
    %c0_i32_1 = arith.constant 0 : i32
    return %c0_i32, %c0_i32_0 : i32, i32
  }
  func.func @transform_18(%arg0: i32) -> (i32, i32) {
    %c0_i32 = arith.constant 0 : i32
    %c0_i32_0 = arith.constant 0 : i32
    %c0_i32_1 = arith.constant 0 : i32
    return %c0_i32, %c0_i32_0 : i32, i32
  }
  func.func @transform_19(%arg0: i32) -> (i32, i32) {
    %c0_i32 = arith.constant 0 : i32
    %c0_i32_0 = arith.constant 0 : i32
    %c0_i32_1 = arith.constant 0 : i32
    return %c0_i32, %c0_i32_0 : i32, i32
  }
  func.func @transform_20(%arg0: i32) -> (i32, i32) {
    %c0_i32 = arith.constant 0 : i32
    %c0_i32_0 = arith.constant 0 : i32
    %c0_i32_1 = arith.constant 0 : i32
    return %c0_i32, %c0_i32_0 : i32, i32
  }
  func.func @transform_21(%arg0: i32) -> (i32, i32) {
    %c0_i32 = arith.constant 0 : i32
    %c0_i32_0 = arith.constant 0 : i32
    %c0_i32_1 = arith.constant 0 : i32
    return %c0_i32, %c0_i32_0 : i32, i32
  }
  func.func @transform_22(%arg0: i32) -> (i32, i32) {
    %c0_i32 = arith.constant 0 : i32
    %c0_i32_0 = arith.constant 0 : i32
    return %arg0, %c0_i32 : i32, i32
  }
}

</mosaic_0001>

<llo_original>
// kernel: _lambda_.1
$region0: #{_lambda_.1}
  #allocation0 [shape = 'u32[]', space=smem, size = 0x4, offset = 0x4, fixed_abs, tag = 'smem constant byte address 0x4 - core index']
  #allocation1 [shape = 'u32[144,128]{1,0:T(1,128)}', space=vmem, size = 0x12000, scoped, tag = 'internal scratch']
  #allocation2 [shape = 'f32[80,24]{1,0:T(8,128)}', space=vmem, size = 0xa000, scoped, tag = 'scratch operand']
  #allocation3 [shape = 'f32[80,128]{1,0:T(8,128)}', space=vmem, size = 0xa000, scoped, tag = 'scratch operand']
  #allocation4 [shape = 'f32[48,128]{1,0:T(8,128)}', space=vmem, size = 0x6000, scoped, tag = 'scratch operand']
  #allocation5 [shape = 'f32[48,256]{1,0:T(8,128)}', space=vmem, size = 0xc000, scoped, tag = 'scratch operand']
  #allocation6 [shape = 'f32[78,128]{1,0:T(8,128)}', space=vmem, size = 0xa000, scoped, tag = 'scratch operand']
  #allocation7 [shape = 'f32[46,128]{1,0:T(8,128)}', space=vmem, size = 0x6000, scoped, tag = 'scratch operand']
  %s0 = inlined_call_operand.vmem [shape: f32[16,8,24], index: 0, kind: input, shape index: {}]
  %s1 = inlined_call_operand.vmem [shape: f32[3,24,128], index: 1, kind: input, shape index: {}]
  %s2 = inlined_call_operand.hbm [shape: f32[1,128], index: 2, kind: input, shape index: {}]
  %s3 = inlined_call_operand.hbm [shape: f32[1,128], index: 3, kind: input, shape index: {}]
  %s4 = inlined_call_operand.hbm [shape: f32[3,128,256], index: 4, kind: input, shape index: {}]
  %s5 = inlined_call_operand.vmem [shape: f32[1,256], index: 5, kind: input, shape index: {}]
  %s6 = inlined_call_operand.vmem [shape: f32[1,256], index: 6, kind: input, shape index: {}]
  %s7 = inlined_call_operand.hbm [shape: f32[3,128,256], index: 7, kind: input, shape index: {}]
  %s8 = inlined_call_operand.vmem [shape: f32[1,256], index: 8, kind: input, shape index: {}]
  %s9 = inlined_call_operand.vmem [shape: f32[1,256], index: 9, kind: input, shape index: {}]
  %s10 = inlined_call_operand.hbm [shape: f32[3,256,256], index: 10, kind: input, shape index: {}]
  %s11 = inlined_call_operand.vmem [shape: f32[1,256], index: 11, kind: input, shape index: {}]
  %s12 = inlined_call_operand.vmem [shape: f32[1,256], index: 12, kind: input, shape index: {}]
  %s13 = inlined_call_operand.hbm [shape: f32[128,256], index: 13, kind: input, shape index: {}]
  %s14 = inlined_call_operand.vmem [shape: f32[128,256], index: 14, kind: input, shape index: {}]
  %s15 = inlined_call_operand.vmem [shape: f32[1,256], index: 15, kind: input, shape index: {}]
  %s16 = inlined_call_operand.vmem [shape: f32[1,256], index: 16, kind: input, shape index: {}]
  %s17 = inlined_call_operand.vmem [shape: f32[256,128], index: 17, kind: input, shape index: {}]
  %s18 = inlined_call_operand.vmem [shape: f32[1,128], index: 18, kind: input, shape index: {}]
  %s19 = inlined_call_operand.vmem [shape: f32[1,128], index: 19, kind: input, shape index: {}]
  %s20 = inlined_call_operand.vmem [shape: f32[128,10], index: 20, kind: input, shape index: {}]
  %s21 = inlined_call_operand.vmem [shape: f32[1,10], index: 21, kind: input, shape index: {}]
  %s22 = inlined_call_operand.hbm [shape: f32[16,10], index: 22, kind: output, shape index: {}]
  %s23 = sld [smem:[#allocation0]]
  $region145: #{_lambda_.1} parent=0
    _
  %s25 = ssub.s32 1, %s23
  %s26 = scalar_select 0, %s25, %s23
  $region1: #{_lambda_.1} parent=0
    #allocation8 [shape = 'u8[512]{0}', space=vmem, size = 0x400, scoped, tag = 'input window, operand 2, single buffered']
    #allocation9 [shape = 's32[2]{0}', space=sflag, size = 0x8, scoped, tag = 'scoped memory for _lambda_.1']
    #allocation10 [shape = 's32[2]{0}', space=sflag, size = 0x8, scoped, tag = 'scoped memory for _lambda_.1']
    #allocation11 [shape = 'u8[512]{0}', space=vmem, size = 0x400, scoped, tag = 'input window, operand 3, single buffered']
    #allocation12 [shape = 's32[1]{0}', space=sflag, size = 0x4, scoped, tag = 'scoped memory for _lambda_.1']
    #allocation13 [shape = 'u8[393216]{0}', space=vmem, size = 0x60000, scoped, tag = 'input window, operand 4, single buffered']
    #allocation14 [shape = 'u8[393216]{0}', space=vmem, size = 0x60000, scoped, tag = 'input window, operand 7, single buffered']
    #allocation15 [shape = 's32[1]{0}', space=sflag, size = 0x4, scoped, tag = 'scoped memory for _lambda_.1']
    #allocation16 [shape = 'u8[786432]{0}', space=vmem, size = 0xc0000, scoped, tag = 'input window, operand 10, single buffered']
    #allocation17 [shape = 'u8[131072]{0}', space=vmem, size = 0x20000, scoped, tag = 'input window, operand 13, single buffered']
    #allocation18 [shape = 's32[1]{0}', space=sflag, size = 0x4, scoped, tag = 'scoped memory for _lambda_.1']
    #allocation19 [shape = 'u8[8192]{0}', space=vmem, size = 0x2000, scoped, tag = 'output window, operand 0']
    %27 = vsyncpa [#allocation9], 0
    %28 = vsyncpa [#allocation12], 0
    %29 = vsyncpa [#allocation15], 0
    %30 = vsyncpa [#allocation18], 0
    %31 = vsyncpa [#allocation10], 0
    %s32 = scalar_lea.sflag [#allocation10], 1
    %33 = vsyncpa %s32, 0
    loop: start=0, step=1, limit=4
    $region2: #{_lambda_.1} parent=1 // loop_pre_header
      _
    $region3: #{_lambda_.1} parent=1 // loop_header
      %s35 = sphi 0, %s39
      %p36 = scmp.ge.s32.totalorder %s35, 4
      %s45 = sphi 0, %s47
      %s48 = sphi 0, %s45
      %s49 = sphi 0, %s48
      %s65 = sphi 0, %s49
      %s69 = sphi 0, %s69
      %s71 = sphi 0, %s69
      %s72 = sphi 0, %s71
      %s86 = sphi 0, %s72
      %s90 = sphi 0, %s90
      %s92 = sphi 0, %s90
      %s93 = sphi 0, %s92
      %s107 = sphi 0, %s93
      %s111 = sphi 0, %s111
      %s113 = sphi 0, %s111
      %s114 = sphi 0, %s113
      %s128 = sphi 0, %s114
      %s132 = sphi 0, %s132
      %s134 = sphi 0, %s132
      %s135 = sphi 0, %s134
      %s149 = sphi 0, %s135
      %s153 = sphi 0, %s153
      %s155 = sphi 0, %s153
      %s156 = sphi 0, %s155
      %s170 = sphi 0, %s156
      %s174 = sphi 0, %s174
      %s176 = sphi 0, %s174
      %s177 = sphi 0, %s176
      %s191 = sphi 0, %s177
      %s195 = sphi 0, %s195
      %s197 = sphi 0, %s195
      %s198 = sphi 0, %s197
      %s212 = sphi 0, %s198
      %s216 = sphi 0, %s216
      %s218 = sphi 0, %s216
      %s219 = sphi 0, %s218
      %s233 = sphi 0, %s219
      %s237 = sphi 0, %s237
      %s239 = sphi 0, %s237
      %s240 = sphi 0, %s239
      %s254 = sphi 0, %s240
      %s258 = sphi 0, %s258
      %s260 = sphi 0, %s258
      %s261 = sphi 0, %s260
      %s275 = sphi 0, %s261
      %s279 = sphi 0, %s279
      %s281 = sphi 0, %s279
      %s282 = sphi 0, %s281
      %s296 = sphi 0, %s282
      %s300 = sphi 0, %s300
      %s302 = sphi 0, %s300
      %s303 = sphi 0, %s302
      %s317 = sphi 0, %s303
      %s321 = sphi 0, %s321
      %s323 = sphi 0, %s321
      %s324 = sphi 0, %s323
      %s338 = sphi 0, %s324
      %s342 = sphi 0, %s342
      %s344 = sphi 0, %s342
      %s345 = sphi 0, %s344
      %s359 = sphi 0, %s345
      %s363 = sphi 0, %s363
      %s365 = sphi 0, %s363
      %s366 = sphi 0, %s365
      %s380 = sphi 0, %s366
      %s384 = sphi 0, %s384
      %s386 = sphi 0, %s384
      %s387 = sphi 0, %s386
      %s401 = sphi 0, %s387
      %s405 = sphi 0, %s405
      %s407 = sphi 0, %s405
      %s408 = sphi 0, %s407
      %s422 = sphi 0, %s408
      %s426 = sphi 0, %s426
      %s428 = sphi 0, %s426
      %s429 = sphi 0, %s428
      %s443 = sphi 0, %s429
      %s447 = sphi 0, %s447
      %s449 = sphi 0, %s447
      %s450 = sphi 0, %s449
      %s464 = sphi 0, %s450
      %s468 = sphi 0, %s468
      %s470 = sphi 0, %s468
      %s471 = sphi 0, %s470
      %s485 = sphi 0, %s471
      %s489 = sphi 0, %s489
      %s491 = sphi 0, %s489
      %s492 = sphi 0, %s491
      %s506 = sphi 0, %s492
      %s512 = sphi 0, %s514
      %s515 = sphi 0, %s512
      %s516 = sphi 0, %s515
      %s532 = sphi 0, %s516
    $region4: #{_lambda_.1} parent=1 // loop_header_branch
      %38 = sbr.rel (%p36) target = $region8
    $region5: #{_lambda_.1} parent=1 // loop_body
      %s40 = ssub.s32 %s35, 1
      %s41 = ssub.s32 %s35, 2
      %s42 = sadd.s32 %s35, 1
      %s43 = ssub.s32 %s35, %s42
      %p44 = scmp.eq.s32.totalorder %s43, 0
      %s46 = sadd.s32 %s45, 1
      %s47 = scalar_select %p44, %s45, %s46
      %p50 = pneg %p44
      %p51 = scmp.eq.s32.totalorder %s35, 1
      %p52 = por %p50, %p51
      %p53 = scmp.ne.s32.totalorder %s45, %s48
      %p54 = scmp.eq.s32.totalorder %s35, 0
      %p55 = por %p53, %p54
      %p56 = scmp.ne.s32.totalorder %s45, %s48
      %p57 = scmp.eq.s32.totalorder %s40, 1
      %p58 = por %p56, %p57
      %p59 = scmp.ne.s32.totalorder %s48, %s49
      %p60 = scmp.eq.s32.totalorder %s40, 0
      %p61 = por %p59, %p60
      %p62 = scmp.ne.s32.totalorder %s48, %s49
      %p63 = scmp.eq.s32.totalorder %s41, 1
      %p64 = por %p62, %p63
      %p66 = scmp.ne.s32.totalorder %s49, %s65
      %p67 = scmp.eq.s32.totalorder %s41, 0
      %p68 = por %p66, %p67
      %s70 = sadd.s32 %s69, 1
      %p73 = scmp.eq.s32.totalorder %s35, 1
      %p74 = scmp.ne.s32.totalorder %s69, %s71
      %p75 = scmp.eq.s32.totalorder %s35, 0
      %p76 = por %p74, %p75
      %p77 = scmp.ne.s32.totalorder %s69, %s71
      %p78 = scmp.eq.s32.totalorder %s40, 1
      %p79 = por %p77, %p78
      %p80 = scmp.ne.s32.totalorder %s71, %s72
      %p81 = scmp.eq.s32.totalorder %s40, 0
      %p82 = por %p80, %p81
      %p83 = scmp.ne.s32.totalorder %s71, %s72
      %p84 = scmp.eq.s32.totalorder %s41, 1
      %p85 = por %p83, %p84
      %p87 = scmp.ne.s32.totalorder %s72, %s86
      %p88 = scmp.eq.s32.totalorder %s41, 0
      %p89 = por %p87, %p88
      %s91 = sadd.s32 %s90, 1
      %p94 = scmp.eq.s32.totalorder %s35, 1
      %p95 = scmp.ne.s32.totalorder %s90, %s92
      %p96 = scmp.eq.s32.totalorder %s35, 0
      %p97 = por %p95, %p96
      %p98 = scmp.ne.s32.totalorder %s90, %s92
      %p99 = scmp.eq.s32.totalorder %s40, 1
      %p100 = por %p98, %p99
      %p101 = scmp.ne.s32.totalorder %s92, %s93
      %p102 = scmp.eq.s32.totalorder %s40, 0
      %p103 = por %p101, %p102
      %p104 = scmp.ne.s32.totalorder %s92, %s93
      %p105 = scmp.eq.s32.totalorder %s41, 1
      %p106 = por %p104, %p105
      %p108 = scmp.ne.s32.totalorder %s93, %s107
      %p109 = scmp.eq.s32.totalorder %s41, 0
      %p110 = por %p108, %p109
      %s112 = sadd.s32 %s111, 1
      %p115 = scmp.eq.s32.totalorder %s35, 1
      %p116 = scmp.ne.s32.totalorder %s111, %s113
      %p117 = scmp.eq.s32.totalorder %s35, 0
      %p118 = por %p116, %p117
      %p119 = scmp.ne.s32.totalorder %s111, %s113
      %p120 = scmp.eq.s32.totalorder %s40, 1
      %p121 = por %p119, %p120
      %p122 = scmp.ne.s32.totalorder %s113, %s114
      %p123 = scmp.eq.s32.totalorder %s40, 0
      %p124 = por %p122, %p123
      %p125 = scmp.ne.s32.totalorder %s113, %s114
      %p126 = scmp.eq.s32.totalorder %s41, 1
      %p127 = por %p125, %p126
      %p129 = scmp.ne.s32.totalorder %s114, %s128
      %p130 = scmp.eq.s32.totalorder %s41, 0
      %p131 = por %p129, %p130
      %s133 = sadd.s32 %s132, 1
      %p136 = scmp.eq.s32.totalorder %s35, 1
      %p137 = scmp.ne.s32.totalorder %s132, %s134
      %p138 = scmp.eq.s32.totalorder %s35, 0
      %p139 = por %p137, %p138
      %p140 = scmp.ne.s32.totalorder %s132, %s134
      %p141 = scmp.eq.s32.totalorder %s40, 1
      %p142 = por %p140, %p141
      %p143 = scmp.ne.s32.totalorder %s134, %s135
      %p144 = scmp.eq.s32.totalorder %s40, 0
      %p145 = por %p143, %p144
      %p146 = scmp.ne.s32.totalorder %s134, %s135
      %p147 = scmp.eq.s32.totalorder %s41, 1
      %p148 = por %p146, %p147
      %p150 = scmp.ne.s32.totalorder %s135, %s149
      %p151 = scmp.eq.s32.totalorder %s41, 0
      %p152 = por %p150, %p151
      %s154 = sadd.s32 %s153, 1
      %p157 = scmp.eq.s32.totalorder %s35, 1
      %p158 = scmp.ne.s32.totalorder %s153, %s155
      %p159 = scmp.eq.s32.totalorder %s35, 0
      %p160 = por %p158, %p159
      %p161 = scmp.ne.s32.totalorder %s153, %s155
      %p162 = scmp.eq.s32.totalorder %s40, 1
      %p163 = por %p161, %p162
      %p164 = scmp.ne.s32.totalorder %s155, %s156
      %p165 = scmp.eq.s32.totalorder %s40, 0
      %p166 = por %p164, %p165
      %p167 = scmp.ne.s32.totalorder %s155, %s156
      %p168 = scmp.eq.s32.totalorder %s41, 1
      %p169 = por %p167, %p168
      %p171 = scmp.ne.s32.totalorder %s156, %s170
      %p172 = scmp.eq.s32.totalorder %s41, 0
      %p173 = por %p171, %p172
      %s175 = sadd.s32 %s174, 1
      %p178 = scmp.eq.s32.totalorder %s35, 1
      %p179 = scmp.ne.s32.totalorder %s174, %s176
      %p180 = scmp.eq.s32.totalorder %s35, 0
      %p181 = por %p179, %p180
      %p182 = scmp.ne.s32.totalorder %s174, %s176
      %p183 = scmp.eq.s32.totalorder %s40, 1
      %p184 = por %p182, %p183
      %p185 = scmp.ne.s32.totalorder %s176, %s177
      %p186 = scmp.eq.s32.totalorder %s40, 0
      %p187 = por %p185, %p186
      %p188 = scmp.ne.s32.totalorder %s176, %s177
      %p189 = scmp.eq.s32.totalorder %s41, 1
      %p190 = por %p188, %p189
      %p192 = scmp.ne.s32.totalorder %s177, %s191
      %p193 = scmp.eq.s32.totalorder %s41, 0
      %p194 = por %p192, %p193
      %s196 = sadd.s32 %s195, 1
      %p199 = scmp.eq.s32.totalorder %s35, 1
      %p200 = scmp.ne.s32.totalorder %s195, %s197
      %p201 = scmp.eq.s32.totalorder %s35, 0
      %p202 = por %p200, %p201
      %p203 = scmp.ne.s32.totalorder %s195, %s197
      %p204 = scmp.eq.s32.totalorder %s40, 1
      %p205 = por %p203, %p204
      %p206 = scmp.ne.s32.totalorder %s197, %s198
      %p207 = scmp.eq.s32.totalorder %s40, 0
      %p208 = por %p206, %p207
      %p209 = scmp.ne.s32.totalorder %s197, %s198
      %p210 = scmp.eq.s32.totalorder %s41, 1
      %p211 = por %p209, %p210
      %p213 = scmp.ne.s32.totalorder %s198, %s212
      %p214 = scmp.eq.s32.totalorder %s41, 0
      %p215 = por %p213, %p214
      %s217 = sadd.s32 %s216, 1
      %p220 = scmp.eq.s32.totalorder %s35, 1
      %p221 = scmp.ne.s32.totalorder %s216, %s218
      %p222 = scmp.eq.s32.totalorder %s35, 0
      %p223 = por %p221, %p222
      %p224 = scmp.ne.s32.totalorder %s216, %s218
      %p225 = scmp.eq.s32.totalorder %s40, 1
      %p226 = por %p224, %p225
      %p227 = scmp.ne.s32.totalorder %s218, %s219
      %p228 = scmp.eq.s32.totalorder %s40, 0
      %p229 = por %p227, %p228
      %p230 = scmp.ne.s32.totalorder %s218, %s219
      %p231 = scmp.eq.s32.totalorder %s41, 1
      %p232 = por %p230, %p231
      %p234 = scmp.ne.s32.totalorder %s219, %s233
      %p235 = scmp.eq.s32.totalorder %s41, 0
      %p236 = por %p234, %p235
      %s238 = sadd.s32 %s237, 1
      %p241 = scmp.eq.s32.totalorder %s35, 1
      %p242 = scmp.ne.s32.totalorder %s237, %s239
      %p243 = scmp.eq.s32.totalorder %s35, 0
      %p244 = por %p242, %p243
      %p245 = scmp.ne.s32.totalorder %s237, %s239
      %p246 = scmp.eq.s32.totalorder %s40, 1
      %p247 = por %p245, %p246
      %p248 = scmp.ne.s32.totalorder %s239, %s240
      %p249 = scmp.eq.s32.totalorder %s40, 0
      %p250 = por %p248, %p249
      %p251 = scmp.ne.s32.totalorder %s239, %s240
      %p252 = scmp.eq.s32.totalorder %s41, 1
      %p253 = por %p251, %p252
      %p255 = scmp.ne.s32.totalorder %s240, %s254
      %p256 = scmp.eq.s32.totalorder %s41, 0
      %p257 = por %p255, %p256
      %s259 = sadd.s32 %s258, 1
      %p262 = scmp.eq.s32.totalorder %s35, 1
      %p263 = scmp.ne.s32.totalorder %s258, %s260
      %p264 = scmp.eq.s32.totalorder %s35, 0
      %p265 = por %p263, %p264
      %p266 = scmp.ne.s32.totalorder %s258, %s260
      %p267 = scmp.eq.s32.totalorder %s40, 1
      %p268 = por %p266, %p267
      %p269 = scmp.ne.s32.totalorder %s260, %s261
      %p270 = scmp.eq.s32.totalorder %s40, 0
      %p271 = por %p269, %p270
      %p272 = scmp.ne.s32.totalorder %s260, %s261
      %p273 = scmp.eq.s32.totalorder %s41, 1
      %p274 = por %p272, %p273
      %p276 = scmp.ne.s32.totalorder %s261, %s275
      %p277 = scmp.eq.s32.totalorder %s41, 0
      %p278 = por %p276, %p277
      %s280 = sadd.s32 %s279, 1
      %p283 = scmp.eq.s32.totalorder %s35, 1
      %p284 = scmp.ne.s32.totalorder %s279, %s281
      %p285 = scmp.eq.s32.totalorder %s35, 0
      %p286 = por %p284, %p285
      %p287 = scmp.ne.s32.totalorder %s279, %s281
      %p288 = scmp.eq.s32.totalorder %s40, 1
      %p289 = por %p287, %p288
      %p290 = scmp.ne.s32.totalorder %s281, %s282
      %p291 = scmp.eq.s32.totalorder %s40, 0
      %p292 = por %p290, %p291
      %p293 = scmp.ne.s32.totalorder %s281, %s282
      %p294 = scmp.eq.s32.totalorder %s41, 1
      %p295 = por %p293, %p294
      %p297 = scmp.ne.s32.totalorder %s282, %s296
      %p298 = scmp.eq.s32.totalorder %s41, 0
      %p299 = por %p297, %p298
      %s301 = sadd.s32 %s300, 1
      %p304 = scmp.eq.s32.totalorder %s35, 1
      %p305 = scmp.ne.s32.totalorder %s300, %s302
      %p306 = scmp.eq.s32.totalorder %s35, 0
      %p307 = por %p305, %p306
      %p308 = scmp.ne.s32.totalorder %s300, %s302
      %p309 = scmp.eq.s32.totalorder %s40, 1
      %p310 = por %p308, %p309
      %p311 = scmp.ne.s32.totalorder %s302, %s303
      %p312 = scmp.eq.s32.totalorder %s40, 0
      %p313 = por %p311, %p312
      %p314 = scmp.ne.s32.totalorder %s302, %s303
      %p315 = scmp.eq.s32.totalorder %s41, 1
      %p316 = por %p314, %p315
      %p318 = scmp.ne.s32.totalorder %s303, %s317
      %p319 = scmp.eq.s32.totalorder %s41, 0
      %p320 = por %p318, %p319
      %s322 = sadd.s32 %s321, 1
      %p325 = scmp.eq.s32.totalorder %s35, 1
      %p326 = scmp.ne.s32.totalorder %s321, %s323
      %p327 = scmp.eq.s32.totalorder %s35, 0
      %p328 = por %p326, %p327
      %p329 = scmp.ne.s32.totalorder %s321, %s323
      %p330 = scmp.eq.s32.totalorder %s40, 1
      %p331 = por %p329, %p330
      %p332 = scmp.ne.s32.totalorder %s323, %s324
      %p333 = scmp.eq.s32.totalorder %s40, 0
      %p334 = por %p332, %p333
      %p335 = scmp.ne.s32.totalorder %s323, %s324
      %p336 = scmp.eq.s32.totalorder %s41, 1
      %p337 = por %p335, %p336
      %p339 = scmp.ne.s32.totalorder %s324, %s338
      %p340 = scmp.eq.s32.totalorder %s41, 0
      %p341 = por %p339, %p340
      %s343 = sadd.s32 %s342, 1
      %p346 = scmp.eq.s32.totalorder %s35, 1
      %p347 = scmp.ne.s32.totalorder %s342, %s344
      %p348 = scmp.eq.s32.totalorder %s35, 0
      %p349 = por %p347, %p348
      %p350 = scmp.ne.s32.totalorder %s342, %s344
      %p351 = scmp.eq.s32.totalorder %s40, 1
      %p352 = por %p350, %p351
      %p353 = scmp.ne.s32.totalorder %s344, %s345
      %p354 = scmp.eq.s32.totalorder %s40, 0
      %p355 = por %p353, %p354
      %p356 = scmp.ne.s32.totalorder %s344, %s345
      %p357 = scmp.eq.s32.totalorder %s41, 1
      %p358 = por %p356, %p357
      %p360 = scmp.ne.s32.totalorder %s345, %s359
      %p361 = scmp.eq.s32.totalorder %s41, 0
      %p362 = por %p360, %p361
      %s364 = sadd.s32 %s363, 1
      %p367 = scmp.eq.s32.totalorder %s35, 1
      %p368 = scmp.ne.s32.totalorder %s363, %s365
      %p369 = scmp.eq.s32.totalorder %s35, 0
      %p370 = por %p368, %p369
      %p371 = scmp.ne.s32.totalorder %s363, %s365
      %p372 = scmp.eq.s32.totalorder %s40, 1
      %p373 = por %p371, %p372
      %p374 = scmp.ne.s32.totalorder %s365, %s366
      %p375 = scmp.eq.s32.totalorder %s40, 0
      %p376 = por %p374, %p375
      %p377 = scmp.ne.s32.totalorder %s365, %s366
      %p378 = scmp.eq.s32.totalorder %s41, 1
      %p379 = por %p377, %p378
      %p381 = scmp.ne.s32.totalorder %s366, %s380
      %p382 = scmp.eq.s32.totalorder %s41, 0
      %p383 = por %p381, %p382
      %s385 = sadd.s32 %s384, 1
      %p388 = scmp.eq.s32.totalorder %s35, 1
      %p389 = scmp.ne.s32.totalorder %s384, %s386
      %p390 = scmp.eq.s32.totalorder %s35, 0
      %p391 = por %p389, %p390
      %p392 = scmp.ne.s32.totalorder %s384, %s386
      %p393 = scmp.eq.s32.totalorder %s40, 1
      %p394 = por %p392, %p393
      %p395 = scmp.ne.s32.totalorder %s386, %s387
      %p396 = scmp.eq.s32.totalorder %s40, 0
      %p397 = por %p395, %p396
      %p398 = scmp.ne.s32.totalorder %s386, %s387
      %p399 = scmp.eq.s32.totalorder %s41, 1
      %p400 = por %p398, %p399
      %p402 = scmp.ne.s32.totalorder %s387, %s401
      %p403 = scmp.eq.s32.totalorder %s41, 0
      %p404 = por %p402, %p403
      %s406 = sadd.s32 %s405, 1
      %p409 = scmp.eq.s32.totalorder %s35, 1
      %p410 = scmp.ne.s32.totalorder %s405, %s407
      %p411 = scmp.eq.s32.totalorder %s35, 0
      %p412 = por %p410, %p411
      %p413 = scmp.ne.s32.totalorder %s405, %s407
      %p414 = scmp.eq.s32.totalorder %s40, 1
      %p415 = por %p413, %p414
      %p416 = scmp.ne.s32.totalorder %s407, %s408
      %p417 = scmp.eq.s32.totalorder %s40, 0
      %p418 = por %p416, %p417
      %p419 = scmp.ne.s32.totalorder %s407, %s408
      %p420 = scmp.eq.s32.totalorder %s41, 1
      %p421 = por %p419, %p420
      %p423 = scmp.ne.s32.totalorder %s408, %s422
      %p424 = scmp.eq.s32.totalorder %s41, 0
      %p425 = por %p423, %p424
      %s427 = sadd.s32 %s426, 1
      %p430 = scmp.eq.s32.totalorder %s35, 1
      %p431 = scmp.ne.s32.totalorder %s426, %s428
      %p432 = scmp.eq.s32.totalorder %s35, 0
      %p433 = por %p431, %p432
      %p434 = scmp.ne.s32.totalorder %s426, %s428
      %p435 = scmp.eq.s32.totalorder %s40, 1
      %p436 = por %p434, %p435
      %p437 = scmp.ne.s32.totalorder %s428, %s429
      %p438 = scmp.eq.s32.totalorder %s40, 0
      %p439 = por %p437, %p438
      %p440 = scmp.ne.s32.totalorder %s428, %s429
      %p441 = scmp.eq.s32.totalorder %s41, 1
      %p442 = por %p440, %p441
      %p444 = scmp.ne.s32.totalorder %s429, %s443
      %p445 = scmp.eq.s32.totalorder %s41, 0
      %p446 = por %p444, %p445
      %s448 = sadd.s32 %s447, 1
      %p451 = scmp.eq.s32.totalorder %s35, 1
      %p452 = scmp.ne.s32.totalorder %s447, %s449
      %p453 = scmp.eq.s32.totalorder %s35, 0
      %p454 = por %p452, %p453
      %p455 = scmp.ne.s32.totalorder %s447, %s449
      %p456 = scmp.eq.s32.totalorder %s40, 1
      %p457 = por %p455, %p456
      %p458 = scmp.ne.s32.totalorder %s449, %s450
      %p459 = scmp.eq.s32.totalorder %s40, 0
      %p460 = por %p458, %p459
      %p461 = scmp.ne.s32.totalorder %s449, %s450
      %p462 = scmp.eq.s32.totalorder %s41, 1
      %p463 = por %p461, %p462
      %p465 = scmp.ne.s32.totalorder %s450, %s464
      %p466 = scmp.eq.s32.totalorder %s41, 0
      %p467 = por %p465, %p466
      %s469 = sadd.s32 %s468, 1
      %p472 = scmp.eq.s32.totalorder %s35, 1
      %p473 = scmp.ne.s32.totalorder %s468, %s470
      %p474 = scmp.eq.s32.totalorder %s35, 0
      %p475 = por %p473, %p474
      %p476 = scmp.ne.s32.totalorder %s468, %s470
      %p477 = scmp.eq.s32.totalorder %s40, 1
      %p478 = por %p476, %p477
      %p479 = scmp.ne.s32.totalorder %s470, %s471
      %p480 = scmp.eq.s32.totalorder %s40, 0
      %p481 = por %p479, %p480
      %p482 = scmp.ne.s32.totalorder %s470, %s471
      %p483 = scmp.eq.s32.totalorder %s41, 1
      %p484 = por %p482, %p483
      %p486 = scmp.ne.s32.totalorder %s471, %s485
      %p487 = scmp.eq.s32.totalorder %s41, 0
      %p488 = por %p486, %p487
      %s490 = sadd.s32 %s489, 1
      %p493 = scmp.eq.s32.totalorder %s35, 1
      %p494 = scmp.ne.s32.totalorder %s489, %s491
      %p495 = scmp.eq.s32.totalorder %s35, 0
      %p496 = por %p494, %p495
      %p497 = scmp.ne.s32.totalorder %s489, %s491
      %p498 = scmp.eq.s32.totalorder %s40, 1
      %p499 = por %p497, %p498
      %p500 = scmp.ne.s32.totalorder %s491, %s492
      %p501 = scmp.eq.s32.totalorder %s40, 0
      %p502 = por %p500, %p501
      %p503 = scmp.ne.s32.totalorder %s491, %s492
      %p504 = scmp.eq.s32.totalorder %s41, 1
      %p505 = por %p503, %p504
      %p507 = scmp.ne.s32.totalorder %s492, %s506
      %p508 = scmp.eq.s32.totalorder %s41, 0
      %p509 = por %p507, %p508
      %s510 = ssub.s32 %s35, %s42
      %p511 = scmp.eq.s32.totalorder %s510, 0
      %s513 = sadd.s32 %s512, 1
      %s514 = scalar_select %p511, %s512, %s513
      %p517 = pneg %p511
      %p518 = scmp.eq.s32.totalorder %s35, 1
      %p519 = por %p517, %p518
      %p520 = scmp.ne.s32.totalorder %s512, %s515
      %p521 = scmp.eq.s32.totalorder %s35, 0
      %p522 = por %p520, %p521
      %p523 = scmp.ne.s32.totalorder %s512, %s515
      %p524 = scmp.eq.s32.totalorder %s40, 1
      %p525 = por %p523, %p524
      %p526 = scmp.ne.s32.totalorder %s515, %s516
      %p527 = scmp.eq.s32.totalorder %s40, 0
      %p528 = por %p526, %p527
      %p529 = scmp.ne.s32.totalorder %s515, %s516
      %p530 = scmp.eq.s32.totalorder %s41, 1
      %p531 = por %p529, %p530
      %p533 = scmp.ne.s32.totalorder %s516, %s532
      %p534 = scmp.eq.s32.totalorder %s41, 0
      %p535 = por %p533, %p534
      %p536 = scmp.le.s32.totalorder 1, %s35
      %p537 = scmp.lt.s32.totalorder %s35, 3
      %p538 = pnand %p536, %p537
      %p539 = pneg %p538
      // Predicated region
      $region9: #{_lambda_.1} parent=5 // pred_check
        _
      $region10: #{_lambda_.1} parent=5 // pred_check_branch
        %541 = sbr.rel (%p538) target = $region12
      $region11: #{_lambda_.1} parent=5 // pred_region
        %s542 = ssub.s32 %s35, 1
        // Predicated region
        $region13: #{_lambda_.1} parent=11 // pred_check
          %p543 = pneg %p82
        $region14: #{_lambda_.1} parent=11 // pred_check_branch
          %545 = sbr.rel (%p543) target = $region16
        $region15: #{_lambda_.1} parent=11 // pred_region
          _
        $region16: #{_lambda_.1} parent=11 // pred_fallthru
          _
        // Predicated region
        $region17: #{_lambda_.1} parent=11 // pred_check
          %p546 = pneg %p103
        $region18: #{_lambda_.1} parent=11 // pred_check_branch
          %548 = sbr.rel (%p546) target = $region20
        $region19: #{_lambda_.1} parent=11 // pred_region
          %s550 = ssub.s32 16, 16
          %551 = vsyncadd [#allocation9], %s550
          %s553 = sshll.u32 [#allocation8], 4
          %s554 = int_to_ptr.vmem [resolvable:$true] %s553
          %556 = dma.hbm_to_vmem [thread:$0]  %s2, 16, %s554, [#allocation9]
        $region20: #{_lambda_.1} parent=11 // pred_fallthru
          _
        // Predicated region
        $region21: #{_lambda_.1} parent=11 // pred_check
          %p557 = pneg %p124
        $region22: #{_lambda_.1} parent=11 // pred_check_branch
          %559 = sbr.rel (%p557) target = $region24
        $region23: #{_lambda_.1} parent=11 // pred_region
          %s561 = ssub.s32 16, 16
          %562 = vsyncadd [#allocation12], %s561
          %s564 = sshll.u32 [#allocation11], 4
          %s565 = int_to_ptr.vmem [resolvable:$true] %s564
          %567 = dma.hbm_to_vmem [thread:$0]  %s3, 16, %s565, [#allocation12]
        $region24: #{_lambda_.1} parent=11 // pred_fallthru
          _
        // Predicated region
        $region25: #{_lambda_.1} parent=11 // pred_check
          %p568 = pneg %p145
        $region26: #{_lambda_.1} parent=11 // pred_check_branch
          %570 = sbr.rel (%p568) target = $region28
        $region27: #{_lambda_.1} parent=11 // pred_region
          %s572 = ssub.s32 12288, 12288
          %573 = vsyncadd [#allocation12], %s572
          %s574 = sshll.u32 [#allocation13], 4
          %s575 = int_to_ptr.vmem [resolvable:$true] %s574
          %580 = dma.hbm_to_vmem [thread:$0]  %s4, 12288, %s575, [#allocation12], 256, 256, 16
        $region28: #{_lambda_.1} parent=11 // pred_fallthru
          _
        // Predicated region
        $region29: #{_lambda_.1} parent=11 // pred_check
          %p581 = pneg %p166
        $region30: #{_lambda_.1} parent=11 // pred_check_branch
          %583 = sbr.rel (%p581) target = $region32
        $region31: #{_lambda_.1} parent=11 // pred_region
          _
        $region32: #{_lambda_.1} parent=11 // pred_fallthru
          _
        // Predicated region
        $region33: #{_lambda_.1} parent=11 // pred_check
          %p584 = pneg %p187
        $region34: #{_lambda_.1} parent=11 // pred_check_branch
          %586 = sbr.rel (%p584) target = $region36
        $region35: #{_lambda_.1} parent=11 // pred_region
          _
        $region36: #{_lambda_.1} parent=11 // pred_fallthru
          _
        // Predicated region
        $region37: #{_lambda_.1} parent=11 // pred_check
          %p587 = pneg %p208
        $region38: #{_lambda_.1} parent=11 // pred_check_branch
          %589 = sbr.rel (%p587) target = $region40
        $region39: #{_lambda_.1} parent=11 // pred_region
          %s591 = ssub.s32 12288, 12288
          %592 = vsyncadd [#allocation15], %s591
          %s593 = sshll.u32 [#allocation14], 4
          %s594 = int_to_ptr.vmem [resolvable:$true] %s593
          %599 = dma.hbm_to_vmem [thread:$0]  %s7, 12288, %s594, [#allocation15], 256, 256, 16
        $region40: #{_lambda_.1} parent=11 // pred_fallthru
          _
        // Predicated region
        $region41: #{_lambda_.1} parent=11 // pred_check
          %p600 = pneg %p229
        $region42: #{_lambda_.1} parent=11 // pred_check_branch
          %602 = sbr.rel (%p600) target = $region44
        $region43: #{_lambda_.1} parent=11 // pred_region
          _
        $region44: #{_lambda_.1} parent=11 // pred_fallthru
          _
        // Predicated region
        $region45: #{_lambda_.1} parent=11 // pred_check
          %p603 = pneg %p250
        $region46: #{_lambda_.1} parent=11 // pred_check_branch
          %605 = sbr.rel (%p603) target = $region48
        $region47: #{_lambda_.1} parent=11 // pred_region
          _
        $region48: #{_lambda_.1} parent=11 // pred_fallthru
          _
        // Predicated region
        $region49: #{_lambda_.1} parent=11 // pred_check
          %p606 = pneg %p271
        $region50: #{_lambda_.1} parent=11 // pred_check_branch
          %608 = sbr.rel (%p606) target = $region52
        $region51: #{_lambda_.1} parent=11 // pred_region
          %s610 = ssub.s32 24576, 24576
          %611 = vsyncadd [#allocation15], %s610
          %s612 = sshll.u32 [#allocation16], 4
          %s613 = int_to_ptr.vmem [resolvable:$true] %s612
          %618 = dma.hbm_to_vmem [thread:$0]  %s10, 24576, %s613, [#allocation15], 256, 256, 16
        $region52: #{_lambda_.1} parent=11 // pred_fallthru
          _
        // Predicated region
        $region53: #{_lambda_.1} parent=11 // pred_check
          %p619 = pneg %p292
        $region54: #{_lambda_.1} parent=11 // pred_check_branch
          %621 = sbr.rel (%p619) target = $region56
        $region55: #{_lambda_.1} parent=11 // pred_region
          _
        $region56: #{_lambda_.1} parent=11 // pred_fallthru
          _
        // Predicated region
        $region57: #{_lambda_.1} parent=11 // pred_check
          %p622 = pneg %p313
        $region58: #{_lambda_.1} parent=11 // pred_check_branch
          %624 = sbr.rel (%p622) target = $region60
        $region59: #{_lambda_.1} parent=11 // pred_region
          _
        $region60: #{_lambda_.1} parent=11 // pred_fallthru
          _
        // Predicated region
        $region61: #{_lambda_.1} parent=11 // pred_check
          %p625 = pneg %p334
        $region62: #{_lambda_.1} parent=11 // pred_check_branch
          %627 = sbr.rel (%p625) target = $region64
        $region63: #{_lambda_.1} parent=11 // pred_region
          %s629 = ssub.s32 4096, 4096
          %630 = vsyncadd [#allocation18], %s629
          %s631 = sshll.u32 [#allocation17], 4
          %s632 = int_to_ptr.vmem [resolvable:$true] %s631
          %637 = dma.hbm_to_vmem [thread:$0]  %s13, 4096, %s632, [#allocation18], 256, 256, 16
        $region64: #{_lambda_.1} parent=11 // pred_fallthru
          _
        // Predicated region
        $region65: #{_lambda_.1} parent=11 // pred_check
          %p638 = pneg %p355
        $region66: #{_lambda_.1} parent=11 // pred_check_branch
          %640 = sbr.rel (%p638) target = $region68
        $region67: #{_lambda_.1} parent=11 // pred_region
          _
        $region68: #{_lambda_.1} parent=11 // pred_fallthru
          _
        // Predicated region
        $region69: #{_lambda_.1} parent=11 // pred_check
          %p641 = pneg %p376
        $region70: #{_lambda_.1} parent=11 // pred_check_branch
          %643 = sbr.rel (%p641) target = $region72
        $region71: #{_lambda_.1} parent=11 // pred_region
          _
        $region72: #{_lambda_.1} parent=11 // pred_fallthru
          _
        // Predicated region
        $region73: #{_lambda_.1} parent=11 // pred_check
          %p644 = pneg %p397
        $region74: #{_lambda_.1} parent=11 // pred_check_branch
          %646 = sbr.rel (%p644) target = $region76
        $region75: #{_lambda_.1} parent=11 // pred_region
          _
        $region76: #{_lambda_.1} parent=11 // pred_fallthru
          _
        // Predicated region
        $region77: #{_lambda_.1} parent=11 // pred_check
          %p647 = pneg %p418
        $region78: #{_lambda_.1} parent=11 // pred_check_branch
          %649 = sbr.rel (%p647) target = $region80
        $region79: #{_lambda_.1} parent=11 // pred_region
          _
        $region80: #{_lambda_.1} parent=11 // pred_fallthru
          _
        // Predicated region
        $region81: #{_lambda_.1} parent=11 // pred_check
          %p650 = pneg %p439
        $region82: #{_lambda_.1} parent=11 // pred_check_branch
          %652 = sbr.rel (%p650) target = $region84
        $region83: #{_lambda_.1} parent=11 // pred_region
          _
        $region84: #{_lambda_.1} parent=11 // pred_fallthru
          _
        // Predicated region
        $region85: #{_lambda_.1} parent=11 // pred_check
          %p653 = pneg %p460
        $region86: #{_lambda_.1} parent=11 // pred_check_branch
          %655 = sbr.rel (%p653) target = $region88
        $region87: #{_lambda_.1} parent=11 // pred_region
          _
        $region88: #{_lambda_.1} parent=11 // pred_fallthru
          _
        // Predicated region
        $region89: #{_lambda_.1} parent=11 // pred_check
          %p656 = pneg %p481
        $region90: #{_lambda_.1} parent=11 // pred_check_branch
          %658 = sbr.rel (%p656) target = $region92
        $region91: #{_lambda_.1} parent=11 // pred_region
          _
        $region92: #{_lambda_.1} parent=11 // pred_fallthru
          _
        // Predicated region
        $region93: #{_lambda_.1} parent=11 // pred_check
          %p659 = pneg %p502
        $region94: #{_lambda_.1} parent=11 // pred_check_branch
          %661 = sbr.rel (%p659) target = $region96
        $region95: #{_lambda_.1} parent=11 // pred_region
          _
        $region96: #{_lambda_.1} parent=11 // pred_fallthru
          _
      $region12: #{_lambda_.1} parent=5 // pred_fallthru
        _
      %p662 = scmp.lt.s32.totalorder %s35, 2
      // Predicated region
      $region97: #{_lambda_.1} parent=5 // pred_check
        %p663 = pneg %p662
      $region98: #{_lambda_.1} parent=5 // pred_check_branch
        %665 = sbr.rel (%p663) target = $region100
      $region99: #{_lambda_.1} parent=5 // pred_region
        // Predicated region
        $region101: #{_lambda_.1} parent=99 // pred_check
          %p666 = pneg %p55
        $region102: #{_lambda_.1} parent=99 // pred_check_branch
          %668 = sbr.rel (%p666) target = $region104
        $region103: #{_lambda_.1} parent=99 // pred_region
          %s669 = smul.u32 8, %s35
          %p670 = scmp.lt.s32.totalorder %s669, 15
          %s671 = scalar_select %p670, %s669, 15
          %s672 = smul.addr %s671, 8
          %s673 = scalar_lea.vmem %s0, %s672
          %s674 = smul.u32 8, %s35
        $region104: #{_lambda_.1} parent=99 // pred_fallthru
          _
      $region100: #{_lambda_.1} parent=5 // pred_fallthru
        _
      %p675 = scmp.le.s32.totalorder 1, %s35
      %p676 = scmp.lt.s32.totalorder %s35, 3
      %p677 = pnand %p675, %p676
      %p678 = pneg %p677
      // Predicated region
      $region105: #{_lambda_.1} parent=5 // pred_check
        _
      $region106: #{_lambda_.1} parent=5 // pred_check_branch
        %680 = sbr.rel (%p677) target = $region108
      $region107: #{_lambda_.1} parent=5 // pred_region
        %s681 = ssub.s32 %s35, 1
        // Predicated region
        $region109: #{_lambda_.1} parent=107 // pred_check
          %p682 = pneg %p103
        $region110: #{_lambda_.1} parent=107 // pred_check_branch
          %684 = sbr.rel (%p682) target = $region112
        $region111: #{_lambda_.1} parent=107 // pred_region
          %685 = dma.done [#allocation9], 16
        $region112: #{_lambda_.1} parent=107 // pred_fallthru
          _
        // Predicated region
        $region113: #{_lambda_.1} parent=107 // pred_check
          %p686 = pneg %p124
        $region114: #{_lambda_.1} parent=107 // pred_check_branch
          %688 = sbr.rel (%p686) target = $region116
        $region115: #{_lambda_.1} parent=107 // pred_region
          %689 = dma.done [#allocation12], 16
        $region116: #{_lambda_.1} parent=107 // pred_fallthru
          _
        // Predicated region
        $region117: #{_lambda_.1} parent=107 // pred_check
          %p690 = pneg %p145
        $region118: #{_lambda_.1} parent=107 // pred_check_branch
          %692 = sbr.rel (%p690) target = $region120
        $region119: #{_lambda_.1} parent=107 // pred_region
          %693 = dma.done [#allocation12], 12288
        $region120: #{_lambda_.1} parent=107 // pred_fallthru
          _
        // Predicated region
        $region121: #{_lambda_.1} parent=107 // pred_check
          %p694 = pneg %p208
        $region122: #{_lambda_.1} parent=107 // pred_check_branch
          %696 = sbr.rel (%p694) target = $region124
        $region123: #{_lambda_.1} parent=107 // pred_region
          %697 = dma.done [#allocation15], 12288
        $region124: #{_lambda_.1} parent=107 // pred_fallthru
          _
        // Predicated region
        $region125: #{_lambda_.1} parent=107 // pred_check
          %p698 = pneg %p271
        $region126: #{_lambda_.1} parent=107 // pred_check_branch
          %700 = sbr.rel (%p698) target = $region128
        $region127: #{_lambda_.1} parent=107 // pred_region
          %701 = dma.done [#allocation15], 24576
        $region128: #{_lambda_.1} parent=107 // pred_fallthru
          _
        // Predicated region
        $region129: #{_lambda_.1} parent=107 // pred_check
          %p702 = pneg %p334
        $region130: #{_lambda_.1} parent=107 // pred_check_branch
          %704 = sbr.rel (%p702) target = $region132
        $region131: #{_lambda_.1} parent=107 // pred_region
          %705 = dma.done [#allocation18], 4096
        $region132: #{_lambda_.1} parent=107 // pred_fallthru
          _
        %s706 = smul.u32 8, %s40
        %p707 = scmp.lt.s32.totalorder %s706, 15
        %s708 = scalar_select %p707, %s706, 15
        %s709 = smul.addr %s708, 8
        %s710 = scalar_lea.vmem %s0, %s709
        %p711 = pneg %p61
        %p712 = pneg %p58
        %p713 = pneg %p82
        %p714 = pneg %p79
        %p715 = pneg %p103
        %p716 = pneg %p100
        %p717 = pneg %p124
        %p718 = pneg %p121
        %p719 = pneg %p145
        %p720 = pneg %p142
        %p721 = pneg %p166
        %p722 = pneg %p163
        %p723 = pneg %p187
        %p724 = pneg %p184
        %p725 = pneg %p208
        %p726 = pneg %p205
        %p727 = pneg %p229
        %p728 = pneg %p226
        %p729 = pneg %p250
        %p730 = pneg %p247
        %p731 = pneg %p271
        %p732 = pneg %p268
        %p733 = pneg %p292
        %p734 = pneg %p289
        %p735 = pneg %p313
        %p736 = pneg %p310
        %p737 = pneg %p334
        %p738 = pneg %p331
        %p739 = pneg %p355
        %p740 = pneg %p352
        %p741 = pneg %p376
        %p742 = pneg %p373
        %p743 = pneg %p397
        %p744 = pneg %p394
        %p745 = pneg %p418
        %p746 = pneg %p415
        %p747 = pneg %p439
        %p748 = pneg %p436
        %p749 = pneg %p460
        %p750 = pneg %p457
        %p751 = pneg %p481
        %p752 = pneg %p478
        %p753 = pneg %p502
        %p754 = pneg %p499
        %p755 = pneg %p528
        %p756 = pneg %p525
        %s757 = sand.u32 %s515, 1
        %s758 = scalar_lea.sflag [#allocation10], %s757
        %s759 = sand.u32 %s515, 1
        %s760 = smul.addr %s759, 8
        %s761 = scalar_lea.vmem [#allocation19], %s760
        %s762 = smul.u32 8, %s40
        %p763 = scmp.lt.s32.totalorder %s762, 15
        %s764 = scalar_select %p763, %s762, 15
        %s765 = smul.addr %s764, 8
        %s766 = scalar_lea.vmem %s0, %s765
        %s767 = smul.u32 8, %s40
        %vm768 = vcmask 195584
        %769 = vst.msk [vmem:[#allocation2] sm:$0xff] %vm768, 0.0
        %770 = vst.msk [vmem:[#allocation2 + $0x8] sm:$0xff] %vm768, 0.0
        %771 = vst.msk [vmem:[#allocation2 + $0x10] sm:$0xff] %vm768, 0.0
        %772 = vst.msk [vmem:[#allocation2 + $0x18] sm:$0xff] %vm768, 0.0
        %773 = vst.msk [vmem:[#allocation2 + $0x20] sm:$0xff] %vm768, 0.0
        %774 = vst.msk [vmem:[#allocation2 + $0x28] sm:$0xff] %vm768, 0.0
        %775 = vst.msk [vmem:[#allocation2 + $0x30] sm:$0xff] %vm768, 0.0
        %776 = vst.msk [vmem:[#allocation2 + $0x38] sm:$0xff] %vm768, 0.0
        %777 = vst.msk [vmem:[#allocation2 + $0x40] sm:$0xff] %vm768, 0.0
        %778 = vst.msk [vmem:[#allocation2 + $0x48] sm:$0xff] %vm768, 0.0
        %779 = vst [vmem:[#allocation3] sm:$0xff] 0.0
        %780 = vst [vmem:[#allocation3 + $0x8] sm:$0xff] 0.0
        %781 = vst [vmem:[#allocation3 + $0x10] sm:$0xff] 0.0
        %782 = vst [vmem:[#allocation3 + $0x18] sm:$0xff] 0.0
        %783 = vst [vmem:[#allocation3 + $0x20] sm:$0xff] 0.0
        %784 = vst [vmem:[#allocation3 + $0x28] sm:$0xff] 0.0
        %785 = vst [vmem:[#allocation3 + $0x30] sm:$0xff] 0.0
        %786 = vst [vmem:[#allocation3 + $0x38] sm:$0xff] 0.0
        %787 = vst [vmem:[#allocation3 + $0x40] sm:$0xff] 0.0
        %788 = vst [vmem:[#allocation3 + $0x48] sm:$0xff] 0.0
        %789 = vst [vmem:[#allocation4] sm:$0xff] 0.0
        %790 = vst [vmem:[#allocation4 + $0x8] sm:$0xff] 0.0
        %791 = vst [vmem:[#allocation4 + $0x10] sm:$0xff] 0.0
        %792 = vst [vmem:[#allocation4 + $0x18] sm:$0xff] 0.0
        %793 = vst [vmem:[#allocation4 + $0x20] sm:$0xff] 0.0
        %794 = vst [vmem:[#allocation4 + $0x28] sm:$0xff] 0.0
        %795 = vst [vmem:[#allocation5] sm:$0xff] 0.0
        %796 = vst [vmem:[#allocation5 + $0x8] sm:$0xff] 0.0
        %797 = vst [vmem:[#allocation5 + $0x10] sm:$0xff] 0.0
        %798 = vst [vmem:[#allocation5 + $0x18] sm:$0xff] 0.0
        %799 = vst [vmem:[#allocation5 + $0x20] sm:$0xff] 0.0
        %800 = vst [vmem:[#allocation5 + $0x28] sm:$0xff] 0.0
        %801 = vst [vmem:[#allocation5 + $0x30] sm:$0xff] 0.0
        %802 = vst [vmem:[#allocation5 + $0x38] sm:$0xff] 0.0
        %803 = vst [vmem:[#allocation5 + $0x40] sm:$0xff] 0.0
        %804 = vst [vmem:[#allocation5 + $0x48] sm:$0xff] 0.0
        %805 = vst [vmem:[#allocation5 + $0x50] sm:$0xff] 0.0
        %806 = vst [vmem:[#allocation5 + $0x58] sm:$0xff] 0.0
        %v807 = vld [vmem:[%s766] sm:$0xff]
        %808 = vst.msk [vmem:[#allocation2 + $0x1] sm:$0xff] %vm768, %v807
        %s809 = scalar_lea.vmem %s766, 8
        %v810 = vld [vmem:[%s809] sm:$0xff]
        %811 = vst.msk [vmem:[#allocation2 + $0xb] sm:$0xff] %vm768, %v810
        %s812 = scalar_lea.vmem %s766, 16
        %v813 = vld [vmem:[%s812] sm:$0xff]
        %814 = vst.msk [vmem:[#allocation2 + $0x15] sm:$0xff] %vm768, %v813
        %s815 = scalar_lea.vmem %s766, 24
        %v816 = vld [vmem:[%s815] sm:$0xff]
        %817 = vst.msk [vmem:[#allocation2 + $0x1f] sm:$0xff] %vm768, %v816
        %s818 = scalar_lea.vmem %s766, 32
        %v819 = vld [vmem:[%s818] sm:$0xff]
        %820 = vst.msk [vmem:[#allocation2 + $0x29] sm:$0xff] %vm768, %v819
        %s821 = scalar_lea.vmem %s766, 40
        %v822 = vld [vmem:[%s821] sm:$0xff]
        %823 = vst.msk [vmem:[#allocation2 + $0x33] sm:$0xff] %vm768, %v822
        %s824 = scalar_lea.vmem %s766, 48
        %v825 = vld [vmem:[%s824] sm:$0xff]
        %826 = vst.msk [vmem:[#allocation2 + $0x3d] sm:$0xff] %vm768, %v825
        %s827 = scalar_lea.vmem %s766, 56
        %v828 = vld [vmem:[%s827] sm:$0xff]
        %829 = vst.msk [vmem:[#allocation2 + $0x47] sm:$0xff] %vm768, %v828
        %v830 = vld [vmem:[#allocation2] sm:$0xff]
        %v831 = vld [vmem:[#allocation2 + $0x8] sm:$0xff]
        %v832 = vld [vmem:[#allocation2 + $0x10] sm:$0xff]
        %v833 = vld [vmem:[#allocation2 + $0x18] sm:$0xff]
        %v834 = vld [vmem:[#allocation2 + $0x20] sm:$0xff]
        %v835 = vld [vmem:[#allocation2 + $0x28] sm:$0xff]
        %v836 = vld [vmem:[#allocation2 + $0x30] sm:$0xff]
        %v837 = vld [vmem:[#allocation2 + $0x38] sm:$0xff]
        %v838 = vld [vmem:[#allocation2 + $0x40] sm:$0xff]
        %v839 = vld [vmem:[#allocation2 + $0x48] sm:$0x3f]
        %v840 = vld [vmem:[%s1] sm:$0xff]
        %v841 = vld [vmem:[%s1 + $0x8] sm:$0xff]
        %v842 = vld [vmem:[%s1 + $0x10] sm:$0xff]
        %v843 = vld [vmem:[#allocation2 + $0x1] sm:$0xff]
        %v844 = vld [vmem:[#allocation2 + $0x9] sm:$0xff]
        %v845 = vld [vmem:[#allocation2 + $0x11] sm:$0xff]
        %v846 = vld [vmem:[#allocation2 + $0x19] sm:$0xff]
        %v847 = vld [vmem:[#allocation2 + $0x21] sm:$0xff]
        %v848 = vld [vmem:[#allocation2 + $0x29] sm:$0xff]
        %v849 = vld [vmem:[#allocation2 + $0x31] sm:$0xff]
        %v850 = vld [vmem:[#allocation2 + $0x39] sm:$0xff]
        %v851 = vld [vmem:[#allocation2 + $0x41] sm:$0xff]
        %v852 = vld [vmem:[#allocation2 + $0x49] sm:$0x3f]
        %s853 = scalar_lea.vmem %s1, 24
        %v854 = vld [vmem:[%s853] sm:$0xff]
        %v855 = vld [vmem:[%s853 + $0x8] sm:$0xff]
        %v856 = vld [vmem:[%s853 + $0x10] sm:$0xff]
        %v858 = vsel %vm768, %v843, 0
        %v861 = vsel %vm768, %v844, 0
        %v864 = vsel %vm768, %v845, 0
        %v867 = vsel %vm768, %v846, 0
        %v870 = vsel %vm768, %v847, 0
        %v873 = vsel %vm768, %v848, 0
        %v876 = vsel %vm768, %v849, 0
        %v879 = vsel %vm768, %v850, 0
        %v882 = vsel %vm768, %v851, 0
        %v885 = vsel %vm768, %v852, 0
        %887 = vmatprep.subr.mxu0 0.0
        %888 = vmatpush1.msra.mxu0 %v854
        %889 = vmatprep.subr.mxu0 0.0
        %890 = vmatpush1.msra.mxu0 %v855
        %891 = vmatprep.subr.mxu0 0.0
        %892 = vmatpush1.msra.mxu0 %v856
        %893 = vmatprep.subr.mxu0 0.0
        %894 = vmatpush1.msra.mxu0 0.0
        %895 = vmatprep.subr.mxu0 0.0
        %896 = vmatpush1.msra.mxu0 0.0
        %897 = vmatprep.subr.mxu0 0.0
        %898 = vmatpush1.msra.mxu0 0.0
        %899 = vmatprep.subr.mxu0 0.0
        %900 = vmatpush1.msra.mxu0 0.0
        %901 = vmatprep.subr.mxu0 0.0
        %902 = vmatpush1.msra.mxu0 0.0
        %903 = vmatprep.subr.mxu0 0.0
        %904 = vmatpush1.msra.mxu0 0.0
        %905 = vmatprep.subr.mxu0 0.0
        %906 = vmatpush1.msra.mxu0 0.0
        %907 = vmatprep.subr.mxu0 0.0
        %908 = vmatpush1.msra.mxu0 0.0
        %909 = vmatprep.subr.mxu0 0.0
        %910 = vmatpush1.msra.mxu0 0.0
        %911 = vmatprep.subr.mxu0 0.0
        %912 = vmatpush1.msra.mxu0 0.0
        %913 = vmatprep.subr.mxu0 0.0
        %914 = vmatpush1.msra.mxu0 0.0
        %915 = vmatprep.subr.mxu0 0.0
        %916 = vmatpush1.msra.mxu0 0.0
        %917 = vmatprep.subr.mxu0 0.0
        %918 = vmatpush1.msra.mxu0 0.0
        %919 = vmatprep.subr.mxu0 0.0
        %920 = vmatpush1.msra.mxu0 0.0
        %921 = vmatprep.subr.mxu0 0.0
        %922 = vmatpush1.msra.mxu0 0.0
        %923 = vmatprep.subr.mxu0 0.0
        %924 = vmatpush1.msra.mxu0 0.0
        %925 = vmatprep.subr.mxu0 0.0
        %926 = vmatpush1.msra.mxu0 0.0
        %927 = vmatprep.subr.mxu0 0.0
        %928 = vmatpush1.msra.mxu0 0.0
        %929 = vmatprep.subr.mxu0 0.0
        %930 = vmatpush1.msra.mxu0 0.0
        %931 = vmatprep.subr.mxu0 0.0
        %932 = vmatpush1.msra.mxu0 0.0
        %933 = vmatprep.subr.mxu0 0.0
        %934 = vmatpush1.msra.mxu0 0.0
        %935 = vmatprep.subr.mxu0 0.0
        %936 = vmatpush1.msra.mxu0 0.0
        %937 = vmatprep.subr.mxu0 0.0
        %938 = vmatpush1.msra.mxu0 0.0
        %939 = vmatprep.subr.mxu0 0.0
        %940 = vmatpush1.msra.mxu0 0.0
        %941 = vmatprep.subr.mxu0 0.0
        %942 = vmatpush1.msra.mxu0 0.0
        %943 = vmatprep.subr.mxu0 0.0
        %944 = vmatpush1.msra.mxu0 0.0
        %945 = vmatprep.subr.mxu0 0.0
        %946 = vmatpush1.msra.mxu0 0.0
        %947 = vmatprep.subr.mxu0 0.0
        %948 = vmatpush1.msra.mxu0 0.0
        %949 = vmatprep.subr.mxu0 0.0
        %950 = vmatpush1.msra.mxu0 0.0
        %951 = vmatprep.mubr.f32.mxu0 0.0
        %952 = vmatmul.mubr.f32.gmra.mrb[0].mxu0 %v858
        %v953 = vpop.f32.mrb[0].mxu0
        %v954 = vadd.f32 0.0, %v953
        %v955 = vpop.f32.mrb[0].mxu0
        %956 = vmatprep.mubr.f32.mxu0 0.0
        %957 = vmatmul.mubr.f32.gmra.mrb[0].mxu0 %v861
        %v958 = vpop.f32.mrb[0].mxu0
        %v959 = vadd.f32 0.0, %v958
        %v960 = vpop.f32.mrb[0].mxu0
        %961 = vmatprep.mubr.f32.mxu0 0.0
        %962 = vmatmul.mubr.f32.gmra.mrb[0].mxu0 %v864
        %v963 = vpop.f32.mrb[0].mxu0
        %v964 = vadd.f32 0.0, %v963
        %v965 = vpop.f32.mrb[0].mxu0
        %966 = vmatprep.mubr.f32.mxu0 0.0
        %967 = vmatmul.mubr.f32.gmra.mrb[0].mxu0 %v867
        %v968 = vpop.f32.mrb[0].mxu0
        %v969 = vadd.f32 0.0, %v968
        %v970 = vpop.f32.mrb[0].mxu0
        %971 = vmatprep.mubr.f32.mxu0 0.0
        %972 = vmatmul.mubr.f32.gmra.mrb[0].mxu0 %v870
        %v973 = vpop.f32.mrb[0].mxu0
        %v974 = vadd.f32 0.0, %v973
        %v975 = vpop.f32.mrb[0].mxu0
        %976 = vmatprep.mubr.f32.mxu0 0.0
        %977 = vmatmul.mubr.f32.gmra.mrb[0].mxu0 %v873
        %v978 = vpop.f32.mrb[0].mxu0
        %v979 = vadd.f32 0.0, %v978
        %v980 = vpop.f32.mrb[0].mxu0
        %981 = vmatprep.mubr.f32.mxu0 0.0
        %982 = vmatmul.mubr.f32.gmra.mrb[0].mxu0 %v876
        %v983 = vpop.f32.mrb[0].mxu0
        %v984 = vadd.f32 0.0, %v983
        %v985 = vpop.f32.mrb[0].mxu0
        %986 = vmatprep.mubr.f32.mxu0 0.0
        %987 = vmatmul.mubr.f32.gmra.mrb[0].mxu0 %v879
        %v988 = vpop.f32.mrb[0].mxu0
        %v989 = vadd.f32 0.0, %v988
        %v990 = vpop.f32.mrb[0].mxu0
        %991 = vmatprep.mubr.f32.mxu0 0.0
        %992 = vmatmul.mubr.f32.gmra.mrb[0].mxu0 %v882
        %v993 = vpop.f32.mrb[0].mxu0
        %v994 = vadd.f32 0.0, %v993
        %v995 = vpop.f32.mrb[0].mxu0
        %996 = vmatprep.mubr.f32.mxu0 0.0
        %997 = vmatmul.mubr.f32.gmra.mrb[0].mxu0 %v885
        %v998 = vpop.f32.mrb[0].mxu0
        %v999 = vadd.f32 0.0, %v998
        %v1000 = vpop.f32.mrb[0].mxu0
        %1001 = vdwg.mxu0
        %v1003 = vsel %vm768, %v830, 0
        %v1006 = vsel %vm768, %v831, 0
        %v1009 = vsel %vm768, %v832, 0
        %v1012 = vsel %vm768, %v833, 0
        %v1015 = vsel %vm768, %v834, 0
        %v1018 = vsel %vm768, %v835, 0
        %v1021 = vsel %vm768, %v836, 0
        %v1024 = vsel %vm768, %v837, 0
        %v1027 = vsel %vm768, %v838, 0
        %v1030 = vsel %vm768, %v839, 0
        %1032 = vmatprep.subr.mxu0 0.0
        %1033 = vmatpush1.msra.mxu0 %v840
        %1034 = vmatprep.subr.mxu0 0.0
        %1035 = vmatpush1.msra.mxu0 %v841
        %1036 = vmatprep.subr.mxu0 0.0
        %1037 = vmatpush1.msra.mxu0 %v842
        %1038 = vmatprep.subr.mxu0 0.0
        %1039 = vmatpush1.msra.mxu0 0.0
        %1040 = vmatprep.subr.mxu0 0.0
        %1041 = vmatpush1.msra.mxu0 0.0
        %1042 = vmatprep.subr.mxu0 0.0
        %1043 = vmatpush1.msra.mxu0 0.0
        %1044 = vmatprep.subr.mxu0 0.0
        %1045 = vmatpush1.msra.mxu0 0.0
        %1046 = vmatprep.subr.mxu0 0.0
        %1047 = vmatpush1.msra.mxu0 0.0
        %1048 = vmatprep.subr.mxu0 0.0
        %1049 = vmatpush1.msra.mxu0 0.0
        %1050 = vmatprep.subr.mxu0 0.0
        %1051 = vmatpush1.msra.mxu0 0.0
        %1052 = vmatprep.subr.mxu0 0.0
        %1053 = vmatpush1.msra.mxu0 0.0
        %1054 = vmatprep.subr.mxu0 0.0
        %1055 = vmatpush1.msra.mxu0 0.0
        %1056 = vmatprep.subr.mxu0 0.0
        %1057 = vmatpush1.msra.mxu0 0.0
        %1058 = vmatprep.subr.mxu0 0.0
        %1059 = vmatpush1.msra.mxu0 0.0
        %1060 = vmatprep.subr.mxu0 0.0
        %1061 = vmatpush1.msra.mxu0 0.0
        %1062 = vmatprep.subr.mxu0 0.0
        %1063 = vmatpush1.msra.mxu0 0.0
        %1064 = vmatprep.subr.mxu0 0.0
        %1065 = vmatpush1.msra.mxu0 0.0
        %1066 = vmatprep.subr.mxu0 0.0
        %1067 = vmatpush1.msra.mxu0 0.0
        %1068 = vmatprep.subr.mxu0 0.0
        %1069 = vmatpush1.msra.mxu0 0.0
        %1070 = vmatprep.subr.mxu0 0.0
        %1071 = vmatpush1.msra.mxu0 0.0
        %1072 = vmatprep.subr.mxu0 0.0
        %1073 = vmatpush1.msra.mxu0 0.0
        %1074 = vmatprep.subr.mxu0 0.0
        %1075 = vmatpush1.msra.mxu0 0.0
        %1076 = vmatprep.subr.mxu0 0.0
        %1077 = vmatpush1.msra.mxu0 0.0
        %1078 = vmatprep.subr.mxu0 0.0
        %1079 = vmatpush1.msra.mxu0 0.0
        %1080 = vmatprep.subr.mxu0 0.0
        %1081 = vmatpush1.msra.mxu0 0.0
        %1082 = vmatprep.subr.mxu0 0.0
        %1083 = vmatpush1.msra.mxu0 0.0
        %1084 = vmatprep.subr.mxu0 0.0
        %1085 = vmatpush1.msra.mxu0 0.0
        %1086 = vmatprep.subr.mxu0 0.0
        %1087 = vmatpush1.msra.mxu0 0.0
        %1088 = vmatprep.subr.mxu0 0.0
        %1089 = vmatpush1.msra.mxu0 0.0
        %1090 = vmatprep.subr.mxu0 0.0
        %1091 = vmatpush1.msra.mxu0 0.0
        %1092 = vmatprep.subr.mxu0 0.0
        %1093 = vmatpush1.msra.mxu0 0.0
        %1094 = vmatprep.subr.mxu0 0.0
        %1095 = vmatpush1.msra.mxu0 0.0
        %1096 = vmatprep.mubr.f32.mxu0 0.0
        %1097 = vmatmul.mubr.f32.gmra.mrb[0].mxu0 %v1003
        %v1098 = vpop.f32.mrb[0].mxu0
        %v1099 = vadd.f32 %v954, %v1098
        %v1100 = vpop.f32.mrb[0].mxu0
        %1101 = vmatprep.mubr.f32.mxu0 0.0
        %1102 = vmatmul.mubr.f32.gmra.mrb[0].mxu0 %v1006
        %v1103 = vpop.f32.mrb[0].mxu0
        %v1104 = vadd.f32 %v959, %v1103
        %v1105 = vpop.f32.mrb[0].mxu0
        %1106 = vmatprep.mubr.f32.mxu0 0.0
        %1107 = vmatmul.mubr.f32.gmra.mrb[0].mxu0 %v1009
        %v1108 = vpop.f32.mrb[0].mxu0
        %v1109 = vadd.f32 %v964, %v1108
        %v1110 = vpop.f32.mrb[0].mxu0
        %1111 = vmatprep.mubr.f32.mxu0 0.0
        %1112 = vmatmul.mubr.f32.gmra.mrb[0].mxu0 %v1012
        %v1113 = vpop.f32.mrb[0].mxu0
        %v1114 = vadd.f32 %v969, %v1113
        %v1115 = vpop.f32.mrb[0].mxu0
        %1116 = vmatprep.mubr.f32.mxu0 0.0
        %1117 = vmatmul.mubr.f32.gmra.mrb[0].mxu0 %v1015
        %v1118 = vpop.f32.mrb[0].mxu0
        %v1119 = vadd.f32 %v974, %v1118
        %v1120 = vpop.f32.mrb[0].mxu0
        %1121 = vmatprep.mubr.f32.mxu0 0.0
        %1122 = vmatmul.mubr.f32.gmra.mrb[0].mxu0 %v1018
        %v1123 = vpop.f32.mrb[0].mxu0
        %v1124 = vadd.f32 %v979, %v1123
        %v1125 = vpop.f32.mrb[0].mxu0
        %1126 = vmatprep.mubr.f32.mxu0 0.0
        %1127 = vmatmul.mubr.f32.gmra.mrb[0].mxu0 %v1021
        %v1128 = vpop.f32.mrb[0].mxu0
        %v1129 = vadd.f32 %v984, %v1128
        %v1130 = vpop.f32.mrb[0].mxu0
        %1131 = vmatprep.mubr.f32.mxu0 0.0
        %1132 = vmatmul.mubr.f32.gmra.mrb[0].mxu0 %v1024
        %v1133 = vpop.f32.mrb[0].mxu0
        %v1134 = vadd.f32 %v989, %v1133
        %v1135 = vpop.f32.mrb[0].mxu0
        %1136 = vmatprep.mubr.f32.mxu0 0.0
        %1137 = vmatmul.mubr.f32.gmra.mrb[0].mxu0 %v1027
        %v1138 = vpop.f32.mrb[0].mxu0
        %v1139 = vadd.f32 %v994, %v1138
        %v1140 = vpop.f32.mrb[0].mxu0
        %1141 = vmatprep.mubr.f32.mxu0 0.0
        %1142 = vmatmul.mubr.f32.gmra.mrb[0].mxu0 %v1030
        %v1143 = vpop.f32.mrb[0].mxu0
        %v1144 = vadd.f32 %v999, %v1143
        %v1145 = vpop.f32.mrb[0].mxu0
        %1146 = vdwg.mxu0
        %v1147 = vld [vmem:[#allocation2 + $0x2] sm:$0xff]
        %v1148 = vld [vmem:[#allocation2 + $0xa] sm:$0xff]
        %v1149 = vld [vmem:[#allocation2 + $0x12] sm:$0xff]
        %v1150 = vld [vmem:[#allocation2 + $0x1a] sm:$0xff]
        %v1151 = vld [vmem:[#allocation2 + $0x22] sm:$0xff]
        %v1152 = vld [vmem:[#allocation2 + $0x2a] sm:$0xff]
        %v1153 = vld [vmem:[#allocation2 + $0x32] sm:$0xff]
        %v1154 = vld [vmem:[#allocation2 + $0x3a] sm:$0xff]
        %v1155 = vld [vmem:[#allocation2 + $0x42] sm:$0xff]
        %v1156 = vld [vmem:[#allocation2 + $0x4a] sm:$0x3f]
        %s1157 = scalar_lea.vmem %s1, 48
        %v1158 = vld [vmem:[%s1157] sm:$0xff]
        %v1159 = vld [vmem:[%s1157 + $0x8] sm:$0xff]
        %v1160 = vld [vmem:[%s1157 + $0x10] sm:$0xff]
        %v1162 = vsel %vm768, %v1147, 0
        %v1165 = vsel %vm768, %v1148, 0
        %v1168 = vsel %vm768, %v1149, 0
        %v1171 = vsel %vm768, %v1150, 0
        %v1174 = vsel %vm768, %v1151, 0
        %v1177 = vsel %vm768, %v1152, 0
        %v1180 = vsel %vm768, %v1153, 0
        %v1183 = vsel %vm768, %v1154, 0
        %v1186 = vsel %vm768, %v1155, 0
        %v1189 = vsel %vm768, %v1156, 0
        %1191 = vmatprep.subr.mxu0 0.0
        %1192 = vmatpush1.msra.mxu0 %v1158
        %1193 = vmatprep.subr.mxu0 0.0
        %1194 = vmatpush1.msra.mxu0 %v1159
        %1195 = vmatprep.subr.mxu0 0.0
        %1196 = vmatpush1.msra.mxu0 %v1160
        %1197 = vmatprep.subr.mxu0 0.0
        %1198 = vmatpush1.msra.mxu0 0.0
        %1199 = vmatprep.subr.mxu0 0.0
        %1200 = vmatpush1.msra.mxu0 0.0
        %1201 = vmatprep.subr.mxu0 0.0
        %1202 = vmatpush1.msra.mxu0 0.0
        %1203 = vmatprep.subr.mxu0 0.0
        %1204 = vmatpush1.msra.mxu0 0.0
        %1205 = vmatprep.subr.mxu0 0.0
        %1206 = vmatpush1.msra.mxu0 0.0
        %1207 = vmatprep.subr.mxu0 0.0
        %1208 = vmatpush1.msra.mxu0 0.0
        %1209 = vmatprep.subr.mxu0 0.0
        %1210 = vmatpush1.msra.mxu0 0.0
        %1211 = vmatprep.subr.mxu0 0.0
        %1212 = vmatpush1.msra.mxu0 0.0
        %1213 = vmatprep.subr.mxu0 0.0
        %1214 = vmatpush1.msra.mxu0 0.0
        %1215 = vmatprep.subr.mxu0 0.0
        %1216 = vmatpush1.msra.mxu0 0.0
        %1217 = vmatprep.subr.mxu0 0.0
        %1218 = vmatpush1.msra.mxu0 0.0
        %1219 = vmatprep.subr.mxu0 0.0
        %1220 = vmatpush1.msra.mxu0 0.0
        %1221 = vmatprep.subr.mxu0 0.0
        %1222 = vmatpush1.msra.mxu0 0.0
        %1223 = vmatprep.subr.mxu0 0.0
        %1224 = vmatpush1.msra.mxu0 0.0
        %1225 = vmatprep.subr.mxu0 0.0
        %1226 = vmatpush1.msra.mxu0 0.0
        %1227 = vmatprep.subr.mxu0 0.0
        %1228 = vmatpush1.msra.mxu0 0.0
        %1229 = vmatprep.subr.mxu0 0.0
        %1230 = vmatpush1.msra.mxu0 0.0
        %1231 = vmatprep.subr.mxu0 0.0
        %1232 = vmatpush1.msra.mxu0 0.0
        %1233 = vmatprep.subr.mxu0 0.0
        %1234 = vmatpush1.msra.mxu0 0.0
        %1235 = vmatprep.subr.mxu0 0.0
        %1236 = vmatpush1.msra.mxu0 0.0
        %1237 = vmatprep.subr.mxu0 0.0
        %1238 = vmatpush1.msra.mxu0 0.0
        %1239 = vmatprep.subr.mxu0 0.0
        %1240 = vmatpush1.msra.mxu0 0.0
        %1241 = vmatprep.subr.mxu0 0.0
        %1242 = vmatpush1.msra.mxu0 0.0
        %1243 = vmatprep.subr.mxu0 0.0
        %1244 = vmatpush1.msra.mxu0 0.0
        %1245 = vmatprep.subr.mxu0 0.0
        %1246 = vmatpush1.msra.mxu0 0.0
        %1247 = vmatprep.subr.mxu0 0.0
        %1248 = vmatpush1.msra.mxu0 0.0
        %1249 = vmatprep.subr.mxu0 0.0
        %1250 = vmatpush1.msra.mxu0 0.0
        %1251 = vmatprep.subr.mxu0 0.0
        %1252 = vmatpush1.msra.mxu0 0.0
        %1253 = vmatprep.subr.mxu0 0.0
        %1254 = vmatpush1.msra.mxu0 0.0
        %1255 = vmatprep.mubr.f32.mxu0 0.0
        %1256 = vmatmul.mubr.f32.gmra.mrb[0].mxu0 %v1162
        %v1257 = vpop.f32.mrb[0].mxu0
        %v1258 = vadd.f32 0.0, %v1257
        %v1259 = vpop.f32.mrb[0].mxu0
        %1260 = vmatprep.mubr.f32.mxu0 0.0
        %1261 = vmatmul.mubr.f32.gmra.mrb[0].mxu0 %v1165
        %v1262 = vpop.f32.mrb[0].mxu0
        %v1263 = vadd.f32 0.0, %v1262
        %v1264 = vpop.f32.mrb[0].mxu0
        %1265 = vmatprep.mubr.f32.mxu0 0.0
        %1266 = vmatmul.mubr.f32.gmra.mrb[0].mxu0 %v1168
        %v1267 = vpop.f32.mrb[0].mxu0
        %v1268 = vadd.f32 0.0, %v1267
        %v1269 = vpop.f32.mrb[0].mxu0
        %1270 = vmatprep.mubr.f32.mxu0 0.0
        %1271 = vmatmul.mubr.f32.gmra.mrb[0].mxu0 %v1171
        %v1272 = vpop.f32.mrb[0].mxu0
        %v1273 = vadd.f32 0.0, %v1272
        %v1274 = vpop.f32.mrb[0].mxu0
        %1275 = vmatprep.mubr.f32.mxu0 0.0
        %1276 = vmatmul.mubr.f32.gmra.mrb[0].mxu0 %v1174
        %v1277 = vpop.f32.mrb[0].mxu0
        %v1278 = vadd.f32 0.0, %v1277
        %v1279 = vpop.f32.mrb[0].mxu0
        %1280 = vmatprep.mubr.f32.mxu0 0.0
        %1281 = vmatmul.mubr.f32.gmra.mrb[0].mxu0 %v1177
        %v1282 = vpop.f32.mrb[0].mxu0
        %v1283 = vadd.f32 0.0, %v1282
        %v1284 = vpop.f32.mrb[0].mxu0
        %1285 = vmatprep.mubr.f32.mxu0 0.0
        %1286 = vmatmul.mubr.f32.gmra.mrb[0].mxu0 %v1180
        %v1287 = vpop.f32.mrb[0].mxu0
        %v1288 = vadd.f32 0.0, %v1287
        %v1289 = vpop.f32.mrb[0].mxu0
        %1290 = vmatprep.mubr.f32.mxu0 0.0
        %1291 = vmatmul.mubr.f32.gmra.mrb[0].mxu0 %v1183
        %v1292 = vpop.f32.mrb[0].mxu0
        %v1293 = vadd.f32 0.0, %v1292
        %v1294 = vpop.f32.mrb[0].mxu0
        %1295 = vmatprep.mubr.f32.mxu0 0.0
        %1296 = vmatmul.mubr.f32.gmra.mrb[0].mxu0 %v1186
        %v1297 = vpop.f32.mrb[0].mxu0
        %v1298 = vadd.f32 0.0, %v1297
        %v1299 = vpop.f32.mrb[0].mxu0
        %1300 = vmatprep.mubr.f32.mxu0 0.0
        %1301 = vmatmul.mubr.f32.gmra.mrb[0].mxu0 %v1189
        %v1302 = vpop.f32.mrb[0].mxu0
        %v1303 = vadd.f32 0.0, %v1302
        %v1304 = vpop.f32.mrb[0].mxu0
        %1305 = vdwg.mxu0
        %v1306 = vadd.f32 %v1099, %v1258
        %v1307 = vadd.f32 %v1104, %v1263
        %v1308 = vadd.f32 %v1109, %v1268
        %v1309 = vadd.f32 %v1114, %v1273
        %v1310 = vadd.f32 %v1119, %v1278
        %v1311 = vadd.f32 %v1124, %v1283
        %v1312 = vadd.f32 %v1129, %v1288
        %v1313 = vadd.f32 %v1134, %v1293
        %v1314 = vadd.f32 %v1139, %v1298
        %v1315 = vadd.f32 %v1144, %v1303
        %v1316 = vld [vmem:[#allocation8] sm:$0x1]
        %v1318 = vlaneseq
        %v1319 = vshrl.u32 %v1318, 7
        %v1320 = vsub.s32 0, %v1319
        %v1321 = vrot.slane %v1316, %v1320
        %v1323 = vmul.f32 %v1306, %v1321
        %v1324 = vmul.f32 %v1307, %v1321
        %v1325 = vmul.f32 %v1308, %v1321
        %v1326 = vmul.f32 %v1309, %v1321
        %v1327 = vmul.f32 %v1310, %v1321
        %v1328 = vmul.f32 %v1311, %v1321
        %v1329 = vmul.f32 %v1312, %v1321
        %v1330 = vmul.f32 %v1313, %v1321
        %v1331 = vmul.f32 %v1314, %v1321
        %v1332 = vmul.f32 %v1315, %v1321
        %v1333 = vld [vmem:[#allocation11] sm:$0x1]
        %v1335 = vlaneseq
        %v1336 = vshrl.u32 %v1335, 7
        %v1337 = vsub.s32 0, %v1336
        %v1338 = vrot.slane %v1333, %v1337
        %v1340 = vadd.f32 %v1323, %v1338
        %v1341 = vadd.f32 %v1324, %v1338
        %v1342 = vadd.f32 %v1325, %v1338
        %v1343 = vadd.f32 %v1326, %v1338
        %v1344 = vadd.f32 %v1327, %v1338
        %v1345 = vadd.f32 %v1328, %v1338
        %v1346 = vadd.f32 %v1329, %v1338
        %v1347 = vadd.f32 %v1330, %v1338
        %v1348 = vadd.f32 %v1331, %v1338
        %v1349 = vadd.f32 %v1332, %v1338
        %v1350 = vmax.f32 %v1340, 0.0
        %v1351 = vmax.f32 %v1341, 0.0
        %v1352 = vmax.f32 %v1342, 0.0
        %v1353 = vmax.f32 %v1343, 0.0
        %v1354 = vmax.f32 %v1344, 0.0
        %v1355 = vmax.f32 %v1345, 0.0
        %v1356 = vmax.f32 %v1346, 0.0
        %v1357 = vmax.f32 %v1347, 0.0
        %v1358 = vmax.f32 %v1348, 0.0
        %v1359 = vmax.f32 %v1349, 0.0
        %1360 = vst [vmem:[#allocation3 + $0x1] sm:$0xff] %v1350
        %1361 = vst [vmem:[#allocation3 + $0x9] sm:$0xfc] %v1351
        %1362 = vst [vmem:[#allocation3 + $0x11] sm:$0x3] %v1352
        %1363 = vst [vmem:[#allocation3 + $0x11] sm:$0xf0] %v1352
        %1364 = vst [vmem:[#allocation3 + $0x19] sm:$0xf] %v1353
        %1365 = vst [vmem:[#allocation3 + $0x19] sm:$0xc0] %v1353
        %1366 = vst [vmem:[#allocation3 + $0x21] sm:$0x3f] %v1354
        %1367 = vst [vmem:[#allocation3 + $0x29] sm:$0xff] %v1355
        %1368 = vst [vmem:[#allocation3 + $0x31] sm:$0xfc] %v1356
        %1369 = vst [vmem:[#allocation3 + $0x39] sm:$0x3] %v1357
        %1370 = vst [vmem:[#allocation3 + $0x39] sm:$0xf0] %v1357
        %1371 = vst [vmem:[#allocation3 + $0x41] sm:$0xf] %v1358
        %1372 = vst [vmem:[#allocation3 + $0x41] sm:$0xc0] %v1358
        %1373 = vst [vmem:[#allocation3 + $0x49] sm:$0x3f] %v1359
        %v1374 = vld [vmem:[#allocation3] sm:$0xff]
        %v1375 = vld [vmem:[#allocation3 + $0x8] sm:$0xff]
        %v1376 = vld [vmem:[#allocation3 + $0x10] sm:$0xff]
        %v1377 = vld [vmem:[#allocation3 + $0x18] sm:$0xff]
        %v1378 = vld [vmem:[#allocation3 + $0x20] sm:$0xff]
        %v1379 = vld [vmem:[#allocation3 + $0x28] sm:$0xff]
        %v1380 = vld [vmem:[#allocation3 + $0x30] sm:$0xff]
        %v1381 = vld [vmem:[#allocation3 + $0x38] sm:$0xff]
        %v1382 = vld [vmem:[#allocation3 + $0x40] sm:$0xff]
        %v1383 = vld [vmem:[#allocation3 + $0x48] sm:$0x3f]
        %v1384 = vld [vmem:[#allocation13] sm:$0xff]
        %v1385 = vld [vmem:[#allocation13 + $0x8] sm:$0xff]
        %v1386 = vld [vmem:[#allocation13 + $0x10] sm:$0xff]
        %v1387 = vld [vmem:[#allocation13 + $0x18] sm:$0xff]
        %v1388 = vld [vmem:[#allocation13 + $0x20] sm:$0xff]
        %v1389 = vld [vmem:[#allocation13 + $0x28] sm:$0xff]
        %v1390 = vld [vmem:[#allocation13 + $0x30] sm:$0xff]
        %v1391 = vld [vmem:[#allocation13 + $0x38] sm:$0xff]
        %v1392 = vld [vmem:[#allocation13 + $0x40] sm:$0xff]
        %v1393 = vld [vmem:[#allocation13 + $0x48] sm:$0xff]
        %v1394 = vld [vmem:[#allocation13 + $0x50] sm:$0xff]
        %v1395 = vld [vmem:[#allocation13 + $0x58] sm:$0xff]
        %v1396 = vld [vmem:[#allocation13 + $0x60] sm:$0xff]
        %v1397 = vld [vmem:[#allocation13 + $0x68] sm:$0xff]
        %v1398 = vld [vmem:[#allocation13 + $0x70] sm:$0xff]
        %v1399 = vld [vmem:[#allocation13 + $0x78] sm:$0xff]
        %v1400 = vld [vmem:[#allocation13 + $0x80] sm:$0xff]
        %v1401 = vld [vmem:[#allocation13 + $0x88] sm:$0xff]
        %v1402 = vld [vmem:[#allocation13 + $0x90] sm:$0xff]
        %v1403 = vld [vmem:[#allocation13 + $0x98] sm:$0xff]
        %v1404 = vld [vmem:[#allocation13 + $0xa0] sm:$0xff]
        %v1405 = vld [vmem:[#allocation13 + $0xa8] sm:$0xff]
        %v1406 = vld [vmem:[#allocation13 + $0xb0] sm:$0xff]
        %v1407 = vld [vmem:[#allocation13 + $0xb8] sm:$0xff]
        %v1408 = vld [vmem:[#allocation13 + $0xc0] sm:$0xff]
        %v1409 = vld [vmem:[#allocation13 + $0xc8] sm:$0xff]
        %v1410 = vld [vmem:[#allocation13 + $0xd0] sm:$0xff]
        %v1411 = vld [vmem:[#allocation13 + $0xd8] sm:$0xff]
        %v1412 = vld [vmem:[#allocation13 + $0xe0] sm:$0xff]
        %v1413 = vld [vmem:[#allocation13 + $0xe8] sm:$0xff]
        %v1414 = vld [vmem:[#allocation13 + $0xf0] sm:$0xff]
        %v1415 = vld [vmem:[#allocation13 + $0xf8] sm:$0xff]
        %v1416 = vld [vmem:[#allocation3 + $0x1] sm:$0xff]
        %v1417 = vld [vmem:[#allocation3 + $0x9] sm:$0xff]
        %v1418 = vld [vmem:[#allocation3 + $0x11] sm:$0xff]
        %v1419 = vld [vmem:[#allocation3 + $0x19] sm:$0xff]
        %v1420 = vld [vmem:[#allocation3 + $0x21] sm:$0xff]
        %v1421 = vld [vmem:[#allocation3 + $0x29] sm:$0xff]
        %v1422 = vld [vmem:[#allocation3 + $0x31] sm:$0xff]
        %v1423 = vld [vmem:[#allocation3 + $0x39] sm:$0xff]
        %v1424 = vld [vmem:[#allocation3 + $0x41] sm:$0xff]
        %v1425 = vld [vmem:[#allocation3 + $0x49] sm:$0x3f]
        %s1426 = scalar_lea.vmem [#allocation13], 256
        %v1427 = vld [vmem:[%s1426] sm:$0xff]
        %v1428 = vld [vmem:[%s1426 + $0x8] sm:$0xff]
        %v1429 = vld [vmem:[%s1426 + $0x10] sm:$0xff]
        %v1430 = vld [vmem:[%s1426 + $0x18] sm:$0xff]
        %v1431 = vld [vmem:[%s1426 + $0x20] sm:$0xff]
        %v1432 = vld [vmem:[%s1426 + $0x28] sm:$0xff]
        %v1433 = vld [vmem:[%s1426 + $0x30] sm:$0xff]
        %v1434 = vld [vmem:[%s1426 + $0x38] sm:$0xff]
        %v1435 = vld [vmem:[%s1426 + $0x40] sm:$0xff]
        %v1436 = vld [vmem:[%s1426 + $0x48] sm:$0xff]
        %v1437 = vld [vmem:[%s1426 + $0x50] sm:$0xff]
        %v1438 = vld [vmem:[%s1426 + $0x58] sm:$0xff]
        %v1439 = vld [vmem:[%s1426 + $0x60] sm:$0xff]
        %v1440 = vld [vmem:[%s1426 + $0x68] sm:$0xff]
        %v1441 = vld [vmem:[%s1426 + $0x70] sm:$0xff]
        %v1442 = vld [vmem:[%s1426 + $0x78] sm:$0xff]
        %v1443 = vld [vmem:[%s1426 + $0x80] sm:$0xff]
        %v1444 = vld [vmem:[%s1426 + $0x88] sm:$0xff]
        %v1445 = vld [vmem:[%s1426 + $0x90] sm:$0xff]
        %v1446 = vld [vmem:[%s1426 + $0x98] sm:$0xff]
        %v1447 = vld [vmem:[%s1426 + $0xa0] sm:$0xff]
        %v1448 = vld [vmem:[%s1426 + $0xa8] sm:$0xff]
        %v1449 = vld [vmem:[%s1426 + $0xb0] sm:$0xff]
        %v1450 = vld [vmem:[%s1426 + $0xb8] sm:$0xff]
        %v1451 = vld [vmem:[%s1426 + $0xc0] sm:$0xff]
        %v1452 = vld [vmem:[%s1426 + $0xc8] sm:$0xff]
        %v1453 = vld [vmem:[%s1426 + $0xd0] sm:$0xff]
        %v1454 = vld [vmem:[%s1426 + $0xd8] sm:$0xff]
        %v1455 = vld [vmem:[%s1426 + $0xe0] sm:$0xff]
        %v1456 = vld [vmem:[%s1426 + $0xe8] sm:$0xff]
        %v1457 = vld [vmem:[%s1426 + $0xf0] sm:$0xff]
        %v1458 = vld [vmem:[%s1426 + $0xf8] sm:$0xff]
        %1459 = vmatprep.subr.mxu0 %v1428
        %1460 = vmatpush1.msra.mxu0 %v1427
        %1461 = vmatprep.subr.mxu0 %v1430
        %1462 = vmatpush1.msra.mxu0 %v1429
        %1463 = vmatprep.subr.mxu0 %v1432
        %1464 = vmatpush1.msra.mxu0 %v1431
        %1465 = vmatprep.subr.mxu0 %v1434
        %1466 = vmatpush1.msra.mxu0 %v1433
        %1467 = vmatprep.subr.mxu0 %v1436
        %1468 = vmatpush1.msra.mxu0 %v1435
        %1469 = vmatprep.subr.mxu0 %v1438
        %1470 = vmatpush1.msra.mxu0 %v1437
        %1471 = vmatprep.subr.mxu0 %v1440
        %1472 = vmatpush1.msra.mxu0 %v1439
        %1473 = vmatprep.subr.mxu0 %v1442
        %1474 = vmatpush1.msra.mxu0 %v1441
        %1475 = vmatprep.subr.mxu0 %v1444
        %1476 = vmatpush1.msra.mxu0 %v1443
        %1477 = vmatprep.subr.mxu0 %v1446
        %1478 = vmatpush1.msra.mxu0 %v1445
        %1479 = vmatprep.subr.mxu0 %v1448
        %1480 = vmatpush1.msra.mxu0 %v1447
        %1481 = vmatprep.subr.mxu0 %v1450
        %1482 = vmatpush1.msra.mxu0 %v1449
        %1483 = vmatprep.subr.mxu0 %v1452
        %1484 = vmatpush1.msra.mxu0 %v1451
        %1485 = vmatprep.subr.mxu0 %v1454
        %1486 = vmatpush1.msra.mxu0 %v1453
        %1487 = vmatprep.subr.mxu0 %v1456
        %1488 = vmatpush1.msra.mxu0 %v1455
        %1489 = vmatprep.subr.mxu0 %v1458
        %1490 = vmatpush1.msra.mxu0 %v1457
        %1491 = vmatprep.subr.mxu0 0.0
        %1492 = vmatpush1.msra.mxu0 0.0
        %1493 = vmatprep.subr.mxu0 0.0
        %1494 = vmatpush1.msra.mxu0 0.0
        %1495 = vmatprep.subr.mxu0 0.0
        %1496 = vmatpush1.msra.mxu0 0.0
        %1497 = vmatprep.subr.mxu0 0.0
        %1498 = vmatpush1.msra.mxu0 0.0
        %1499 = vmatprep.subr.mxu0 0.0
        %1500 = vmatpush1.msra.mxu0 0.0
        %1501 = vmatprep.subr.mxu0 0.0
        %1502 = vmatpush1.msra.mxu0 0.0
        %1503 = vmatprep.subr.mxu0 0.0
        %1504 = vmatpush1.msra.mxu0 0.0
        %1505 = vmatprep.subr.mxu0 0.0
        %1506 = vmatpush1.msra.mxu0 0.0
        %1507 = vmatprep.subr.mxu0 0.0
        %1508 = vmatpush1.msra.mxu0 0.0
        %1509 = vmatprep.subr.mxu0 0.0
        %1510 = vmatpush1.msra.mxu0 0.0
        %1511 = vmatprep.subr.mxu0 0.0
        %1512 = vmatpush1.msra.mxu0 0.0
        %1513 = vmatprep.subr.mxu0 0.0
        %1514 = vmatpush1.msra.mxu0 0.0
        %1515 = vmatprep.subr.mxu0 0.0
        %1516 = vmatpush1.msra.mxu0 0.0
        %1517 = vmatprep.subr.mxu0 0.0
        %1518 = vmatpush1.msra.mxu0 0.0
        %1519 = vmatprep.subr.mxu0 0.0
        %1520 = vmatpush1.msra.mxu0 0.0
        %1521 = vmatprep.subr.mxu0 0.0
        %1522 = vmatpush1.msra.mxu0 0.0
        %1523 = vmatprep.mubr.f32.mxu0 0.0
        %1524 = vmatmul.mubr.f32.gmra.mrb[0].mxu0 %v1416
        %v1525 = vpop.f32.mrb[0].mxu0
        %v1526 = vadd.f32 0.0, %v1525
        %v1527 = vpop.f32.mrb[0].mxu0
        %v1528 = vadd.f32 0.0, %v1527
        %1529 = vmatprep.mubr.f32.mxu0 0.0
        %1530 = vmatmul.mubr.f32.gmra.mrb[0].mxu0 %v1417
        %v1531 = vpop.f32.mrb[0].mxu0
        %v1532 = vadd.f32 0.0, %v1531
        %v1533 = vpop.f32.mrb[0].mxu0
        %v1534 = vadd.f32 0.0, %v1533
        %1535 = vmatprep.mubr.f32.mxu0 0.0
        %1536 = vmatmul.mubr.f32.gmra.mrb[0].mxu0 %v1418
        %v1537 = vpop.f32.mrb[0].mxu0
        %v1538 = vadd.f32 0.0, %v1537
        %v1539 = vpop.f32.mrb[0].mxu0
        %v1540 = vadd.f32 0.0, %v1539
        %1541 = vmatprep.mubr.f32.mxu0 0.0
        %1542 = vmatmul.mubr.f32.gmra.mrb[0].mxu0 %v1419
        %v1543 = vpop.f32.mrb[0].mxu0
        %v1544 = vadd.f32 0.0, %v1543
        %v1545 = vpop.f32.mrb[0].mxu0
        %v1546 = vadd.f32 0.0, %v1545
        %1547 = vmatprep.mubr.f32.mxu0 0.0
        %1548 = vmatmul.mubr.f32.gmra.mrb[0].mxu0 %v1420
        %v1549 = vpop.f32.mrb[0].mxu0
        %v1550 = vadd.f32 0.0, %v1549
        %v1551 = vpop.f32.mrb[0].mxu0
        %v1552 = vadd.f32 0.0, %v1551
        %1553 = vmatprep.mubr.f32.mxu0 0.0
        %1554 = vmatmul.mubr.f32.gmra.mrb[0].mxu0 %v1421
        %v1555 = vpop.f32.mrb[0].mxu0
        %v1556 = vadd.f32 0.0, %v1555
        %v1557 = vpop.f32.mrb[0].mxu0
        %v1558 = vadd.f32 0.0, %v1557
        %1559 = vmatprep.mubr.f32.mxu0 0.0
        %1560 = vmatmul.mubr.f32.gmra.mrb[0].mxu0 %v1422
        %v1561 = vpop.f32.mrb[0].mxu0
        %v1562 = vadd.f32 0.0, %v1561
        %v1563 = vpop.f32.mrb[0].mxu0
        %v1564 = vadd.f32 0.0, %v1563
        %1565 = vmatprep.mubr.f32.mxu0 0.0
        %1566 = vmatmul.mubr.f32.gmra.mrb[0].mxu0 %v1423
        %v1567 = vpop.f32.mrb[0].mxu0
        %v1568 = vadd.f32 0.0, %v1567
        %v1569 = vpop.f32.mrb[0].mxu0
        %v1570 = vadd.f32 0.0, %v1569
        %1571 = vmatprep.mubr.f32.mxu0 0.0
        %1572 = vmatmul.mubr.f32.gmra.mrb[0].mxu0 %v1424
        %v1573 = vpop.f32.mrb[0].mxu0
        %v1574 = vadd.f32 0.0, %v1573
        %v1575 = vpop.f32.mrb[0].mxu0
        %v1576 = vadd.f32 0.0, %v1575
        %1577 = vmatprep.mubr.f32.mxu0 0.0
        %1578 = vmatmul.mubr.f32.gmra.mrb[0].mxu0 %v1425
        %v1579 = vpop.f32.mrb[0].mxu0
        %v1580 = vadd.f32 0.0, %v1579
        %v1581 = vpop.f32.mrb[0].mxu0
        %v1582 = vadd.f32 0.0, %v1581
        %1583 = vdwg.mxu0
        %1584 = vmatprep.subr.mxu0 %v1385
        %1585 = vmatpush1.msra.mxu0 %v1384
        %1586 = vmatprep.subr.mxu0 %v1387
        %1587 = vmatpush1.msra.mxu0 %v1386
        %1588 = vmatprep.subr.mxu0 %v1389
        %1589 = vmatpush1.msra.mxu0 %v1388
        %1590 = vmatprep.subr.mxu0 %v1391
        %1591 = vmatpush1.msra.mxu0 %v1390
        %1592 = vmatprep.subr.mxu0 %v1393
        %1593 = vmatpush1.msra.mxu0 %v1392
        %1594 = vmatprep.subr.mxu0 %v1395
        %1595 = vmatpush1.msra.mxu0 %v1394
        %1596 = vmatprep.subr.mxu0 %v1397
        %1597 = vmatpush1.msra.mxu0 %v1396
        %1598 = vmatprep.subr.mxu0 %v1399
        %1599 = vmatpush1.msra.mxu0 %v1398
        %1600 = vmatprep.subr.mxu0 %v1401
        %1601 = vmatpush1.msra.mxu0 %v1400
        %1602 = vmatprep.subr.mxu0 %v1403
        %1603 = vmatpush1.msra.mxu0 %v1402
        %1604 = vmatprep.subr.mxu0 %v1405
        %1605 = vmatpush1.msra.mxu0 %v1404
        %1606 = vmatprep.subr.mxu0 %v1407
        %1607 = vmatpush1.msra.mxu0 %v1406
        %1608 = vmatprep.subr.mxu0 %v1409
        %1609 = vmatpush1.msra.mxu0 %v1408
        %1610 = vmatprep.subr.mxu0 %v1411
        %1611 = vmatpush1.msra.mxu0 %v1410
        %1612 = vmatprep.subr.mxu0 %v1413
        %1613 = vmatpush1.msra.mxu0 %v1412
        %1614 = vmatprep.subr.mxu0 %v1415
        %1615 = vmatpush1.msra.mxu0 %v1414
        %1616 = vmatprep.subr.mxu0 0.0
        %1617 = vmatpush1.msra.mxu0 0.0
        %1618 = vmatprep.subr.mxu0 0.0
        %1619 = vmatpush1.msra.mxu0 0.0
        %1620 = vmatprep.subr.mxu0 0.0
        %1621 = vmatpush1.msra.mxu0 0.0
        %1622 = vmatprep.subr.mxu0 0.0
        %1623 = vmatpush1.msra.mxu0 0.0
        %1624 = vmatprep.subr.mxu0 0.0
        %1625 = vmatpush1.msra.mxu0 0.0
        %1626 = vmatprep.subr.mxu0 0.0
        %1627 = vmatpush1.msra.mxu0 0.0
        %1628 = vmatprep.subr.mxu0 0.0
        %1629 = vmatpush1.msra.mxu0 0.0
        %1630 = vmatprep.subr.mxu0 0.0
        %1631 = vmatpush1.msra.mxu0 0.0
        %1632 = vmatprep.subr.mxu0 0.0
        %1633 = vmatpush1.msra.mxu0 0.0
        %1634 = vmatprep.subr.mxu0 0.0
        %1635 = vmatpush1.msra.mxu0 0.0
        %1636 = vmatprep.subr.mxu0 0.0
        %1637 = vmatpush1.msra.mxu0 0.0
        %1638 = vmatprep.subr.mxu0 0.0
        %1639 = vmatpush1.msra.mxu0 0.0
        %1640 = vmatprep.subr.mxu0 0.0
        %1641 = vmatpush1.msra.mxu0 0.0
        %1642 = vmatprep.subr.mxu0 0.0
        %1643 = vmatpush1.msra.mxu0 0.0
        %1644 = vmatprep.subr.mxu0 0.0
        %1645 = vmatpush1.msra.mxu0 0.0
        %1646 = vmatprep.subr.mxu0 0.0
        %1647 = vmatpush1.msra.mxu0 0.0
        %1648 = vmatprep.mubr.f32.mxu0 0.0
        %1649 = vmatmul.mubr.f32.gmra.mrb[0].mxu0 %v1374
        %v1650 = vpop.f32.mrb[0].mxu0
        %v1651 = vadd.f32 %v1526, %v1650
        %v1652 = vpop.f32.mrb[0].mxu0
        %v1653 = vadd.f32 %v1528, %v1652
        %1654 = vmatprep.mubr.f32.mxu0 0.0
        %1655 = vmatmul.mubr.f32.gmra.mrb[0].mxu0 %v1375
        %v1656 = vpop.f32.mrb[0].mxu0
        %v1657 = vadd.f32 %v1532, %v1656
        %v1658 = vpop.f32.mrb[0].mxu0
        %v1659 = vadd.f32 %v1534, %v1658
        %1660 = vmatprep.mubr.f32.mxu0 0.0
        %1661 = vmatmul.mubr.f32.gmra.mrb[0].mxu0 %v1376
        %v1662 = vpop.f32.mrb[0].mxu0
        %v1663 = vadd.f32 %v1538, %v1662
        %v1664 = vpop.f32.mrb[0].mxu0
        %v1665 = vadd.f32 %v1540, %v1664
        %1666 = vmatprep.mubr.f32.mxu0 0.0
        %1667 = vmatmul.mubr.f32.gmra.mrb[0].mxu0 %v1377
        %v1668 = vpop.f32.mrb[0].mxu0
        %v1669 = vadd.f32 %v1544, %v1668
        %v1670 = vpop.f32.mrb[0].mxu0
        %v1671 = vadd.f32 %v1546, %v1670
        %1672 = vmatprep.mubr.f32.mxu0 0.0
        %1673 = vmatmul.mubr.f32.gmra.mrb[0].mxu0 %v1378
        %v1674 = vpop.f32.mrb[0].mxu0
        %v1675 = vadd.f32 %v1550, %v1674
        %v1676 = vpop.f32.mrb[0].mxu0
        %v1677 = vadd.f32 %v1552, %v1676
        %1678 = vmatprep.mubr.f32.mxu0 0.0
        %1679 = vmatmul.mubr.f32.gmra.mrb[0].mxu0 %v1379
        %v1680 = vpop.f32.mrb[0].mxu0
        %v1681 = vadd.f32 %v1556, %v1680
        %v1682 = vpop.f32.mrb[0].mxu0
        %v1683 = vadd.f32 %v1558, %v1682
        %1684 = vmatprep.mubr.f32.mxu0 0.0
        %1685 = vmatmul.mubr.f32.gmra.mrb[0].mxu0 %v1380
        %v1686 = vpop.f32.mrb[0].mxu0
        %v1687 = vadd.f32 %v1562, %v1686
        %v1688 = vpop.f32.mrb[0].mxu0
        %v1689 = vadd.f32 %v1564, %v1688
        %1690 = vmatprep.mubr.f32.mxu0 0.0
        %1691 = vmatmul.mubr.f32.gmra.mrb[0].mxu0 %v1381
        %v1692 = vpop.f32.mrb[0].mxu0
        %v1693 = vadd.f32 %v1568, %v1692
        %v1694 = vpop.f32.mrb[0].mxu0
        %v1695 = vadd.f32 %v1570, %v1694
        %1696 = vmatprep.mubr.f32.mxu0 0.0
        %1697 = vmatmul.mubr.f32.gmra.mrb[0].mxu0 %v1382
        %v1698 = vpop.f32.mrb[0].mxu0
        %v1699 = vadd.f32 %v1574, %v1698
        %v1700 = vpop.f32.mrb[0].mxu0
        %v1701 = vadd.f32 %v1576, %v1700
        %1702 = vmatprep.mubr.f32.mxu0 0.0
        %1703 = vmatmul.mubr.f32.gmra.mrb[0].mxu0 %v1383
        %v1704 = vpop.f32.mrb[0].mxu0
        %v1705 = vadd.f32 %v1580, %v1704
        %v1706 = vpop.f32.mrb[0].mxu0
        %v1707 = vadd.f32 %v1582, %v1706
        %1708 = vdwg.mxu0
        %v1709 = vld [vmem:[#allocation3 + $0x2] sm:$0xff]
        %v1710 = vld [vmem:[#allocation3 + $0xa] sm:$0xff]
        %v1711 = vld [vmem:[#allocation3 + $0x12] sm:$0xff]
        %v1712 = vld [vmem:[#allocation3 + $0x1a] sm:$0xff]
        %v1713 = vld [vmem:[#allocation3 + $0x22] sm:$0xff]
        %v1714 = vld [vmem:[#allocation3 + $0x2a] sm:$0xff]
        %v1715 = vld [vmem:[#allocation3 + $0x32] sm:$0xff]
        %v1716 = vld [vmem:[#allocation3 + $0x3a] sm:$0xff]
        %v1717 = vld [vmem:[#allocation3 + $0x42] sm:$0xff]
        %v1718 = vld [vmem:[#allocation3 + $0x4a] sm:$0x3f]
        %s1719 = scalar_lea.vmem [#allocation13], 512
        %v1720 = vld [vmem:[%s1719] sm:$0xff]
        %v1721 = vld [vmem:[%s1719 + $0x8] sm:$0xff]
        %v1722 = vld [vmem:[%s1719 + $0x10] sm:$0xff]
        %v1723 = vld [vmem:[%s1719 + $0x18] sm:$0xff]
        %v1724 = vld [vmem:[%s1719 + $0x20] sm:$0xff]
        %v1725 = vld [vmem:[%s1719 + $0x28] sm:$0xff]
        %v1726 = vld [vmem:[%s1719 + $0x30] sm:$0xff]
        %v1727 = vld [vmem:[%s1719 + $0x38] sm:$0xff]
        %v1728 = vld [vmem:[%s1719 + $0x40] sm:$0xff]
        %v1729 = vld [vmem:[%s1719 + $0x48] sm:$0xff]
        %v1730 = vld [vmem:[%s1719 + $0x50] sm:$0xff]
        %v1731 = vld [vmem:[%s1719 + $0x58] sm:$0xff]
        %v1732 = vld [vmem:[%s1719 + $0x60] sm:$0xff]
        %v1733 = vld [vmem:[%s1719 + $0x68] sm:$0xff]
        %v1734 = vld [vmem:[%s1719 + $0x70] sm:$0xff]
        %v1735 = vld [vmem:[%s1719 + $0x78] sm:$0xff]
        %v1736 = vld [vmem:[%s1719 + $0x80] sm:$0xff]
        %v1737 = vld [vmem:[%s1719 + $0x88] sm:$0xff]
        %v1738 = vld [vmem:[%s1719 + $0x90] sm:$0xff]
        %v1739 = vld [vmem:[%s1719 + $0x98] sm:$0xff]
        %v1740 = vld [vmem:[%s1719 + $0xa0] sm:$0xff]
        %v1741 = vld [vmem:[%s1719 + $0xa8] sm:$0xff]
        %v1742 = vld [vmem:[%s1719 + $0xb0] sm:$0xff]
        %v1743 = vld [vmem:[%s1719 + $0xb8] sm:$0xff]
        %v1744 = vld [vmem:[%s1719 + $0xc0] sm:$0xff]
        %v1745 = vld [vmem:[%s1719 + $0xc8] sm:$0xff]
        %v1746 = vld [vmem:[%s1719 + $0xd0] sm:$0xff]
        %v1747 = vld [vmem:[%s1719 + $0xd8] sm:$0xff]
        %v1748 = vld [vmem:[%s1719 + $0xe0] sm:$0xff]
        %v1749 = vld [vmem:[%s1719 + $0xe8] sm:$0xff]
        %v1750 = vld [vmem:[%s1719 + $0xf0] sm:$0xff]
        %v1751 = vld [vmem:[%s1719 + $0xf8] sm:$0xff]
        %1752 = vmatprep.subr.mxu0 %v1721
        %1753 = vmatpush1.msra.mxu0 %v1720
        %1754 = vmatprep.subr.mxu0 %v1723
        %1755 = vmatpush1.msra.mxu0 %v1722
        %1756 = vmatprep.subr.mxu0 %v1725
        %1757 = vmatpush1.msra.mxu0 %v1724
        %1758 = vmatprep.subr.mxu0 %v1727
        %1759 = vmatpush1.msra.mxu0 %v1726
        %1760 = vmatprep.subr.mxu0 %v1729
        %1761 = vmatpush1.msra.mxu0 %v1728
        %1762 = vmatprep.subr.mxu0 %v1731
        %1763 = vmatpush1.msra.mxu0 %v1730
        %1764 = vmatprep.subr.mxu0 %v1733
        %1765 = vmatpush1.msra.mxu0 %v1732
        %1766 = vmatprep.subr.mxu0 %v1735
        %1767 = vmatpush1.msra.mxu0 %v1734
        %1768 = vmatprep.subr.mxu0 %v1737
        %1769 = vmatpush1.msra.mxu0 %v1736
        %1770 = vmatprep.subr.mxu0 %v1739
        %1771 = vmatpush1.msra.mxu0 %v1738
        %1772 = vmatprep.subr.mxu0 %v1741
        %1773 = vmatpush1.msra.mxu0 %v1740
        %1774 = vmatprep.subr.mxu0 %v1743
        %1775 = vmatpush1.msra.mxu0 %v1742
        %1776 = vmatprep.subr.mxu0 %v1745
        %1777 = vmatpush1.msra.mxu0 %v1744
        %1778 = vmatprep.subr.mxu0 %v1747
        %1779 = vmatpush1.msra.mxu0 %v1746
        %1780 = vmatprep.subr.mxu0 %v1749
        %1781 = vmatpush1.msra.mxu0 %v1748
        %1782 = vmatprep.subr.mxu0 %v1751
        %1783 = vmatpush1.msra.mxu0 %v1750
        %1784 = vmatprep.subr.mxu0 0.0
        %1785 = vmatpush1.msra.mxu0 0.0
        %1786 = vmatprep.subr.mxu0 0.0
        %1787 = vmatpush1.msra.mxu0 0.0
        %1788 = vmatprep.subr.mxu0 0.0
        %1789 = vmatpush1.msra.mxu0 0.0
        %1790 = vmatprep.subr.mxu0 0.0
        %1791 = vmatpush1.msra.mxu0 0.0
        %1792 = vmatprep.subr.mxu0 0.0
        %1793 = vmatpush1.msra.mxu0 0.0
        %1794 = vmatprep.subr.mxu0 0.0
        %1795 = vmatpush1.msra.mxu0 0.0
        %1796 = vmatprep.subr.mxu0 0.0
        %1797 = vmatpush1.msra.mxu0 0.0
        %1798 = vmatprep.subr.mxu0 0.0
        %1799 = vmatpush1.msra.mxu0 0.0
        %1800 = vmatprep.subr.mxu0 0.0
        %1801 = vmatpush1.msra.mxu0 0.0
        %1802 = vmatprep.subr.mxu0 0.0
        %1803 = vmatpush1.msra.mxu0 0.0
        %1804 = vmatprep.subr.mxu0 0.0
        %1805 = vmatpush1.msra.mxu0 0.0
        %1806 = vmatprep.subr.mxu0 0.0
        %1807 = vmatpush1.msra.mxu0 0.0
        %1808 = vmatprep.subr.mxu0 0.0
        %1809 = vmatpush1.msra.mxu0 0.0
        %1810 = vmatprep.subr.mxu0 0.0
        %1811 = vmatpush1.msra.mxu0 0.0
        %1812 = vmatprep.subr.mxu0 0.0
        %1813 = vmatpush1.msra.mxu0 0.0
        %1814 = vmatprep.subr.mxu0 0.0
        %1815 = vmatpush1.msra.mxu0 0.0
        %1816 = vmatprep.mubr.f32.mxu0 0.0
        %1817 = vmatmul.mubr.f32.gmra.mrb[0].mxu0 %v1709
        %v1818 = vpop.f32.mrb[0].mxu0
        %v1819 = vadd.f32 0.0, %v1818
        %v1820 = vpop.f32.mrb[0].mxu0
        %v1821 = vadd.f32 0.0, %v1820
        %1822 = vmatprep.mubr.f32.mxu0 0.0
        %1823 = vmatmul.mubr.f32.gmra.mrb[0].mxu0 %v1710
        %v1824 = vpop.f32.mrb[0].mxu0
        %v1825 = vadd.f32 0.0, %v1824
        %v1826 = vpop.f32.mrb[0].mxu0
        %v1827 = vadd.f32 0.0, %v1826
        %1828 = vmatprep.mubr.f32.mxu0 0.0
        %1829 = vmatmul.mubr.f32.gmra.mrb[0].mxu0 %v1711
        %v1830 = vpop.f32.mrb[0].mxu0
        %v1831 = vadd.f32 0.0, %v1830
        %v1832 = vpop.f32.mrb[0].mxu0
        %v1833 = vadd.f32 0.0, %v1832
        %1834 = vmatprep.mubr.f32.mxu0 0.0
        %1835 = vmatmul.mubr.f32.gmra.mrb[0].mxu0 %v1712
        %v1836 = vpop.f32.mrb[0].mxu0
        %v1837 = vadd.f32 0.0, %v1836
        %v1838 = vpop.f32.mrb[0].mxu0
        %v1839 = vadd.f32 0.0, %v1838
        %1840 = vmatprep.mubr.f32.mxu0 0.0
        %1841 = vmatmul.mubr.f32.gmra.mrb[0].mxu0 %v1713
        %v1842 = vpop.f32.mrb[0].mxu0
        %v1843 = vadd.f32 0.0, %v1842
        %v1844 = vpop.f32.mrb[0].mxu0
        %v1845 = vadd.f32 0.0, %v1844
        %1846 = vmatprep.mubr.f32.mxu0 0.0
        %1847 = vmatmul.mubr.f32.gmra.mrb[0].mxu0 %v1714
        %v1848 = vpop.f32.mrb[0].mxu0
        %v1849 = vadd.f32 0.0, %v1848
        %v1850 = vpop.f32.mrb[0].mxu0
        %v1851 = vadd.f32 0.0, %v1850
        %1852 = vmatprep.mubr.f32.mxu0 0.0
        %1853 = vmatmul.mubr.f32.gmra.mrb[0].mxu0 %v1715
        %v1854 = vpop.f32.mrb[0].mxu0
        %v1855 = vadd.f32 0.0, %v1854
        %v1856 = vpop.f32.mrb[0].mxu0
        %v1857 = vadd.f32 0.0, %v1856
        %1858 = vmatprep.mubr.f32.mxu0 0.0
        %1859 = vmatmul.mubr.f32.gmra.mrb[0].mxu0 %v1716
        %v1860 = vpop.f32.mrb[0].mxu0
        %v1861 = vadd.f32 0.0, %v1860
        %v1862 = vpop.f32.mrb[0].mxu0
        %v1863 = vadd.f32 0.0, %v1862
        %1864 = vmatprep.mubr.f32.mxu0 0.0
        %1865 = vmatmul.mubr.f32.gmra.mrb[0].mxu0 %v1717
        %v1866 = vpop.f32.mrb[0].mxu0
        %v1867 = vadd.f32 0.0, %v1866
        %v1868 = vpop.f32.mrb[0].mxu0
        %v1869 = vadd.f32 0.0, %v1868
        %1870 = vmatprep.mubr.f32.mxu0 0.0
        %1871 = vmatmul.mubr.f32.gmra.mrb[0].mxu0 %v1718
        %v1872 = vpop.f32.mrb[0].mxu0
        %v1873 = vadd.f32 0.0, %v1872
        %v1874 = vpop.f32.mrb[0].mxu0
        %v1875 = vadd.f32 0.0, %v1874
        %1876 = vdwg.mxu0
        %v1877 = vadd.f32 %v1651, %v1819
        %v1878 = vadd.f32 %v1653, %v1821
        %v1879 = vadd.f32 %v1657, %v1825
        %v1880 = vadd.f32 %v1659, %v1827
        %v1881 = vadd.f32 %v1663, %v1831
        %v1882 = vadd.f32 %v1665, %v1833
        %v1883 = vadd.f32 %v1669, %v1837
        %v1884 = vadd.f32 %v1671, %v1839
        %v1885 = vadd.f32 %v1675, %v1843
        %v1886 = vadd.f32 %v1677, %v1845
        %v1887 = vadd.f32 %v1681, %v1849
        %v1888 = vadd.f32 %v1683, %v1851
        %v1889 = vadd.f32 %v1687, %v1855
        %v1890 = vadd.f32 %v1689, %v1857
        %v1891 = vadd.f32 %v1693, %v1861
        %v1892 = vadd.f32 %v1695, %v1863
        %v1893 = vadd.f32 %v1699, %v1867
        %v1894 = vadd.f32 %v1701, %v1869
        %v1895 = vadd.f32 %v1705, %v1873
        %v1896 = vadd.f32 %v1707, %v1875
        %v1897 = vld [vmem:[%s5] sm:$0x3]
        %v1899 = vlaneseq
        %v1900 = vshrl.u32 %v1899, 7
        %v1901 = vsub.s32 0, %v1900
        %v1902 = vrot.slane %v1897, %v1901
        %v1903 = vlaneseq
        %v1904 = vshrl.u32 %v1903, 7
        %v1905 = vsub.s32 1, %v1904
        %v1906 = vrot.slane %v1897, %v1905
        %v1909 = vmul.f32 %v1877, %v1902
        %v1910 = vmul.f32 %v1878, %v1906
        %v1911 = vmul.f32 %v1879, %v1902
        %v1912 = vmul.f32 %v1880, %v1906
        %v1913 = vmul.f32 %v1881, %v1902
        %v1914 = vmul.f32 %v1882, %v1906
        %v1915 = vmul.f32 %v1883, %v1902
        %v1916 = vmul.f32 %v1884, %v1906
        %v1917 = vmul.f32 %v1885, %v1902
        %v1918 = vmul.f32 %v1886, %v1906
        %v1919 = vmul.f32 %v1887, %v1902
        %v1920 = vmul.f32 %v1888, %v1906
        %v1921 = vmul.f32 %v1889, %v1902
        %v1922 = vmul.f32 %v1890, %v1906
        %v1923 = vmul.f32 %v1891, %v1902
        %v1924 = vmul.f32 %v1892, %v1906
        %v1925 = vmul.f32 %v1893, %v1902
        %v1926 = vmul.f32 %v1894, %v1906
        %v1927 = vmul.f32 %v1895, %v1902
        %v1928 = vmul.f32 %v1896, %v1906
        %v1929 = vld [vmem:[%s6] sm:$0x3]
        %v1931 = vlaneseq
        %v1932 = vshrl.u32 %v1931, 7
        %v1933 = vsub.s32 0, %v1932
        %v1934 = vrot.slane %v1929, %v1933
        %v1935 = vlaneseq
        %v1936 = vshrl.u32 %v1935, 7
        %v1937 = vsub.s32 1, %v1936
        %v1938 = vrot.slane %v1929, %v1937
        %v1941 = vadd.f32 %v1909, %v1934
        %v1942 = vadd.f32 %v1910, %v1938
        %v1943 = vadd.f32 %v1911, %v1934
        %v1944 = vadd.f32 %v1912, %v1938
        %v1945 = vadd.f32 %v1913, %v1934
        %v1946 = vadd.f32 %v1914, %v1938
        %v1947 = vadd.f32 %v1915, %v1934
        %v1948 = vadd.f32 %v1916, %v1938
        %v1949 = vadd.f32 %v1917, %v1934
        %v1950 = vadd.f32 %v1918, %v1938
        %v1951 = vadd.f32 %v1919, %v1934
        %v1952 = vadd.f32 %v1920, %v1938
        %v1953 = vadd.f32 %v1921, %v1934
        %v1954 = vadd.f32 %v1922, %v1938
        %v1955 = vadd.f32 %v1923, %v1934
        %v1956 = vadd.f32 %v1924, %v1938
        %v1957 = vadd.f32 %v1925, %v1934
        %v1958 = vadd.f32 %v1926, %v1938
        %v1959 = vadd.f32 %v1927, %v1934
        %v1960 = vadd.f32 %v1928, %v1938
        %v1961 = vmax.f32 %v1941, 0.0
        %v1962 = vmax.f32 %v1942, 0.0
        %v1963 = vmax.f32 %v1943, 0.0
        %v1964 = vmax.f32 %v1944, 0.0
        %v1965 = vmax.f32 %v1945, 0.0
        %v1966 = vmax.f32 %v1946, 0.0
        %v1967 = vmax.f32 %v1947, 0.0
        %v1968 = vmax.f32 %v1948, 0.0
        %v1969 = vmax.f32 %v1949, 0.0
        %v1970 = vmax.f32 %v1950, 0.0
        %v1971 = vmax.f32 %v1951, 0.0
        %v1972 = vmax.f32 %v1952, 0.0
        %v1973 = vmax.f32 %v1953, 0.0
        %v1974 = vmax.f32 %v1954, 0.0
        %v1975 = vmax.f32 %v1955, 0.0
        %v1976 = vmax.f32 %v1956, 0.0
        %v1977 = vmax.f32 %v1957, 0.0
        %v1978 = vmax.f32 %v1958, 0.0
        %v1979 = vmax.f32 %v1959, 0.0
        %v1980 = vmax.f32 %v1960, 0.0
        %1991 = vrot.lane.b32.xlu0 %v1961, 96
        %v1992 = vpop.permute.xlu0 %1991
        %1993 = vrot.lane.b32.xlu0 %v1963, 96
        %v1994 = vpop.permute.xlu0 %1993
        %1995 = vrot.lane.b32.xlu0 %v1965, 96
        %v1996 = vpop.permute.xlu0 %1995
        %1997 = vrot.lane.b32.xlu0 %v1967, 96
        %v1998 = vpop.permute.xlu0 %1997
        %1999 = vrot.lane.b32.xlu0 %v1969, 96
        %v2000 = vpop.permute.xlu0 %1999
        %2001 = vrot.lane.b32.xlu0 %v1971, 96
        %v2002 = vpop.permute.xlu0 %2001
        %2003 = vrot.lane.b32.xlu0 %v1973, 96
        %v2004 = vpop.permute.xlu0 %2003
        %2005 = vrot.lane.b32.xlu0 %v1975, 96
        %v2006 = vpop.permute.xlu0 %2005
        %2007 = vrot.lane.b32.xlu0 %v1977, 96
        %v2008 = vpop.permute.xlu0 %2007
        %2009 = vrot.lane.b32.xlu0 %v1979, 96
        %v2010 = vpop.permute.xlu0 %2009
        %v2021 = vmax.f32 %v1961, %v1992
        %v2022 = vmax.f32 %v1963, %v1994
        %v2023 = vmax.f32 %v1965, %v1996
        %v2024 = vmax.f32 %v1967, %v1998
        %v2025 = vmax.f32 %v1969, %v2000
        %v2026 = vmax.f32 %v1971, %v2002
        %v2027 = vmax.f32 %v1973, %v2004
        %v2028 = vmax.f32 %v1975, %v2006
        %v2029 = vmax.f32 %v1977, %v2008
        %v2030 = vmax.f32 %v1979, %v2010
        %vm2031 = vcmask 261120
        %2032 = vst.msk [vmem:[#allocation6] sm:$0xff] %vm2031, %v2021
        %2033 = vst.msk [vmem:[#allocation6 + $0x8] sm:$0xff] %vm2031, %v2022
        %2034 = vst.msk [vmem:[#allocation6 + $0x10] sm:$0xff] %vm2031, %v2023
        %2035 = vst.msk [vmem:[#allocation6 + $0x18] sm:$0xff] %vm2031, %v2024
        %2036 = vst.msk [vmem:[#allocation6 + $0x20] sm:$0xff] %vm2031, %v2025
        %2037 = vst.msk [vmem:[#allocation6 + $0x28] sm:$0xff] %vm2031, %v2026
        %2038 = vst.msk [vmem:[#allocation6 + $0x30] sm:$0xff] %vm2031, %v2027
        %2039 = vst.msk [vmem:[#allocation6 + $0x38] sm:$0xff] %vm2031, %v2028
        %2040 = vst.msk [vmem:[#allocation6 + $0x40] sm:$0xff] %vm2031, %v2029
        %vm2041 = vcmask 259072
        %2042 = vst.msk [vmem:[#allocation6 + $0x48] sm:$0x3f] %vm2041, %v2030
        %2053 = vrot.lane.b32.xlu0 %v2021, 96
        %v2054 = vpop.permute.xlu0 %2053
        %2055 = vrot.lane.b32.xlu0 %v2022, 96
        %v2056 = vpop.permute.xlu0 %2055
        %2057 = vrot.lane.b32.xlu0 %v2023, 96
        %v2058 = vpop.permute.xlu0 %2057
        %2059 = vrot.lane.b32.xlu0 %v2024, 96
        %v2060 = vpop.permute.xlu0 %2059
        %2061 = vrot.lane.b32.xlu0 %v2025, 96
        %v2062 = vpop.permute.xlu0 %2061
        %2063 = vrot.lane.b32.xlu0 %v2026, 96
        %v2064 = vpop.permute.xlu0 %2063
        %2065 = vrot.lane.b32.xlu0 %v2027, 96
        %v2066 = vpop.permute.xlu0 %2065
        %2067 = vrot.lane.b32.xlu0 %v2028, 96
        %v2068 = vpop.permute.xlu0 %2067
        %2069 = vrot.lane.b32.xlu0 %v2029, 96
        %v2070 = vpop.permute.xlu0 %2069
        %2071 = vrot.lane.b32.xlu0 %v2030, 96
        %v2072 = vpop.permute.xlu0 %2071
        %vm2083 = vcmask 523520
        %2084 = vst.msk [vmem:[#allocation6] sm:$0xff] %vm2083, %v2054
        %2085 = vst.msk [vmem:[#allocation6 + $0x8] sm:$0xff] %vm2083, %v2056
        %2086 = vst.msk [vmem:[#allocation6 + $0x10] sm:$0xff] %vm2083, %v2058
        %2087 = vst.msk [vmem:[#allocation6 + $0x18] sm:$0xff] %vm2083, %v2060
        %2088 = vst.msk [vmem:[#allocation6 + $0x20] sm:$0xff] %vm2083, %v2062
        %2089 = vst.msk [vmem:[#allocation6 + $0x28] sm:$0xff] %vm2083, %v2064
        %2090 = vst.msk [vmem:[#allocation6 + $0x30] sm:$0xff] %vm2083, %v2066
        %2091 = vst.msk [vmem:[#allocation6 + $0x38] sm:$0xff] %vm2083, %v2068
        %2092 = vst.msk [vmem:[#allocation6 + $0x40] sm:$0xff] %vm2083, %v2070
        %vm2093 = vcmask 521472
        %2094 = vst.msk [vmem:[#allocation6 + $0x48] sm:$0x3f] %vm2093, %v2072
        %2105 = vrot.lane.b32.xlu0 %v1962, 96
        %v2106 = vpop.permute.xlu0 %2105
        %2107 = vrot.lane.b32.xlu0 %v1964, 96
        %v2108 = vpop.permute.xlu0 %2107
        %2109 = vrot.lane.b32.xlu0 %v1966, 96
        %v2110 = vpop.permute.xlu0 %2109
        %2111 = vrot.lane.b32.xlu0 %v1968, 96
        %v2112 = vpop.permute.xlu0 %2111
        %2113 = vrot.lane.b32.xlu0 %v1970, 96
        %v2114 = vpop.permute.xlu0 %2113
        %2115 = vrot.lane.b32.xlu0 %v1972, 96
        %v2116 = vpop.permute.xlu0 %2115
        %2117 = vrot.lane.b32.xlu0 %v1974, 96
        %v2118 = vpop.permute.xlu0 %2117
        %2119 = vrot.lane.b32.xlu0 %v1976, 96
        %v2120 = vpop.permute.xlu0 %2119
        %2121 = vrot.lane.b32.xlu0 %v1978, 96
        %v2122 = vpop.permute.xlu0 %2121
        %2123 = vrot.lane.b32.xlu0 %v1980, 96
        %v2124 = vpop.permute.xlu0 %2123
        %v2135 = vmax.f32 %v1962, %v2106
        %v2136 = vmax.f32 %v1964, %v2108
        %v2137 = vmax.f32 %v1966, %v2110
        %v2138 = vmax.f32 %v1968, %v2112
        %v2139 = vmax.f32 %v1970, %v2114
        %v2140 = vmax.f32 %v1972, %v2116
        %v2141 = vmax.f32 %v1974, %v2118
        %v2142 = vmax.f32 %v1976, %v2120
        %v2143 = vmax.f32 %v1978, %v2122
        %v2144 = vmax.f32 %v1980, %v2124
        %2155 = vrot.lane.b32.xlu0 %v2135, 64
        %v2156 = vpop.permute.xlu0 %2155
        %2157 = vrot.lane.b32.xlu0 %v2136, 64
        %v2158 = vpop.permute.xlu0 %2157
        %2159 = vrot.lane.b32.xlu0 %v2137, 64
        %v2160 = vpop.permute.xlu0 %2159
        %2161 = vrot.lane.b32.xlu0 %v2138, 64
        %v2162 = vpop.permute.xlu0 %2161
        %2163 = vrot.lane.b32.xlu0 %v2139, 64
        %v2164 = vpop.permute.xlu0 %2163
        %2165 = vrot.lane.b32.xlu0 %v2140, 64
        %v2166 = vpop.permute.xlu0 %2165
        %2167 = vrot.lane.b32.xlu0 %v2141, 64
        %v2168 = vpop.permute.xlu0 %2167
        %2169 = vrot.lane.b32.xlu0 %v2142, 64
        %v2170 = vpop.permute.xlu0 %2169
        %2171 = vrot.lane.b32.xlu0 %v2143, 64
        %v2172 = vpop.permute.xlu0 %2171
        %2173 = vrot.lane.b32.xlu0 %v2144, 64
        %v2174 = vpop.permute.xlu0 %2173
        %vm2185 = vcmask 785920
        %2186 = vst.msk [vmem:[#allocation6] sm:$0xff] %vm2185, %v2156
        %2187 = vst.msk [vmem:[#allocation6 + $0x8] sm:$0xff] %vm2185, %v2158
        %2188 = vst.msk [vmem:[#allocation6 + $0x10] sm:$0xff] %vm2185, %v2160
        %2189 = vst.msk [vmem:[#allocation6 + $0x18] sm:$0xff] %vm2185, %v2162
        %2190 = vst.msk [vmem:[#allocation6 + $0x20] sm:$0xff] %vm2185, %v2164
        %2191 = vst.msk [vmem:[#allocation6 + $0x28] sm:$0xff] %vm2185, %v2166
        %2192 = vst.msk [vmem:[#allocation6 + $0x30] sm:$0xff] %vm2185, %v2168
        %2193 = vst.msk [vmem:[#allocation6 + $0x38] sm:$0xff] %vm2185, %v2170
        %2194 = vst.msk [vmem:[#allocation6 + $0x40] sm:$0xff] %vm2185, %v2172
        %vm2195 = vcmask 783872
        %2196 = vst.msk [vmem:[#allocation6 + $0x48] sm:$0x3f] %vm2195, %v2174
        %2197 = vrot.lane.b32.xlu0 %v2135, 32
        %v2198 = vpop.permute.xlu0 %2197
        %2199 = vrot.lane.b32.xlu0 %v2136, 32
        %v2200 = vpop.permute.xlu0 %2199
        %2201 = vrot.lane.b32.xlu0 %v2137, 32
        %v2202 = vpop.permute.xlu0 %2201
        %2203 = vrot.lane.b32.xlu0 %v2138, 32
        %v2204 = vpop.permute.xlu0 %2203
        %2205 = vrot.lane.b32.xlu0 %v2139, 32
        %v2206 = vpop.permute.xlu0 %2205
        %2207 = vrot.lane.b32.xlu0 %v2140, 32
        %v2208 = vpop.permute.xlu0 %2207
        %2209 = vrot.lane.b32.xlu0 %v2141, 32
        %v2210 = vpop.permute.xlu0 %2209
        %2211 = vrot.lane.b32.xlu0 %v2142, 32
        %v2212 = vpop.permute.xlu0 %2211
        %2213 = vrot.lane.b32.xlu0 %v2143, 32
        %v2214 = vpop.permute.xlu0 %2213
        %2215 = vrot.lane.b32.xlu0 %v2144, 32
        %v2216 = vpop.permute.xlu0 %2215
        %vm2227 = vcmask 1048320
        %2228 = vst.msk [vmem:[#allocation6] sm:$0xff] %vm2227, %v2198
        %2229 = vst.msk [vmem:[#allocation6 + $0x8] sm:$0xff] %vm2227, %v2200
        %2230 = vst.msk [vmem:[#allocation6 + $0x10] sm:$0xff] %vm2227, %v2202
        %2231 = vst.msk [vmem:[#allocation6 + $0x18] sm:$0xff] %vm2227, %v2204
        %2232 = vst.msk [vmem:[#allocation6 + $0x20] sm:$0xff] %vm2227, %v2206
        %2233 = vst.msk [vmem:[#allocation6 + $0x28] sm:$0xff] %vm2227, %v2208
        %2234 = vst.msk [vmem:[#allocation6 + $0x30] sm:$0xff] %vm2227, %v2210
        %2235 = vst.msk [vmem:[#allocation6 + $0x38] sm:$0xff] %vm2227, %v2212
        %2236 = vst.msk [vmem:[#allocation6 + $0x40] sm:$0xff] %vm2227, %v2214
        %vm2237 = vcmask 1046272
        %2238 = vst.msk [vmem:[#allocation6 + $0x48] sm:$0x3f] %vm2237, %v2216
        %v2239 = vld [vmem:[#allocation6] ss:$2 sm:$0xf]
        %s2240 = scalar_lea.vmem [#allocation6], 1
        %v2241 = vld [vmem:[%s2240] ss:$2 sm:$0xf]
        %v2242 = vmax.f32 %v2239, %v2241
        %2243 = vst [vmem:[#allocation4 + $0x1] sm:$0xf] %v2242
        %s2244 = scalar_lea.vmem [#allocation6], 10
        %v2245 = vld [vmem:[%s2244] ss:$2 sm:$0xf]
        %s2246 = scalar_lea.vmem [#allocation6], 11
        %v2247 = vld [vmem:[%s2246] ss:$2 sm:$0xf]
        %v2248 = vmax.f32 %v2245, %v2247
        %2249 = vst [vmem:[#allocation4 + $0x7] sm:$0xf] %v2248
        %s2250 = scalar_lea.vmem [#allocation6], 20
        %v2251 = vld [vmem:[%s2250] ss:$2 sm:$0xf]
        %s2252 = scalar_lea.vmem [#allocation6], 21
        %v2253 = vld [vmem:[%s2252] ss:$2 sm:$0xf]
        %v2254 = vmax.f32 %v2251, %v2253
        %2255 = vst [vmem:[#allocation4 + $0xd] sm:$0xf] %v2254
        %s2256 = scalar_lea.vmem [#allocation6], 30
        %v2257 = vld [vmem:[%s2256] ss:$2 sm:$0xf]
        %s2258 = scalar_lea.vmem [#allocation6], 31
        %v2259 = vld [vmem:[%s2258] ss:$2 sm:$0xf]
        %v2260 = vmax.f32 %v2257, %v2259
        %2261 = vst [vmem:[#allocation4 + $0x13] sm:$0xf] %v2260
        %s2262 = scalar_lea.vmem [#allocation6], 40
        %v2263 = vld [vmem:[%s2262] ss:$2 sm:$0xf]
        %s2264 = scalar_lea.vmem [#allocation6], 41
        %v2265 = vld [vmem:[%s2264] ss:$2 sm:$0xf]
        %v2266 = vmax.f32 %v2263, %v2265
        %2267 = vst [vmem:[#allocation4 + $0x19] sm:$0xf] %v2266
        %s2268 = scalar_lea.vmem [#allocation6], 50
        %v2269 = vld [vmem:[%s2268] ss:$2 sm:$0xf]
        %s2270 = scalar_lea.vmem [#allocation6], 51
        %v2271 = vld [vmem:[%s2270] ss:$2 sm:$0xf]
        %v2272 = vmax.f32 %v2269, %v2271
        %2273 = vst [vmem:[#allocation4 + $0x1f] sm:$0xf] %v2272
        %s2274 = scalar_lea.vmem [#allocation6], 60
        %v2275 = vld [vmem:[%s2274] ss:$2 sm:$0xf]
        %s2276 = scalar_lea.vmem [#allocation6], 61
        %v2277 = vld [vmem:[%s2276] ss:$2 sm:$0xf]
        %v2278 = vmax.f32 %v2275, %v2277
        %2279 = vst [vmem:[#allocation4 + $0x25] sm:$0xf] %v2278
        %s2280 = scalar_lea.vmem [#allocation6], 70
        %v2281 = vld [vmem:[%s2280] ss:$2 sm:$0xf]
        %s2282 = scalar_lea.vmem [#allocation6], 71
        %v2283 = vld [vmem:[%s2282] ss:$2 sm:$0xf]
        %v2284 = vmax.f32 %v2281, %v2283
        %2285 = vst [vmem:[#allocation4 + $0x2b] sm:$0xf] %v2284
        %v2286 = vld [vmem:[#allocation4] sm:$0xff]
        %v2287 = vld [vmem:[#allocation4 + $0x8] sm:$0xff]
        %v2288 = vld [vmem:[#allocation4 + $0x10] sm:$0xff]
        %v2289 = vld [vmem:[#allocation4 + $0x18] sm:$0xff]
        %v2290 = vld [vmem:[#allocation4 + $0x20] sm:$0xff]
        %v2291 = vld [vmem:[#allocation4 + $0x28] sm:$0x3f]
        %v2292 = vld [vmem:[#allocation14] sm:$0xff]
        %v2293 = vld [vmem:[#allocation14 + $0x8] sm:$0xff]
        %v2294 = vld [vmem:[#allocation14 + $0x10] sm:$0xff]
        %v2295 = vld [vmem:[#allocation14 + $0x18] sm:$0xff]
        %v2296 = vld [vmem:[#allocation14 + $0x20] sm:$0xff]
        %v2297 = vld [vmem:[#allocation14 + $0x28] sm:$0xff]
        %v2298 = vld [vmem:[#allocation14 + $0x30] sm:$0xff]
        %v2299 = vld [vmem:[#allocation14 + $0x38] sm:$0xff]
        %v2300 = vld [vmem:[#allocation14 + $0x40] sm:$0xff]
        %v2301 = vld [vmem:[#allocation14 + $0x48] sm:$0xff]
        %v2302 = vld [vmem:[#allocation14 + $0x50] sm:$0xff]
        %v2303 = vld [vmem:[#allocation14 + $0x58] sm:$0xff]
        %v2304 = vld [vmem:[#allocation14 + $0x60] sm:$0xff]
        %v2305 = vld [vmem:[#allocation14 + $0x68] sm:$0xff]
        %v2306 = vld [vmem:[#allocation14 + $0x70] sm:$0xff]
        %v2307 = vld [vmem:[#allocation14 + $0x78] sm:$0xff]
        %v2308 = vld [vmem:[#allocation14 + $0x80] sm:$0xff]
        %v2309 = vld [vmem:[#allocation14 + $0x88] sm:$0xff]
        %v2310 = vld [vmem:[#allocation14 + $0x90] sm:$0xff]
        %v2311 = vld [vmem:[#allocation14 + $0x98] sm:$0xff]
        %v2312 = vld [vmem:[#allocation14 + $0xa0] sm:$0xff]
        %v2313 = vld [vmem:[#allocation14 + $0xa8] sm:$0xff]
        %v2314 = vld [vmem:[#allocation14 + $0xb0] sm:$0xff]
        %v2315 = vld [vmem:[#allocation14 + $0xb8] sm:$0xff]
        %v2316 = vld [vmem:[#allocation14 + $0xc0] sm:$0xff]
        %v2317 = vld [vmem:[#allocation14 + $0xc8] sm:$0xff]
        %v2318 = vld [vmem:[#allocation14 + $0xd0] sm:$0xff]
        %v2319 = vld [vmem:[#allocation14 + $0xd8] sm:$0xff]
        %v2320 = vld [vmem:[#allocation14 + $0xe0] sm:$0xff]
        %v2321 = vld [vmem:[#allocation14 + $0xe8] sm:$0xff]
        %v2322 = vld [vmem:[#allocation14 + $0xf0] sm:$0xff]
        %v2323 = vld [vmem:[#allocation14 + $0xf8] sm:$0xff]
        %v2324 = vld [vmem:[#allocation4 + $0x1] sm:$0xff]
        %v2325 = vld [vmem:[#allocation4 + $0x9] sm:$0xff]
        %v2326 = vld [vmem:[#allocation4 + $0x11] sm:$0xff]
        %v2327 = vld [vmem:[#allocation4 + $0x19] sm:$0xff]
        %v2328 = vld [vmem:[#allocation4 + $0x21] sm:$0xff]
        %v2329 = vld [vmem:[#allocation4 + $0x29] sm:$0x3f]
        %s2330 = scalar_lea.vmem [#allocation14], 256
        %v2331 = vld [vmem:[%s2330] sm:$0xff]
        %v2332 = vld [vmem:[%s2330 + $0x8] sm:$0xff]
        %v2333 = vld [vmem:[%s2330 + $0x10] sm:$0xff]
        %v2334 = vld [vmem:[%s2330 + $0x18] sm:$0xff]
        %v2335 = vld [vmem:[%s2330 + $0x20] sm:$0xff]
        %v2336 = vld [vmem:[%s2330 + $0x28] sm:$0xff]
        %v2337 = vld [vmem:[%s2330 + $0x30] sm:$0xff]
        %v2338 = vld [vmem:[%s2330 + $0x38] sm:$0xff]
        %v2339 = vld [vmem:[%s2330 + $0x40] sm:$0xff]
        %v2340 = vld [vmem:[%s2330 + $0x48] sm:$0xff]
        %v2341 = vld [vmem:[%s2330 + $0x50] sm:$0xff]
        %v2342 = vld [vmem:[%s2330 + $0x58] sm:$0xff]
        %v2343 = vld [vmem:[%s2330 + $0x60] sm:$0xff]
        %v2344 = vld [vmem:[%s2330 + $0x68] sm:$0xff]
        %v2345 = vld [vmem:[%s2330 + $0x70] sm:$0xff]
        %v2346 = vld [vmem:[%s2330 + $0x78] sm:$0xff]
        %v2347 = vld [vmem:[%s2330 + $0x80] sm:$0xff]
        %v2348 = vld [vmem:[%s2330 + $0x88] sm:$0xff]
        %v2349 = vld [vmem:[%s2330 + $0x90] sm:$0xff]
        %v2350 = vld [vmem:[%s2330 + $0x98] sm:$0xff]
        %v2351 = vld [vmem:[%s2330 + $0xa0] sm:$0xff]
        %v2352 = vld [vmem:[%s2330 + $0xa8] sm:$0xff]
        %v2353 = vld [vmem:[%s2330 + $0xb0] sm:$0xff]
        %v2354 = vld [vmem:[%s2330 + $0xb8] sm:$0xff]
        %v2355 = vld [vmem:[%s2330 + $0xc0] sm:$0xff]
        %v2356 = vld [vmem:[%s2330 + $0xc8] sm:$0xff]
        %v2357 = vld [vmem:[%s2330 + $0xd0] sm:$0xff]
        %v2358 = vld [vmem:[%s2330 + $0xd8] sm:$0xff]
        %v2359 = vld [vmem:[%s2330 + $0xe0] sm:$0xff]
        %v2360 = vld [vmem:[%s2330 + $0xe8] sm:$0xff]
        %v2361 = vld [vmem:[%s2330 + $0xf0] sm:$0xff]
        %v2362 = vld [vmem:[%s2330 + $0xf8] sm:$0xff]
        %2363 = vmatprep.subr.mxu0 %v2332
        %2364 = vmatpush1.msra.mxu0 %v2331
        %2365 = vmatprep.subr.mxu0 %v2334
        %2366 = vmatpush1.msra.mxu0 %v2333
        %2367 = vmatprep.subr.mxu0 %v2336
        %2368 = vmatpush1.msra.mxu0 %v2335
        %2369 = vmatprep.subr.mxu0 %v2338
        %2370 = vmatpush1.msra.mxu0 %v2337
        %2371 = vmatprep.subr.mxu0 %v2340
        %2372 = vmatpush1.msra.mxu0 %v2339
        %2373 = vmatprep.subr.mxu0 %v2342
        %2374 = vmatpush1.msra.mxu0 %v2341
        %2375 = vmatprep.subr.mxu0 %v2344
        %2376 = vmatpush1.msra.mxu0 %v2343
        %2377 = vmatprep.subr.mxu0 %v2346
        %2378 = vmatpush1.msra.mxu0 %v2345
        %2379 = vmatprep.subr.mxu0 %v2348
        %2380 = vmatpush1.msra.mxu0 %v2347
        %2381 = vmatprep.subr.mxu0 %v2350
        %2382 = vmatpush1.msra.mxu0 %v2349
        %2383 = vmatprep.subr.mxu0 %v2352
        %2384 = vmatpush1.msra.mxu0 %v2351
        %2385 = vmatprep.subr.mxu0 %v2354
        %2386 = vmatpush1.msra.mxu0 %v2353
        %2387 = vmatprep.subr.mxu0 %v2356
        %2388 = vmatpush1.msra.mxu0 %v2355
        %2389 = vmatprep.subr.mxu0 %v2358
        %2390 = vmatpush1.msra.mxu0 %v2357
        %2391 = vmatprep.subr.mxu0 %v2360
        %2392 = vmatpush1.msra.mxu0 %v2359
        %2393 = vmatprep.subr.mxu0 %v2362
        %2394 = vmatpush1.msra.mxu0 %v2361
        %2395 = vmatprep.subr.mxu0 0.0
        %2396 = vmatpush1.msra.mxu0 0.0
        %2397 = vmatprep.subr.mxu0 0.0
        %2398 = vmatpush1.msra.mxu0 0.0
        %2399 = vmatprep.subr.mxu0 0.0
        %2400 = vmatpush1.msra.mxu0 0.0
        %2401 = vmatprep.subr.mxu0 0.0
        %2402 = vmatpush1.msra.mxu0 0.0
        %2403 = vmatprep.subr.mxu0 0.0
        %2404 = vmatpush1.msra.mxu0 0.0
        %2405 = vmatprep.subr.mxu0 0.0
        %2406 = vmatpush1.msra.mxu0 0.0
        %2407 = vmatprep.subr.mxu0 0.0
        %2408 = vmatpush1.msra.mxu0 0.0
        %2409 = vmatprep.subr.mxu0 0.0
        %2410 = vmatpush1.msra.mxu0 0.0
        %2411 = vmatprep.subr.mxu0 0.0
        %2412 = vmatpush1.msra.mxu0 0.0
        %2413 = vmatprep.subr.mxu0 0.0
        %2414 = vmatpush1.msra.mxu0 0.0
        %2415 = vmatprep.subr.mxu0 0.0
        %2416 = vmatpush1.msra.mxu0 0.0
        %2417 = vmatprep.subr.mxu0 0.0
        %2418 = vmatpush1.msra.mxu0 0.0
        %2419 = vmatprep.subr.mxu0 0.0
        %2420 = vmatpush1.msra.mxu0 0.0
        %2421 = vmatprep.subr.mxu0 0.0
        %2422 = vmatpush1.msra.mxu0 0.0
        %2423 = vmatprep.subr.mxu0 0.0
        %2424 = vmatpush1.msra.mxu0 0.0
        %2425 = vmatprep.subr.mxu0 0.0
        %2426 = vmatpush1.msra.mxu0 0.0
        %2427 = vmatprep.mubr.f32.mxu0 0.0
        %2428 = vmatmul.mubr.f32.gmra.mrb[0].mxu0 %v2324
        %v2429 = vpop.f32.mrb[0].mxu0
        %v2430 = vadd.f32 0.0, %v2429
        %v2431 = vpop.f32.mrb[0].mxu0
        %v2432 = vadd.f32 0.0, %v2431
        %2433 = vmatprep.mubr.f32.mxu0 0.0
        %2434 = vmatmul.mubr.f32.gmra.mrb[0].mxu0 %v2325
        %v2435 = vpop.f32.mrb[0].mxu0
        %v2436 = vadd.f32 0.0, %v2435
        %v2437 = vpop.f32.mrb[0].mxu0
        %v2438 = vadd.f32 0.0, %v2437
        %2439 = vmatprep.mubr.f32.mxu0 0.0
        %2440 = vmatmul.mubr.f32.gmra.mrb[0].mxu0 %v2326
        %v2441 = vpop.f32.mrb[0].mxu0
        %v2442 = vadd.f32 0.0, %v2441
        %v2443 = vpop.f32.mrb[0].mxu0
        %v2444 = vadd.f32 0.0, %v2443
        %2445 = vmatprep.mubr.f32.mxu0 0.0
        %2446 = vmatmul.mubr.f32.gmra.mrb[0].mxu0 %v2327
        %v2447 = vpop.f32.mrb[0].mxu0
        %v2448 = vadd.f32 0.0, %v2447
        %v2449 = vpop.f32.mrb[0].mxu0
        %v2450 = vadd.f32 0.0, %v2449
        %2451 = vmatprep.mubr.f32.mxu0 0.0
        %2452 = vmatmul.mubr.f32.gmra.mrb[0].mxu0 %v2328
        %v2453 = vpop.f32.mrb[0].mxu0
        %v2454 = vadd.f32 0.0, %v2453
        %v2455 = vpop.f32.mrb[0].mxu0
        %v2456 = vadd.f32 0.0, %v2455
        %2457 = vmatprep.mubr.f32.mxu0 0.0
        %2458 = vmatmul.mubr.f32.gmra.mrb[0].mxu0 %v2329
        %v2459 = vpop.f32.mrb[0].mxu0
        %v2460 = vadd.f32 0.0, %v2459
        %v2461 = vpop.f32.mrb[0].mxu0
        %v2462 = vadd.f32 0.0, %v2461
        %2463 = vdwg.mxu0
        %2464 = vmatprep.subr.mxu0 %v2293
        %2465 = vmatpush1.msra.mxu0 %v2292
        %2466 = vmatprep.subr.mxu0 %v2295
        %2467 = vmatpush1.msra.mxu0 %v2294
        %2468 = vmatprep.subr.mxu0 %v2297
        %2469 = vmatpush1.msra.mxu0 %v2296
        %2470 = vmatprep.subr.mxu0 %v2299
        %2471 = vmatpush1.msra.mxu0 %v2298
        %2472 = vmatprep.subr.mxu0 %v2301
        %2473 = vmatpush1.msra.mxu0 %v2300
        %2474 = vmatprep.subr.mxu0 %v2303
        %2475 = vmatpush1.msra.mxu0 %v2302
        %2476 = vmatprep.subr.mxu0 %v2305
        %2477 = vmatpush1.msra.mxu0 %v2304
        %2478 = vmatprep.subr.mxu0 %v2307
        %2479 = vmatpush1.msra.mxu0 %v2306
        %2480 = vmatprep.subr.mxu0 %v2309
        %2481 = vmatpush1.msra.mxu0 %v2308
        %2482 = vmatprep.subr.mxu0 %v2311
        %2483 = vmatpush1.msra.mxu0 %v2310
        %2484 = vmatprep.subr.mxu0 %v2313
        %2485 = vmatpush1.msra.mxu0 %v2312
        %2486 = vmatprep.subr.mxu0 %v2315
        %2487 = vmatpush1.msra.mxu0 %v2314
        %2488 = vmatprep.subr.mxu0 %v2317
        %2489 = vmatpush1.msra.mxu0 %v2316
        %2490 = vmatprep.subr.mxu0 %v2319
        %2491 = vmatpush1.msra.mxu0 %v2318
        %2492 = vmatprep.subr.mxu0 %v2321
        %2493 = vmatpush1.msra.mxu0 %v2320
        %2494 = vmatprep.subr.mxu0 %v2323
        %2495 = vmatpush1.msra.mxu0 %v2322
        %2496 = vmatprep.subr.mxu0 0.0
        %2497 = vmatpush1.msra.mxu0 0.0
        %2498 = vmatprep.subr.mxu0 0.0
        %2499 = vmatpush1.msra.mxu0 0.0
        %2500 = vmatprep.subr.mxu0 0.0
        %2501 = vmatpush1.msra.mxu0 0.0
        %2502 = vmatprep.subr.mxu0 0.0
        %2503 = vmatpush1.msra.mxu0 0.0
        %2504 = vmatprep.subr.mxu0 0.0
        %2505 = vmatpush1.msra.mxu0 0.0
        %2506 = vmatprep.subr.mxu0 0.0
        %2507 = vmatpush1.msra.mxu0 0.0
        %2508 = vmatprep.subr.mxu0 0.0
        %2509 = vmatpush1.msra.mxu0 0.0
        %2510 = vmatprep.subr.mxu0 0.0
        %2511 = vmatpush1.msra.mxu0 0.0
        %2512 = vmatprep.subr.mxu0 0.0
        %2513 = vmatpush1.msra.mxu0 0.0
        %2514 = vmatprep.subr.mxu0 0.0
        %2515 = vmatpush1.msra.mxu0 0.0
        %2516 = vmatprep.subr.mxu0 0.0
        %2517 = vmatpush1.msra.mxu0 0.0
        %2518 = vmatprep.subr.mxu0 0.0
        %2519 = vmatpush1.msra.mxu0 0.0
        %2520 = vmatprep.subr.mxu0 0.0
        %2521 = vmatpush1.msra.mxu0 0.0
        %2522 = vmatprep.subr.mxu0 0.0
        %2523 = vmatpush1.msra.mxu0 0.0
        %2524 = vmatprep.subr.mxu0 0.0
        %2525 = vmatpush1.msra.mxu0 0.0
        %2526 = vmatprep.subr.mxu0 0.0
        %2527 = vmatpush1.msra.mxu0 0.0
        %2528 = vmatprep.mubr.f32.mxu0 0.0
        %2529 = vmatmul.mubr.f32.gmra.mrb[0].mxu0 %v2286
        %v2530 = vpop.f32.mrb[0].mxu0
        %v2531 = vadd.f32 %v2430, %v2530
        %v2532 = vpop.f32.mrb[0].mxu0
        %v2533 = vadd.f32 %v2432, %v2532
        %2534 = vmatprep.mubr.f32.mxu0 0.0
        %2535 = vmatmul.mubr.f32.gmra.mrb[0].mxu0 %v2287
        %v2536 = vpop.f32.mrb[0].mxu0
        %v2537 = vadd.f32 %v2436, %v2536
        %v2538 = vpop.f32.mrb[0].mxu0
        %v2539 = vadd.f32 %v2438, %v2538
        %2540 = vmatprep.mubr.f32.mxu0 0.0
        %2541 = vmatmul.mubr.f32.gmra.mrb[0].mxu0 %v2288
        %v2542 = vpop.f32.mrb[0].mxu0
        %v2543 = vadd.f32 %v2442, %v2542
        %v2544 = vpop.f32.mrb[0].mxu0
        %v2545 = vadd.f32 %v2444, %v2544
        %2546 = vmatprep.mubr.f32.mxu0 0.0
        %2547 = vmatmul.mubr.f32.gmra.mrb[0].mxu0 %v2289
        %v2548 = vpop.f32.mrb[0].mxu0
        %v2549 = vadd.f32 %v2448, %v2548
        %v2550 = vpop.f32.mrb[0].mxu0
        %v2551 = vadd.f32 %v2450, %v2550
        %2552 = vmatprep.mubr.f32.mxu0 0.0
        %2553 = vmatmul.mubr.f32.gmra.mrb[0].mxu0 %v2290
        %v2554 = vpop.f32.mrb[0].mxu0
        %v2555 = vadd.f32 %v2454, %v2554
        %v2556 = vpop.f32.mrb[0].mxu0
        %v2557 = vadd.f32 %v2456, %v2556
        %2558 = vmatprep.mubr.f32.mxu0 0.0
        %2559 = vmatmul.mubr.f32.gmra.mrb[0].mxu0 %v2291
        %v2560 = vpop.f32.mrb[0].mxu0
        %v2561 = vadd.f32 %v2460, %v2560
        %v2562 = vpop.f32.mrb[0].mxu0
        %v2563 = vadd.f32 %v2462, %v2562
        %2564 = vdwg.mxu0
        %v2565 = vld [vmem:[#allocation4 + $0x2] sm:$0xff]
        %v2566 = vld [vmem:[#allocation4 + $0xa] sm:$0xff]
        %v2567 = vld [vmem:[#allocation4 + $0x12] sm:$0xff]
        %v2568 = vld [vmem:[#allocation4 + $0x1a] sm:$0xff]
        %v2569 = vld [vmem:[#allocation4 + $0x22] sm:$0xff]
        %v2570 = vld [vmem:[#allocation4 + $0x2a] sm:$0x3f]
        %s2571 = scalar_lea.vmem [#allocation14], 512
        %v2572 = vld [vmem:[%s2571] sm:$0xff]
        %v2573 = vld [vmem:[%s2571 + $0x8] sm:$0xff]
        %v2574 = vld [vmem:[%s2571 + $0x10] sm:$0xff]
        %v2575 = vld [vmem:[%s2571 + $0x18] sm:$0xff]
        %v2576 = vld [vmem:[%s2571 + $0x20] sm:$0xff]
        %v2577 = vld [vmem:[%s2571 + $0x28] sm:$0xff]
        %v2578 = vld [vmem:[%s2571 + $0x30] sm:$0xff]
        %v2579 = vld [vmem:[%s2571 + $0x38] sm:$0xff]
        %v2580 = vld [vmem:[%s2571 + $0x40] sm:$0xff]
        %v2581 = vld [vmem:[%s2571 + $0x48] sm:$0xff]
        %v2582 = vld [vmem:[%s2571 + $0x50] sm:$0xff]
        %v2583 = vld [vmem:[%s2571 + $0x58] sm:$0xff]
        %v2584 = vld [vmem:[%s2571 + $0x60] sm:$0xff]
        %v2585 = vld [vmem:[%s2571 + $0x68] sm:$0xff]
        %v2586 = vld [vmem:[%s2571 + $0x70] sm:$0xff]
        %v2587 = vld [vmem:[%s2571 + $0x78] sm:$0xff]
        %v2588 = vld [vmem:[%s2571 + $0x80] sm:$0xff]
        %v2589 = vld [vmem:[%s2571 + $0x88] sm:$0xff]
        %v2590 = vld [vmem:[%s2571 + $0x90] sm:$0xff]
        %v2591 = vld [vmem:[%s2571 + $0x98] sm:$0xff]
        %v2592 = vld [vmem:[%s2571 + $0xa0] sm:$0xff]
        %v2593 = vld [vmem:[%s2571 + $0xa8] sm:$0xff]
        %v2594 = vld [vmem:[%s2571 + $0xb0] sm:$0xff]
        %v2595 = vld [vmem:[%s2571 + $0xb8] sm:$0xff]
        %v2596 = vld [vmem:[%s2571 + $0xc0] sm:$0xff]
        %v2597 = vld [vmem:[%s2571 + $0xc8] sm:$0xff]
        %v2598 = vld [vmem:[%s2571 + $0xd0] sm:$0xff]
        %v2599 = vld [vmem:[%s2571 + $0xd8] sm:$0xff]
        %v2600 = vld [vmem:[%s2571 + $0xe0] sm:$0xff]
        %v2601 = vld [vmem:[%s2571 + $0xe8] sm:$0xff]
        %v2602 = vld [vmem:[%s2571 + $0xf0] sm:$0xff]
        %v2603 = vld [vmem:[%s2571 + $0xf8] sm:$0xff]
        %2604 = vmatprep.subr.mxu0 %v2573
        %2605 = vmatpush1.msra.mxu0 %v2572
        %2606 = vmatprep.subr.mxu0 %v2575
        %2607 = vmatpush1.msra.mxu0 %v2574
        %2608 = vmatprep.subr.mxu0 %v2577
        %2609 = vmatpush1.msra.mxu0 %v2576
        %2610 = vmatprep.subr.mxu0 %v2579
        %2611 = vmatpush1.msra.mxu0 %v2578
        %2612 = vmatprep.subr.mxu0 %v2581
        %2613 = vmatpush1.msra.mxu0 %v2580
        %2614 = vmatprep.subr.mxu0 %v2583
        %2615 = vmatpush1.msra.mxu0 %v2582
        %2616 = vmatprep.subr.mxu0 %v2585
        %2617 = vmatpush1.msra.mxu0 %v2584
        %2618 = vmatprep.subr.mxu0 %v2587
        %2619 = vmatpush1.msra.mxu0 %v2586
        %2620 = vmatprep.subr.mxu0 %v2589
        %2621 = vmatpush1.msra.mxu0 %v2588
        %2622 = vmatprep.subr.mxu0 %v2591
        %2623 = vmatpush1.msra.mxu0 %v2590
        %2624 = vmatprep.subr.mxu0 %v2593
        %2625 = vmatpush1.msra.mxu0 %v2592
        %2626 = vmatprep.subr.mxu0 %v2595
        %2627 = vmatpush1.msra.mxu0 %v2594
        %2628 = vmatprep.subr.mxu0 %v2597
        %2629 = vmatpush1.msra.mxu0 %v2596
        %2630 = vmatprep.subr.mxu0 %v2599
        %2631 = vmatpush1.msra.mxu0 %v2598
        %2632 = vmatprep.subr.mxu0 %v2601
        %2633 = vmatpush1.msra.mxu0 %v2600
        %2634 = vmatprep.subr.mxu0 %v2603
        %2635 = vmatpush1.msra.mxu0 %v2602
        %2636 = vmatprep.subr.mxu0 0.0
        %2637 = vmatpush1.msra.mxu0 0.0
        %2638 = vmatprep.subr.mxu0 0.0
        %2639 = vmatpush1.msra.mxu0 0.0
        %2640 = vmatprep.subr.mxu0 0.0
        %2641 = vmatpush1.msra.mxu0 0.0
        %2642 = vmatprep.subr.mxu0 0.0
        %2643 = vmatpush1.msra.mxu0 0.0
        %2644 = vmatprep.subr.mxu0 0.0
        %2645 = vmatpush1.msra.mxu0 0.0
        %2646 = vmatprep.subr.mxu0 0.0
        %2647 = vmatpush1.msra.mxu0 0.0
        %2648 = vmatprep.subr.mxu0 0.0
        %2649 = vmatpush1.msra.mxu0 0.0
        %2650 = vmatprep.subr.mxu0 0.0
        %2651 = vmatpush1.msra.mxu0 0.0
        %2652 = vmatprep.subr.mxu0 0.0
        %2653 = vmatpush1.msra.mxu0 0.0
        %2654 = vmatprep.subr.mxu0 0.0
        %2655 = vmatpush1.msra.mxu0 0.0
        %2656 = vmatprep.subr.mxu0 0.0
        %2657 = vmatpush1.msra.mxu0 0.0
        %2658 = vmatprep.subr.mxu0 0.0
        %2659 = vmatpush1.msra.mxu0 0.0
        %2660 = vmatprep.subr.mxu0 0.0
        %2661 = vmatpush1.msra.mxu0 0.0
        %2662 = vmatprep.subr.mxu0 0.0
        %2663 = vmatpush1.msra.mxu0 0.0
        %2664 = vmatprep.subr.mxu0 0.0
        %2665 = vmatpush1.msra.mxu0 0.0
        %2666 = vmatprep.subr.mxu0 0.0
        %2667 = vmatpush1.msra.mxu0 0.0
        %2668 = vmatprep.mubr.f32.mxu0 0.0
        %2669 = vmatmul.mubr.f32.gmra.mrb[0].mxu0 %v2565
        %v2670 = vpop.f32.mrb[0].mxu0
        %v2671 = vadd.f32 0.0, %v2670
        %v2672 = vpop.f32.mrb[0].mxu0
        %v2673 = vadd.f32 0.0, %v2672
        %2674 = vmatprep.mubr.f32.mxu0 0.0
        %2675 = vmatmul.mubr.f32.gmra.mrb[0].mxu0 %v2566
        %v2676 = vpop.f32.mrb[0].mxu0
        %v2677 = vadd.f32 0.0, %v2676
        %v2678 = vpop.f32.mrb[0].mxu0
        %v2679 = vadd.f32 0.0, %v2678
        %2680 = vmatprep.mubr.f32.mxu0 0.0
        %2681 = vmatmul.mubr.f32.gmra.mrb[0].mxu0 %v2567
        %v2682 = vpop.f32.mrb[0].mxu0
        %v2683 = vadd.f32 0.0, %v2682
        %v2684 = vpop.f32.mrb[0].mxu0
        %v2685 = vadd.f32 0.0, %v2684
        %2686 = vmatprep.mubr.f32.mxu0 0.0
        %2687 = vmatmul.mubr.f32.gmra.mrb[0].mxu0 %v2568
        %v2688 = vpop.f32.mrb[0].mxu0
        %v2689 = vadd.f32 0.0, %v2688
        %v2690 = vpop.f32.mrb[0].mxu0
        %v2691 = vadd.f32 0.0, %v2690
        %2692 = vmatprep.mubr.f32.mxu0 0.0
        %2693 = vmatmul.mubr.f32.gmra.mrb[0].mxu0 %v2569
        %v2694 = vpop.f32.mrb[0].mxu0
        %v2695 = vadd.f32 0.0, %v2694
        %v2696 = vpop.f32.mrb[0].mxu0
        %v2697 = vadd.f32 0.0, %v2696
        %2698 = vmatprep.mubr.f32.mxu0 0.0
        %2699 = vmatmul.mubr.f32.gmra.mrb[0].mxu0 %v2570
        %v2700 = vpop.f32.mrb[0].mxu0
        %v2701 = vadd.f32 0.0, %v2700
        %v2702 = vpop.f32.mrb[0].mxu0
        %v2703 = vadd.f32 0.0, %v2702
        %2704 = vdwg.mxu0
        %v2705 = vadd.f32 %v2531, %v2671
        %v2706 = vadd.f32 %v2533, %v2673
        %v2707 = vadd.f32 %v2537, %v2677
        %v2708 = vadd.f32 %v2539, %v2679
        %v2709 = vadd.f32 %v2543, %v2683
        %v2710 = vadd.f32 %v2545, %v2685
        %v2711 = vadd.f32 %v2549, %v2689
        %v2712 = vadd.f32 %v2551, %v2691
        %v2713 = vadd.f32 %v2555, %v2695
        %v2714 = vadd.f32 %v2557, %v2697
        %v2715 = vadd.f32 %v2561, %v2701
        %v2716 = vadd.f32 %v2563, %v2703
        %v2717 = vld [vmem:[%s8] sm:$0x3]
        %v2719 = vlaneseq
        %v2720 = vshrl.u32 %v2719, 7
        %v2721 = vsub.s32 0, %v2720
        %v2722 = vrot.slane %v2717, %v2721
        %v2723 = vlaneseq
        %v2724 = vshrl.u32 %v2723, 7
        %v2725 = vsub.s32 1, %v2724
        %v2726 = vrot.slane %v2717, %v2725
        %v2729 = vmul.f32 %v2705, %v2722
        %v2730 = vmul.f32 %v2706, %v2726
        %v2731 = vmul.f32 %v2707, %v2722
        %v2732 = vmul.f32 %v2708, %v2726
        %v2733 = vmul.f32 %v2709, %v2722
        %v2734 = vmul.f32 %v2710, %v2726
        %v2735 = vmul.f32 %v2711, %v2722
        %v2736 = vmul.f32 %v2712, %v2726
        %v2737 = vmul.f32 %v2713, %v2722
        %v2738 = vmul.f32 %v2714, %v2726
        %v2739 = vmul.f32 %v2715, %v2722
        %v2740 = vmul.f32 %v2716, %v2726
        %v2741 = vld [vmem:[%s9] sm:$0x3]
        %v2743 = vlaneseq
        %v2744 = vshrl.u32 %v2743, 7
        %v2745 = vsub.s32 0, %v2744
        %v2746 = vrot.slane %v2741, %v2745
        %v2747 = vlaneseq
        %v2748 = vshrl.u32 %v2747, 7
        %v2749 = vsub.s32 1, %v2748
        %v2750 = vrot.slane %v2741, %v2749
        %v2753 = vadd.f32 %v2729, %v2746
        %v2754 = vadd.f32 %v2730, %v2750
        %v2755 = vadd.f32 %v2731, %v2746
        %v2756 = vadd.f32 %v2732, %v2750
        %v2757 = vadd.f32 %v2733, %v2746
        %v2758 = vadd.f32 %v2734, %v2750
        %v2759 = vadd.f32 %v2735, %v2746
        %v2760 = vadd.f32 %v2736, %v2750
        %v2761 = vadd.f32 %v2737, %v2746
        %v2762 = vadd.f32 %v2738, %v2750
        %v2763 = vadd.f32 %v2739, %v2746
        %v2764 = vadd.f32 %v2740, %v2750
        %v2765 = vmax.f32 %v2753, 0.0
        %v2766 = vmax.f32 %v2754, 0.0
        %v2767 = vmax.f32 %v2755, 0.0
        %v2768 = vmax.f32 %v2756, 0.0
        %v2769 = vmax.f32 %v2757, 0.0
        %v2770 = vmax.f32 %v2758, 0.0
        %v2771 = vmax.f32 %v2759, 0.0
        %v2772 = vmax.f32 %v2760, 0.0
        %v2773 = vmax.f32 %v2761, 0.0
        %v2774 = vmax.f32 %v2762, 0.0
        %v2775 = vmax.f32 %v2763, 0.0
        %v2776 = vmax.f32 %v2764, 0.0
        %v2779 = vrot.slane %v2765, 7
        %v2780 = vrot.slane %v2766, 7
        %2783 = vst [vmem:[#allocation5] sm:$0x1e] %v2779
        %2784 = vst [vmem:[#allocation5 + $0x8] sm:$0x1e] %v2780
        %vm2787 = vcmask 1040384
        %v2788 = vrot.slane %v2767, 7
        %v2789 = vsel %vm2787, %v2779, %v2788
        %v2790 = vrot.slane %v2768, 7
        %v2791 = vsel %vm2787, %v2780, %v2790
        %2794 = vst [vmem:[#allocation5] sm:$0x80] %v2779
        %2795 = vst [vmem:[#allocation5 + $0x8] sm:$0x80] %v2780
        %2796 = vst [vmem:[#allocation5 + $0x10] sm:$0x7] %v2789
        %2797 = vst [vmem:[#allocation5 + $0x18] sm:$0x7] %v2791
        %2800 = vst [vmem:[#allocation5 + $0x10] sm:$0xe0] %v2788
        %2801 = vst [vmem:[#allocation5 + $0x18] sm:$0xe0] %v2790
        %2802 = vst [vmem:[#allocation5 + $0x20] sm:$0x1] %v2788
        %2803 = vst [vmem:[#allocation5 + $0x28] sm:$0x1] %v2790
        %v2806 = vrot.slane %v2769, 7
        %v2807 = vrot.slane %v2770, 7
        %2810 = vst [vmem:[#allocation5 + $0x20] sm:$0x78] %v2806
        %2811 = vst [vmem:[#allocation5 + $0x28] sm:$0x78] %v2807
        %v2814 = vrot.slane %v2771, 7
        %v2815 = vrot.slane %v2772, 7
        %2818 = vst [vmem:[#allocation5 + $0x30] sm:$0x1e] %v2814
        %2819 = vst [vmem:[#allocation5 + $0x38] sm:$0x1e] %v2815
        %v2822 = vrot.slane %v2773, 7
        %v2823 = vsel %vm2787, %v2814, %v2822
        %v2824 = vrot.slane %v2774, 7
        %v2825 = vsel %vm2787, %v2815, %v2824
        %2828 = vst [vmem:[#allocation5 + $0x30] sm:$0x80] %v2814
        %2829 = vst [vmem:[#allocation5 + $0x38] sm:$0x80] %v2815
        %2830 = vst [vmem:[#allocation5 + $0x40] sm:$0x7] %v2823
        %2831 = vst [vmem:[#allocation5 + $0x48] sm:$0x7] %v2825
        %2834 = vst [vmem:[#allocation5 + $0x40] sm:$0xe0] %v2822
        %2835 = vst [vmem:[#allocation5 + $0x48] sm:$0xe0] %v2824
        %2836 = vst [vmem:[#allocation5 + $0x50] sm:$0x1] %v2822
        %2837 = vst [vmem:[#allocation5 + $0x58] sm:$0x1] %v2824
        %v2840 = vrot.slane %v2775, 7
        %v2841 = vrot.slane %v2776, 7
        %2844 = vst [vmem:[#allocation5 + $0x50] sm:$0x78] %v2840
        %2845 = vst [vmem:[#allocation5 + $0x58] sm:$0x78] %v2841
        %v2846 = vld [vmem:[#allocation5] sm:$0xff]
        %v2847 = vld [vmem:[#allocation5 + $0x8] sm:$0xff]
        %v2848 = vld [vmem:[#allocation5 + $0x10] sm:$0xff]
        %v2849 = vld [vmem:[#allocation5 + $0x18] sm:$0xff]
        %v2850 = vld [vmem:[#allocation5 + $0x20] sm:$0xff]
        %v2851 = vld [vmem:[#allocation5 + $0x28] sm:$0xff]
        %v2852 = vld [vmem:[#allocation5 + $0x30] sm:$0xff]
        %v2853 = vld [vmem:[#allocation5 + $0x38] sm:$0xff]
        %v2854 = vld [vmem:[#allocation5 + $0x40] sm:$0xff]
        %v2855 = vld [vmem:[#allocation5 + $0x48] sm:$0xff]
        %v2856 = vld [vmem:[#allocation5 + $0x50] sm:$0x3f]
        %v2857 = vld [vmem:[#allocation5 + $0x58] sm:$0x3f]
        %v2858 = vld [vmem:[#allocation16] sm:$0xff]
        %v2859 = vld [vmem:[#allocation16 + $0x8] sm:$0xff]
        %v2860 = vld [vmem:[#allocation16 + $0x10] sm:$0xff]
        %v2861 = vld [vmem:[#allocation16 + $0x18] sm:$0xff]
        %v2862 = vld [vmem:[#allocation16 + $0x20] sm:$0xff]
        %v2863 = vld [vmem:[#allocation16 + $0x28] sm:$0xff]
        %v2864 = vld [vmem:[#allocation16 + $0x30] sm:$0xff]
        %v2865 = vld [vmem:[#allocation16 + $0x38] sm:$0xff]
        %v2866 = vld [vmem:[#allocation16 + $0x40] sm:$0xff]
        %v2867 = vld [vmem:[#allocation16 + $0x48] sm:$0xff]
        %v2868 = vld [vmem:[#allocation16 + $0x50] sm:$0xff]
        %v2869 = vld [vmem:[#allocation16 + $0x58] sm:$0xff]
        %v2870 = vld [vmem:[#allocation16 + $0x60] sm:$0xff]
        %v2871 = vld [vmem:[#allocation16 + $0x68] sm:$0xff]
        %v2872 = vld [vmem:[#allocation16 + $0x70] sm:$0xff]
        %v2873 = vld [vmem:[#allocation16 + $0x78] sm:$0xff]
        %v2874 = vld [vmem:[#allocation16 + $0x80] sm:$0xff]
        %v2875 = vld [vmem:[#allocation16 + $0x88] sm:$0xff]
        %v2876 = vld [vmem:[#allocation16 + $0x90] sm:$0xff]
        %v2877 = vld [vmem:[#allocation16 + $0x98] sm:$0xff]
        %v2878 = vld [vmem:[#allocation16 + $0xa0] sm:$0xff]
        %v2879 = vld [vmem:[#allocation16 + $0xa8] sm:$0xff]
        %v2880 = vld [vmem:[#allocation16 + $0xb0] sm:$0xff]
        %v2881 = vld [vmem:[#allocation16 + $0xb8] sm:$0xff]
        %v2882 = vld [vmem:[#allocation16 + $0xc0] sm:$0xff]
        %v2883 = vld [vmem:[#allocation16 + $0xc8] sm:$0xff]
        %v2884 = vld [vmem:[#allocation16 + $0xd0] sm:$0xff]
        %v2885 = vld [vmem:[#allocation16 + $0xd8] sm:$0xff]
        %v2886 = vld [vmem:[#allocation16 + $0xe0] sm:$0xff]
        %v2887 = vld [vmem:[#allocation16 + $0xe8] sm:$0xff]
        %v2888 = vld [vmem:[#allocation16 + $0xf0] sm:$0xff]
        %v2889 = vld [vmem:[#allocation16 + $0xf8] sm:$0xff]
        %v2890 = vld [vmem:[#allocation16 + $0x100] sm:$0xff]
        %v2891 = vld [vmem:[#allocation16 + $0x108] sm:$0xff]
        %v2892 = vld [vmem:[#allocation16 + $0x110] sm:$0xff]
        %v2893 = vld [vmem:[#allocation16 + $0x118] sm:$0xff]
        %v2894 = vld [vmem:[#allocation16 + $0x120] sm:$0xff]
        %v2895 = vld [vmem:[#allocation16 + $0x128] sm:$0xff]
        %v2896 = vld [vmem:[#allocation16 + $0x130] sm:$0xff]
        %v2897 = vld [vmem:[#allocation16 + $0x138] sm:$0xff]
        %v2898 = vld [vmem:[#allocation16 + $0x140] sm:$0xff]
        %v2899 = vld [vmem:[#allocation16 + $0x148] sm:$0xff]
        %v2900 = vld [vmem:[#allocation16 + $0x150] sm:$0xff]
        %v2901 = vld [vmem:[#allocation16 + $0x158] sm:$0xff]
        %v2902 = vld [vmem:[#allocation16 + $0x160] sm:$0xff]
        %v2903 = vld [vmem:[#allocation16 + $0x168] sm:$0xff]
        %v2904 = vld [vmem:[#allocation16 + $0x170] sm:$0xff]
        %v2905 = vld [vmem:[#allocation16 + $0x178] sm:$0xff]
        %v2906 = vld [vmem:[#allocation16 + $0x180] sm:$0xff]
        %v2907 = vld [vmem:[#allocation16 + $0x188] sm:$0xff]
        %v2908 = vld [vmem:[#allocation16 + $0x190] sm:$0xff]
        %v2909 = vld [vmem:[#allocation16 + $0x198] sm:$0xff]
        %v2910 = vld [vmem:[#allocation16 + $0x1a0] sm:$0xff]
        %v2911 = vld [vmem:[#allocation16 + $0x1a8] sm:$0xff]
        %v2912 = vld [vmem:[#allocation16 + $0x1b0] sm:$0xff]
        %v2913 = vld [vmem:[#allocation16 + $0x1b8] sm:$0xff]
        %v2914 = vld [vmem:[#allocation16 + $0x1c0] sm:$0xff]
        %v2915 = vld [vmem:[#allocation16 + $0x1c8] sm:$0xff]
        %v2916 = vld [vmem:[#allocation16 + $0x1d0] sm:$0xff]
        %v2917 = vld [vmem:[#allocation16 + $0x1d8] sm:$0xff]
        %v2918 = vld [vmem:[#allocation16 + $0x1e0] sm:$0xff]
        %v2919 = vld [vmem:[#allocation16 + $0x1e8] sm:$0xff]
        %v2920 = vld [vmem:[#allocation16 + $0x1f0] sm:$0xff]
        %v2921 = vld [vmem:[#allocation16 + $0x1f8] sm:$0xff]
        %v2922 = vld [vmem:[#allocation5] sm:$0xfe]
        %v2923 = vld [vmem:[#allocation5 + $0x8] sm:$0xfe]
        %v2924 = vld [vmem:[#allocation5 + $0x50] sm:$0x7f]
        %v2925 = vld [vmem:[#allocation5 + $0x58] sm:$0x7f]
        %s2926 = scalar_lea.vmem [#allocation16], 512
        %v2927 = vld [vmem:[%s2926] sm:$0xff]
        %v2928 = vld [vmem:[%s2926 + $0x8] sm:$0xff]
        %v2929 = vld [vmem:[%s2926 + $0x10] sm:$0xff]
        %v2930 = vld [vmem:[%s2926 + $0x18] sm:$0xff]
        %v2931 = vld [vmem:[%s2926 + $0x20] sm:$0xff]
        %v2932 = vld [vmem:[%s2926 + $0x28] sm:$0xff]
        %v2933 = vld [vmem:[%s2926 + $0x30] sm:$0xff]
        %v2934 = vld [vmem:[%s2926 + $0x38] sm:$0xff]
        %v2935 = vld [vmem:[%s2926 + $0x40] sm:$0xff]
        %v2936 = vld [vmem:[%s2926 + $0x48] sm:$0xff]
        %v2937 = vld [vmem:[%s2926 + $0x50] sm:$0xff]
        %v2938 = vld [vmem:[%s2926 + $0x58] sm:$0xff]
        %v2939 = vld [vmem:[%s2926 + $0x60] sm:$0xff]
        %v2940 = vld [vmem:[%s2926 + $0x68] sm:$0xff]
        %v2941 = vld [vmem:[%s2926 + $0x70] sm:$0xff]
        %v2942 = vld [vmem:[%s2926 + $0x78] sm:$0xff]
        %v2943 = vld [vmem:[%s2926 + $0x80] sm:$0xff]
        %v2944 = vld [vmem:[%s2926 + $0x88] sm:$0xff]
        %v2945 = vld [vmem:[%s2926 + $0x90] sm:$0xff]
        %v2946 = vld [vmem:[%s2926 + $0x98] sm:$0xff]
        %v2947 = vld [vmem:[%s2926 + $0xa0] sm:$0xff]
        %v2948 = vld [vmem:[%s2926 + $0xa8] sm:$0xff]
        %v2949 = vld [vmem:[%s2926 + $0xb0] sm:$0xff]
        %v2950 = vld [vmem:[%s2926 + $0xb8] sm:$0xff]
        %v2951 = vld [vmem:[%s2926 + $0xc0] sm:$0xff]
        %v2952 = vld [vmem:[%s2926 + $0xc8] sm:$0xff]
        %v2953 = vld [vmem:[%s2926 + $0xd0] sm:$0xff]
        %v2954 = vld [vmem:[%s2926 + $0xd8] sm:$0xff]
        %v2955 = vld [vmem:[%s2926 + $0xe0] sm:$0xff]
        %v2956 = vld [vmem:[%s2926 + $0xe8] sm:$0xff]
        %v2957 = vld [vmem:[%s2926 + $0xf0] sm:$0xff]
        %v2958 = vld [vmem:[%s2926 + $0xf8] sm:$0xff]
        %v2959 = vld [vmem:[%s2926 + $0x100] sm:$0xff]
        %v2960 = vld [vmem:[%s2926 + $0x108] sm:$0xff]
        %v2961 = vld [vmem:[%s2926 + $0x110] sm:$0xff]
        %v2962 = vld [vmem:[%s2926 + $0x118] sm:$0xff]
        %v2963 = vld [vmem:[%s2926 + $0x120] sm:$0xff]
        %v2964 = vld [vmem:[%s2926 + $0x128] sm:$0xff]
        %v2965 = vld [vmem:[%s2926 + $0x130] sm:$0xff]
        %v2966 = vld [vmem:[%s2926 + $0x138] sm:$0xff]
        %v2967 = vld [vmem:[%s2926 + $0x140] sm:$0xff]
        %v2968 = vld [vmem:[%s2926 + $0x148] sm:$0xff]
        %v2969 = vld [vmem:[%s2926 + $0x150] sm:$0xff]
        %v2970 = vld [vmem:[%s2926 + $0x158] sm:$0xff]
        %v2971 = vld [vmem:[%s2926 + $0x160] sm:$0xff]
        %v2972 = vld [vmem:[%s2926 + $0x168] sm:$0xff]
        %v2973 = vld [vmem:[%s2926 + $0x170] sm:$0xff]
        %v2974 = vld [vmem:[%s2926 + $0x178] sm:$0xff]
        %v2975 = vld [vmem:[%s2926 + $0x180] sm:$0xff]
        %v2976 = vld [vmem:[%s2926 + $0x188] sm:$0xff]
        %v2977 = vld [vmem:[%s2926 + $0x190] sm:$0xff]
        %v2978 = vld [vmem:[%s2926 + $0x198] sm:$0xff]
        %v2979 = vld [vmem:[%s2926 + $0x1a0] sm:$0xff]
        %v2980 = vld [vmem:[%s2926 + $0x1a8] sm:$0xff]
        %v2981 = vld [vmem:[%s2926 + $0x1b0] sm:$0xff]
        %v2982 = vld [vmem:[%s2926 + $0x1b8] sm:$0xff]
        %v2983 = vld [vmem:[%s2926 + $0x1c0] sm:$0xff]
        %v2984 = vld [vmem:[%s2926 + $0x1c8] sm:$0xff]
        %v2985 = vld [vmem:[%s2926 + $0x1d0] sm:$0xff]
        %v2986 = vld [vmem:[%s2926 + $0x1d8] sm:$0xff]
        %v2987 = vld [vmem:[%s2926 + $0x1e0] sm:$0xff]
        %v2988 = vld [vmem:[%s2926 + $0x1e8] sm:$0xff]
        %v2989 = vld [vmem:[%s2926 + $0x1f0] sm:$0xff]
        %v2990 = vld [vmem:[%s2926 + $0x1f8] sm:$0xff]
        %vm3003 = vcmask 1046528
        %v3004 = vrot.slane %v2922, 1
        %v3005 = vrot.slane %v2848, 1
        %v3006 = vsel %vm3003, %v3004, %v3005
        %v3007 = vrot.slane %v2923, 1
        %v3008 = vrot.slane %v2849, 1
        %v3009 = vsel %vm3003, %v3007, %v3008
        %v3010 = vrot.slane %v2850, 1
        %v3011 = vsel %vm3003, %v3005, %v3010
        %v3012 = vrot.slane %v2851, 1
        %v3013 = vsel %vm3003, %v3008, %v3012
        %v3014 = vrot.slane %v2852, 1
        %v3015 = vsel %vm3003, %v3010, %v3014
        %v3016 = vrot.slane %v2853, 1
        %v3017 = vsel %vm3003, %v3012, %v3016
        %v3018 = vrot.slane %v2854, 1
        %v3019 = vsel %vm3003, %v3014, %v3018
        %v3020 = vrot.slane %v2855, 1
        %v3021 = vsel %vm3003, %v3016, %v3020
        %v3022 = vrot.slane %v2924, 1
        %v3023 = vsel %vm3003, %v3018, %v3022
        %v3024 = vrot.slane %v2925, 1
        %v3025 = vsel %vm3003, %v3020, %v3024
        %3038 = vmatprep.subr.mxu0 %v2928
        %3039 = vmatpush1.msra.mxu0 %v2927
        %3040 = vmatprep.subr.mxu0 %v2930
        %3041 = vmatpush1.msra.mxu0 %v2929
        %3042 = vmatprep.subr.mxu0 %v2932
        %3043 = vmatpush1.msra.mxu0 %v2931
        %3044 = vmatprep.subr.mxu0 %v2934
        %3045 = vmatpush1.msra.mxu0 %v2933
        %3046 = vmatprep.subr.mxu0 %v2936
        %3047 = vmatpush1.msra.mxu0 %v2935
        %3048 = vmatprep.subr.mxu0 %v2938
        %3049 = vmatpush1.msra.mxu0 %v2937
        %3050 = vmatprep.subr.mxu0 %v2940
        %3051 = vmatpush1.msra.mxu0 %v2939
        %3052 = vmatprep.subr.mxu0 %v2942
        %3053 = vmatpush1.msra.mxu0 %v2941
        %3054 = vmatprep.subr.mxu0 %v2944
        %3055 = vmatpush1.msra.mxu0 %v2943
        %3056 = vmatprep.subr.mxu0 %v2946
        %3057 = vmatpush1.msra.mxu0 %v2945
        %3058 = vmatprep.subr.mxu0 %v2948
        %3059 = vmatpush1.msra.mxu0 %v2947
        %3060 = vmatprep.subr.mxu0 %v2950
        %3061 = vmatpush1.msra.mxu0 %v2949
        %3062 = vmatprep.subr.mxu0 %v2952
        %3063 = vmatpush1.msra.mxu0 %v2951
        %3064 = vmatprep.subr.mxu0 %v2954
        %3065 = vmatpush1.msra.mxu0 %v2953
        %3066 = vmatprep.subr.mxu0 %v2956
        %3067 = vmatpush1.msra.mxu0 %v2955
        %3068 = vmatprep.subr.mxu0 %v2958
        %3069 = vmatpush1.msra.mxu0 %v2957
        %3070 = vmatprep.subr.mxu0 %v2960
        %3071 = vmatpush1.msra.mxu0 %v2959
        %3072 = vmatprep.subr.mxu0 %v2962
        %3073 = vmatpush1.msra.mxu0 %v2961
        %3074 = vmatprep.subr.mxu0 %v2964
        %3075 = vmatpush1.msra.mxu0 %v2963
        %3076 = vmatprep.subr.mxu0 %v2966
        %3077 = vmatpush1.msra.mxu0 %v2965
        %3078 = vmatprep.subr.mxu0 %v2968
        %3079 = vmatpush1.msra.mxu0 %v2967
        %3080 = vmatprep.subr.mxu0 %v2970
        %3081 = vmatpush1.msra.mxu0 %v2969
        %3082 = vmatprep.subr.mxu0 %v2972
        %3083 = vmatpush1.msra.mxu0 %v2971
        %3084 = vmatprep.subr.mxu0 %v2974
        %3085 = vmatpush1.msra.mxu0 %v2973
        %3086 = vmatprep.subr.mxu0 %v2976
        %3087 = vmatpush1.msra.mxu0 %v2975
        %3088 = vmatprep.subr.mxu0 %v2978
        %3089 = vmatpush1.msra.mxu0 %v2977
        %3090 = vmatprep.subr.mxu0 %v2980
        %3091 = vmatpush1.msra.mxu0 %v2979
        %3092 = vmatprep.subr.mxu0 %v2982
        %3093 = vmatpush1.msra.mxu0 %v2981
        %3094 = vmatprep.subr.mxu0 %v2984
        %3095 = vmatpush1.msra.mxu0 %v2983
        %3096 = vmatprep.subr.mxu0 %v2986
        %3097 = vmatpush1.msra.mxu0 %v2985
        %3098 = vmatprep.subr.mxu0 %v2988
        %3099 = vmatpush1.msra.mxu0 %v2987
        %3100 = vmatprep.subr.mxu0 %v2990
        %3101 = vmatpush1.msra.mxu0 %v2989
        %3102 = vmatprep.mubr.f32.mxu0 %v3009
        %3103 = vmatmul.mubr.f32.gmra.mrb[0].mxu0 %v3006
        %v3104 = vpop.f32.mrb[0].mxu0
        %v3105 = vadd.f32 0.0, %v3104
        %v3106 = vpop.f32.mrb[0].mxu0
        %v3107 = vadd.f32 0.0, %v3106
        %3108 = vmatprep.mubr.f32.mxu0 %v3013
        %3109 = vmatmul.mubr.f32.gmra.mrb[0].mxu0 %v3011
        %v3110 = vpop.f32.mrb[0].mxu0
        %v3111 = vadd.f32 0.0, %v3110
        %v3112 = vpop.f32.mrb[0].mxu0
        %v3113 = vadd.f32 0.0, %v3112
        %3114 = vmatprep.mubr.f32.mxu0 %v3017
        %3115 = vmatmul.mubr.f32.gmra.mrb[0].mxu0 %v3015
        %v3116 = vpop.f32.mrb[0].mxu0
        %v3117 = vadd.f32 0.0, %v3116
        %v3118 = vpop.f32.mrb[0].mxu0
        %v3119 = vadd.f32 0.0, %v3118
        %3120 = vmatprep.mubr.f32.mxu0 %v3021
        %3121 = vmatmul.mubr.f32.gmra.mrb[0].mxu0 %v3019
        %v3122 = vpop.f32.mrb[0].mxu0
        %v3123 = vadd.f32 0.0, %v3122
        %v3124 = vpop.f32.mrb[0].mxu0
        %v3125 = vadd.f32 0.0, %v3124
        %3126 = vmatprep.mubr.f32.mxu0 %v3025
        %3127 = vmatmul.mubr.f32.gmra.mrb[0].mxu0 %v3023
        %v3128 = vpop.f32.mrb[0].mxu0
        %v3129 = vadd.f32 0.0, %v3128
        %v3130 = vpop.f32.mrb[0].mxu0
        %v3131 = vadd.f32 0.0, %v3130
        %3132 = vmatprep.mubr.f32.mxu0 %v3024
        %3133 = vmatmul.mubr.f32.gmra.mrb[0].mxu0 %v3022
        %v3134 = vpop.f32.mrb[0].mxu0
        %v3135 = vadd.f32 0.0, %v3134
        %v3136 = vpop.f32.mrb[0].mxu0
        %v3137 = vadd.f32 0.0, %v3136
        %3138 = vdwg.mxu0
        %3139 = vmatprep.subr.mxu0 %v2859
        %3140 = vmatpush1.msra.mxu0 %v2858
        %3141 = vmatprep.subr.mxu0 %v2861
        %3142 = vmatpush1.msra.mxu0 %v2860
        %3143 = vmatprep.subr.mxu0 %v2863
        %3144 = vmatpush1.msra.mxu0 %v2862
        %3145 = vmatprep.subr.mxu0 %v2865
        %3146 = vmatpush1.msra.mxu0 %v2864
        %3147 = vmatprep.subr.mxu0 %v2867
        %3148 = vmatpush1.msra.mxu0 %v2866
        %3149 = vmatprep.subr.mxu0 %v2869
        %3150 = vmatpush1.msra.mxu0 %v2868
        %3151 = vmatprep.subr.mxu0 %v2871
        %3152 = vmatpush1.msra.mxu0 %v2870
        %3153 = vmatprep.subr.mxu0 %v2873
        %3154 = vmatpush1.msra.mxu0 %v2872
        %3155 = vmatprep.subr.mxu0 %v2875
        %3156 = vmatpush1.msra.mxu0 %v2874
        %3157 = vmatprep.subr.mxu0 %v2877
        %3158 = vmatpush1.msra.mxu0 %v2876
        %3159 = vmatprep.subr.mxu0 %v2879
        %3160 = vmatpush1.msra.mxu0 %v2878
        %3161 = vmatprep.subr.mxu0 %v2881
        %3162 = vmatpush1.msra.mxu0 %v2880
        %3163 = vmatprep.subr.mxu0 %v2883
        %3164 = vmatpush1.msra.mxu0 %v2882
        %3165 = vmatprep.subr.mxu0 %v2885
        %3166 = vmatpush1.msra.mxu0 %v2884
        %3167 = vmatprep.subr.mxu0 %v2887
        %3168 = vmatpush1.msra.mxu0 %v2886
        %3169 = vmatprep.subr.mxu0 %v2889
        %3170 = vmatpush1.msra.mxu0 %v2888
        %3171 = vmatprep.subr.mxu0 %v2891
        %3172 = vmatpush1.msra.mxu0 %v2890
        %3173 = vmatprep.subr.mxu0 %v2893
        %3174 = vmatpush1.msra.mxu0 %v2892
        %3175 = vmatprep.subr.mxu0 %v2895
        %3176 = vmatpush1.msra.mxu0 %v2894
        %3177 = vmatprep.subr.mxu0 %v2897
        %3178 = vmatpush1.msra.mxu0 %v2896
        %3179 = vmatprep.subr.mxu0 %v2899
        %3180 = vmatpush1.msra.mxu0 %v2898
        %3181 = vmatprep.subr.mxu0 %v2901
        %3182 = vmatpush1.msra.mxu0 %v2900
        %3183 = vmatprep.subr.mxu0 %v2903
        %3184 = vmatpush1.msra.mxu0 %v2902
        %3185 = vmatprep.subr.mxu0 %v2905
        %3186 = vmatpush1.msra.mxu0 %v2904
        %3187 = vmatprep.subr.mxu0 %v2907
        %3188 = vmatpush1.msra.mxu0 %v2906
        %3189 = vmatprep.subr.mxu0 %v2909
        %3190 = vmatpush1.msra.mxu0 %v2908
        %3191 = vmatprep.subr.mxu0 %v2911
        %3192 = vmatpush1.msra.mxu0 %v2910
        %3193 = vmatprep.subr.mxu0 %v2913
        %3194 = vmatpush1.msra.mxu0 %v2912
        %3195 = vmatprep.subr.mxu0 %v2915
        %3196 = vmatpush1.msra.mxu0 %v2914
        %3197 = vmatprep.subr.mxu0 %v2917
        %3198 = vmatpush1.msra.mxu0 %v2916
        %3199 = vmatprep.subr.mxu0 %v2919
        %3200 = vmatpush1.msra.mxu0 %v2918
        %3201 = vmatprep.subr.mxu0 %v2921
        %3202 = vmatpush1.msra.mxu0 %v2920
        %3203 = vmatprep.mubr.f32.mxu0 %v2847
        %3204 = vmatmul.mubr.f32.gmra.mrb[0].mxu0 %v2846
        %v3205 = vpop.f32.mrb[0].mxu0
        %v3206 = vadd.f32 %v3105, %v3205
        %v3207 = vpop.f32.mrb[0].mxu0
        %v3208 = vadd.f32 %v3107, %v3207
        %3209 = vmatprep.mubr.f32.mxu0 %v2849
        %3210 = vmatmul.mubr.f32.gmra.mrb[0].mxu0 %v2848
        %v3211 = vpop.f32.mrb[0].mxu0
        %v3212 = vadd.f32 %v3111, %v3211
        %v3213 = vpop.f32.mrb[0].mxu0
        %v3214 = vadd.f32 %v3113, %v3213
        %3215 = vmatprep.mubr.f32.mxu0 %v2851
        %3216 = vmatmul.mubr.f32.gmra.mrb[0].mxu0 %v2850
        %v3217 = vpop.f32.mrb[0].mxu0
        %v3218 = vadd.f32 %v3117, %v3217
        %v3219 = vpop.f32.mrb[0].mxu0
        %v3220 = vadd.f32 %v3119, %v3219
        %3221 = vmatprep.mubr.f32.mxu0 %v2853
        %3222 = vmatmul.mubr.f32.gmra.mrb[0].mxu0 %v2852
        %v3223 = vpop.f32.mrb[0].mxu0
        %v3224 = vadd.f32 %v3123, %v3223
        %v3225 = vpop.f32.mrb[0].mxu0
        %v3226 = vadd.f32 %v3125, %v3225
        %3227 = vmatprep.mubr.f32.mxu0 %v2855
        %3228 = vmatmul.mubr.f32.gmra.mrb[0].mxu0 %v2854
        %v3229 = vpop.f32.mrb[0].mxu0
        %v3230 = vadd.f32 %v3129, %v3229
        %v3231 = vpop.f32.mrb[0].mxu0
        %v3232 = vadd.f32 %v3131, %v3231
        %3233 = vmatprep.mubr.f32.mxu0 %v2857
        %3234 = vmatmul.mubr.f32.gmra.mrb[0].mxu0 %v2856
        %v3235 = vpop.f32.mrb[0].mxu0
        %v3236 = vadd.f32 %v3135, %v3235
        %v3237 = vpop.f32.mrb[0].mxu0
        %v3238 = vadd.f32 %v3137, %v3237
        %3239 = vdwg.mxu0
        %v3240 = vld [vmem:[#allocation5] sm:$0xfc]
        %v3241 = vld [vmem:[#allocation5 + $0x8] sm:$0xfc]
        %v3242 = vld [vmem:[#allocation5 + $0x50] sm:$0xff]
        %v3243 = vld [vmem:[#allocation5 + $0x58] sm:$0xff]
        %s3244 = scalar_lea.vmem [#allocation16], 1024
        %v3245 = vld [vmem:[%s3244] sm:$0xff]
        %v3246 = vld [vmem:[%s3244 + $0x8] sm:$0xff]
        %v3247 = vld [vmem:[%s3244 + $0x10] sm:$0xff]
        %v3248 = vld [vmem:[%s3244 + $0x18] sm:$0xff]
        %v3249 = vld [vmem:[%s3244 + $0x20] sm:$0xff]
        %v3250 = vld [vmem:[%s3244 + $0x28] sm:$0xff]
        %v3251 = vld [vmem:[%s3244 + $0x30] sm:$0xff]
        %v3252 = vld [vmem:[%s3244 + $0x38] sm:$0xff]
        %v3253 = vld [vmem:[%s3244 + $0x40] sm:$0xff]
        %v3254 = vld [vmem:[%s3244 + $0x48] sm:$0xff]
        %v3255 = vld [vmem:[%s3244 + $0x50] sm:$0xff]
        %v3256 = vld [vmem:[%s3244 + $0x58] sm:$0xff]
        %v3257 = vld [vmem:[%s3244 + $0x60] sm:$0xff]
        %v3258 = vld [vmem:[%s3244 + $0x68] sm:$0xff]
        %v3259 = vld [vmem:[%s3244 + $0x70] sm:$0xff]
        %v3260 = vld [vmem:[%s3244 + $0x78] sm:$0xff]
        %v3261 = vld [vmem:[%s3244 + $0x80] sm:$0xff]
        %v3262 = vld [vmem:[%s3244 + $0x88] sm:$0xff]
        %v3263 = vld [vmem:[%s3244 + $0x90] sm:$0xff]
        %v3264 = vld [vmem:[%s3244 + $0x98] sm:$0xff]
        %v3265 = vld [vmem:[%s3244 + $0xa0] sm:$0xff]
        %v3266 = vld [vmem:[%s3244 + $0xa8] sm:$0xff]
        %v3267 = vld [vmem:[%s3244 + $0xb0] sm:$0xff]
        %v3268 = vld [vmem:[%s3244 + $0xb8] sm:$0xff]
        %v3269 = vld [vmem:[%s3244 + $0xc0] sm:$0xff]
        %v3270 = vld [vmem:[%s3244 + $0xc8] sm:$0xff]
        %v3271 = vld [vmem:[%s3244 + $0xd0] sm:$0xff]
        %v3272 = vld [vmem:[%s3244 + $0xd8] sm:$0xff]
        %v3273 = vld [vmem:[%s3244 + $0xe0] sm:$0xff]
        %v3274 = vld [vmem:[%s3244 + $0xe8] sm:$0xff]
        %v3275 = vld [vmem:[%s3244 + $0xf0] sm:$0xff]
        %v3276 = vld [vmem:[%s3244 + $0xf8] sm:$0xff]
        %v3277 = vld [vmem:[%s3244 + $0x100] sm:$0xff]
        %v3278 = vld [vmem:[%s3244 + $0x108] sm:$0xff]
        %v3279 = vld [vmem:[%s3244 + $0x110] sm:$0xff]
        %v3280 = vld [vmem:[%s3244 + $0x118] sm:$0xff]
        %v3281 = vld [vmem:[%s3244 + $0x120] sm:$0xff]
        %v3282 = vld [vmem:[%s3244 + $0x128] sm:$0xff]
        %v3283 = vld [vmem:[%s3244 + $0x130] sm:$0xff]
        %v3284 = vld [vmem:[%s3244 + $0x138] sm:$0xff]
        %v3285 = vld [vmem:[%s3244 + $0x140] sm:$0xff]
        %v3286 = vld [vmem:[%s3244 + $0x148] sm:$0xff]
        %v3287 = vld [vmem:[%s3244 + $0x150] sm:$0xff]
        %v3288 = vld [vmem:[%s3244 + $0x158] sm:$0xff]
        %v3289 = vld [vmem:[%s3244 + $0x160] sm:$0xff]
        %v3290 = vld [vmem:[%s3244 + $0x168] sm:$0xff]
        %v3291 = vld [vmem:[%s3244 + $0x170] sm:$0xff]
        %v3292 = vld [vmem:[%s3244 + $0x178] sm:$0xff]
        %v3293 = vld [vmem:[%s3244 + $0x180] sm:$0xff]
        %v3294 = vld [vmem:[%s3244 + $0x188] sm:$0xff]
        %v3295 = vld [vmem:[%s3244 + $0x190] sm:$0xff]
        %v3296 = vld [vmem:[%s3244 + $0x198] sm:$0xff]
        %v3297 = vld [vmem:[%s3244 + $0x1a0] sm:$0xff]
        %v3298 = vld [vmem:[%s3244 + $0x1a8] sm:$0xff]
        %v3299 = vld [vmem:[%s3244 + $0x1b0] sm:$0xff]
        %v3300 = vld [vmem:[%s3244 + $0x1b8] sm:$0xff]
        %v3301 = vld [vmem:[%s3244 + $0x1c0] sm:$0xff]
        %v3302 = vld [vmem:[%s3244 + $0x1c8] sm:$0xff]
        %v3303 = vld [vmem:[%s3244 + $0x1d0] sm:$0xff]
        %v3304 = vld [vmem:[%s3244 + $0x1d8] sm:$0xff]
        %v3305 = vld [vmem:[%s3244 + $0x1e0] sm:$0xff]
        %v3306 = vld [vmem:[%s3244 + $0x1e8] sm:$0xff]
        %v3307 = vld [vmem:[%s3244 + $0x1f0] sm:$0xff]
        %v3308 = vld [vmem:[%s3244 + $0x1f8] sm:$0xff]
        %vm3313 = vcmask 1045504
        %v3314 = vrot.slane %v3240, 2
        %v3315 = vrot.slane %v2848, 2
        %v3316 = vsel %vm3313, %v3314, %v3315
        %v3317 = vrot.slane %v3241, 2
        %v3318 = vrot.slane %v2849, 2
        %v3319 = vsel %vm3313, %v3317, %v3318
        %v3320 = vrot.slane %v2850, 2
        %v3321 = vsel %vm3313, %v3315, %v3320
        %v3322 = vrot.slane %v2851, 2
        %v3323 = vsel %vm3313, %v3318, %v3322
        %v3324 = vrot.slane %v2852, 2
        %v3325 = vsel %vm3313, %v3320, %v3324
        %v3326 = vrot.slane %v2853, 2
        %v3327 = vsel %vm3313, %v3322, %v3326
        %v3328 = vrot.slane %v2854, 2
        %v3329 = vsel %vm3313, %v3324, %v3328
        %v3330 = vrot.slane %v2855, 2
        %v3331 = vsel %vm3313, %v3326, %v3330
        %v3332 = vrot.slane %v3242, 2
        %v3333 = vsel %vm3313, %v3328, %v3332
        %v3334 = vrot.slane %v3243, 2
        %v3335 = vsel %vm3313, %v3330, %v3334
        %3348 = vmatprep.subr.mxu0 %v3246
        %3349 = vmatpush1.msra.mxu0 %v3245
        %3350 = vmatprep.subr.mxu0 %v3248
        %3351 = vmatpush1.msra.mxu0 %v3247
        %3352 = vmatprep.subr.mxu0 %v3250
        %3353 = vmatpush1.msra.mxu0 %v3249
        %3354 = vmatprep.subr.mxu0 %v3252
        %3355 = vmatpush1.msra.mxu0 %v3251
        %3356 = vmatprep.subr.mxu0 %v3254
        %3357 = vmatpush1.msra.mxu0 %v3253
        %3358 = vmatprep.subr.mxu0 %v3256
        %3359 = vmatpush1.msra.mxu0 %v3255
        %3360 = vmatprep.subr.mxu0 %v3258
        %3361 = vmatpush1.msra.mxu0 %v3257
        %3362 = vmatprep.subr.mxu0 %v3260
        %3363 = vmatpush1.msra.mxu0 %v3259
        %3364 = vmatprep.subr.mxu0 %v3262
        %3365 = vmatpush1.msra.mxu0 %v3261
        %3366 = vmatprep.subr.mxu0 %v3264
        %3367 = vmatpush1.msra.mxu0 %v3263
        %3368 = vmatprep.subr.mxu0 %v3266
        %3369 = vmatpush1.msra.mxu0 %v3265
        %3370 = vmatprep.subr.mxu0 %v3268
        %3371 = vmatpush1.msra.mxu0 %v3267
        %3372 = vmatprep.subr.mxu0 %v3270
        %3373 = vmatpush1.msra.mxu0 %v3269
        %3374 = vmatprep.subr.mxu0 %v3272
        %3375 = vmatpush1.msra.mxu0 %v3271
        %3376 = vmatprep.subr.mxu0 %v3274
        %3377 = vmatpush1.msra.mxu0 %v3273
        %3378 = vmatprep.subr.mxu0 %v3276
        %3379 = vmatpush1.msra.mxu0 %v3275
        %3380 = vmatprep.subr.mxu0 %v3278
        %3381 = vmatpush1.msra.mxu0 %v3277
        %3382 = vmatprep.subr.mxu0 %v3280
        %3383 = vmatpush1.msra.mxu0 %v3279
        %3384 = vmatprep.subr.mxu0 %v3282
        %3385 = vmatpush1.msra.mxu0 %v3281
        %3386 = vmatprep.subr.mxu0 %v3284
        %3387 = vmatpush1.msra.mxu0 %v3283
        %3388 = vmatprep.subr.mxu0 %v3286
        %3389 = vmatpush1.msra.mxu0 %v3285
        %3390 = vmatprep.subr.mxu0 %v3288
        %3391 = vmatpush1.msra.mxu0 %v3287
        %3392 = vmatprep.subr.mxu0 %v3290
        %3393 = vmatpush1.msra.mxu0 %v3289
        %3394 = vmatprep.subr.mxu0 %v3292
        %3395 = vmatpush1.msra.mxu0 %v3291
        %3396 = vmatprep.subr.mxu0 %v3294
        %3397 = vmatpush1.msra.mxu0 %v3293
        %3398 = vmatprep.subr.mxu0 %v3296
        %3399 = vmatpush1.msra.mxu0 %v3295
        %3400 = vmatprep.subr.mxu0 %v3298
        %3401 = vmatpush1.msra.mxu0 %v3297
        %3402 = vmatprep.subr.mxu0 %v3300
        %3403 = vmatpush1.msra.mxu0 %v3299
        %3404 = vmatprep.subr.mxu0 %v3302
        %3405 = vmatpush1.msra.mxu0 %v3301
        %3406 = vmatprep.subr.mxu0 %v3304
        %3407 = vmatpush1.msra.mxu0 %v3303
        %3408 = vmatprep.subr.mxu0 %v3306
        %3409 = vmatpush1.msra.mxu0 %v3305
        %3410 = vmatprep.subr.mxu0 %v3308
        %3411 = vmatpush1.msra.mxu0 %v3307
        %3412 = vmatprep.mubr.f32.mxu0 %v3319
        %3413 = vmatmul.mubr.f32.gmra.mrb[0].mxu0 %v3316
        %v3414 = vpop.f32.mrb[0].mxu0
        %v3415 = vadd.f32 0.0, %v3414
        %v3416 = vpop.f32.mrb[0].mxu0
        %v3417 = vadd.f32 0.0, %v3416
        %3418 = vmatprep.mubr.f32.mxu0 %v3323
        %3419 = vmatmul.mubr.f32.gmra.mrb[0].mxu0 %v3321
        %v3420 = vpop.f32.mrb[0].mxu0
        %v3421 = vadd.f32 0.0, %v3420
        %v3422 = vpop.f32.mrb[0].mxu0
        %v3423 = vadd.f32 0.0, %v3422
        %3424 = vmatprep.mubr.f32.mxu0 %v3327
        %3425 = vmatmul.mubr.f32.gmra.mrb[0].mxu0 %v3325
        %v3426 = vpop.f32.mrb[0].mxu0
        %v3427 = vadd.f32 0.0, %v3426
        %v3428 = vpop.f32.mrb[0].mxu0
        %v3429 = vadd.f32 0.0, %v3428
        %3430 = vmatprep.mubr.f32.mxu0 %v3331
        %3431 = vmatmul.mubr.f32.gmra.mrb[0].mxu0 %v3329
        %v3432 = vpop.f32.mrb[0].mxu0
        %v3433 = vadd.f32 0.0, %v3432
        %v3434 = vpop.f32.mrb[0].mxu0
        %v3435 = vadd.f32 0.0, %v3434
        %3436 = vmatprep.mubr.f32.mxu0 %v3335
        %3437 = vmatmul.mubr.f32.gmra.mrb[0].mxu0 %v3333
        %v3438 = vpop.f32.mrb[0].mxu0
        %v3439 = vadd.f32 0.0, %v3438
        %v3440 = vpop.f32.mrb[0].mxu0
        %v3441 = vadd.f32 0.0, %v3440
        %3442 = vmatprep.mubr.f32.mxu0 %v3334
        %3443 = vmatmul.mubr.f32.gmra.mrb[0].mxu0 %v3332
        %v3444 = vpop.f32.mrb[0].mxu0
        %v3445 = vadd.f32 0.0, %v3444
        %v3446 = vpop.f32.mrb[0].mxu0
        %v3447 = vadd.f32 0.0, %v3446
        %3448 = vdwg.mxu0
        %v3449 = vadd.f32 %v3206, %v3415
        %v3450 = vadd.f32 %v3208, %v3417
        %v3451 = vadd.f32 %v3212, %v3421
        %v3452 = vadd.f32 %v3214, %v3423
        %v3453 = vadd.f32 %v3218, %v3427
        %v3454 = vadd.f32 %v3220, %v3429
        %v3455 = vadd.f32 %v3224, %v3433
        %v3456 = vadd.f32 %v3226, %v3435
        %v3457 = vadd.f32 %v3230, %v3439
        %v3458 = vadd.f32 %v3232, %v3441
        %v3459 = vadd.f32 %v3236, %v3445
        %v3460 = vadd.f32 %v3238, %v3447
        %v3461 = vld [vmem:[%s11] sm:$0x3]
        %v3463 = vlaneseq
        %v3464 = vshrl.u32 %v3463, 7
        %v3465 = vsub.s32 0, %v3464
        %v3466 = vrot.slane %v3461, %v3465
        %v3467 = vlaneseq
        %v3468 = vshrl.u32 %v3467, 7
        %v3469 = vsub.s32 1, %v3468
        %v3470 = vrot.slane %v3461, %v3469
        %v3473 = vmul.f32 %v3449, %v3466
        %v3474 = vmul.f32 %v3450, %v3470
        %v3475 = vmul.f32 %v3451, %v3466
        %v3476 = vmul.f32 %v3452, %v3470
        %v3477 = vmul.f32 %v3453, %v3466
        %v3478 = vmul.f32 %v3454, %v3470
        %v3479 = vmul.f32 %v3455, %v3466
        %v3480 = vmul.f32 %v3456, %v3470
        %v3481 = vmul.f32 %v3457, %v3466
        %v3482 = vmul.f32 %v3458, %v3470
        %v3483 = vmul.f32 %v3459, %v3466
        %v3484 = vmul.f32 %v3460, %v3470
        %v3485 = vld [vmem:[%s12] sm:$0x3]
        %v3487 = vlaneseq
        %v3488 = vshrl.u32 %v3487, 7
        %v3489 = vsub.s32 0, %v3488
        %v3490 = vrot.slane %v3485, %v3489
        %v3491 = vlaneseq
        %v3492 = vshrl.u32 %v3491, 7
        %v3493 = vsub.s32 1, %v3492
        %v3494 = vrot.slane %v3485, %v3493
        %v3497 = vadd.f32 %v3473, %v3490
        %v3498 = vadd.f32 %v3474, %v3494
        %v3499 = vadd.f32 %v3475, %v3490
        %v3500 = vadd.f32 %v3476, %v3494
        %v3501 = vadd.f32 %v3477, %v3490
        %v3502 = vadd.f32 %v3478, %v3494
        %v3503 = vadd.f32 %v3479, %v3490
        %v3504 = vadd.f32 %v3480, %v3494
        %v3505 = vadd.f32 %v3481, %v3490
        %v3506 = vadd.f32 %v3482, %v3494
        %v3507 = vadd.f32 %v3483, %v3490
        %v3508 = vadd.f32 %v3484, %v3494
        %v3509 = vmax.f32 %v3497, 0.0
        %v3510 = vmax.f32 %v3498, 0.0
        %v3511 = vmax.f32 %v3499, 0.0
        %v3512 = vmax.f32 %v3500, 0.0
        %v3513 = vmax.f32 %v3501, 0.0
        %v3514 = vmax.f32 %v3502, 0.0
        %v3515 = vmax.f32 %v3503, 0.0
        %v3516 = vmax.f32 %v3504, 0.0
        %v3517 = vmax.f32 %v3505, 0.0
        %v3518 = vmax.f32 %v3506, 0.0
        %v3519 = vmax.f32 %v3507, 0.0
        %v3520 = vmax.f32 %v3508, 0.0
        %3527 = vrot.lane.b32.xlu0 %v3509, 64
        %v3528 = vpop.permute.xlu0 %3527
        %3529 = vrot.lane.b32.xlu0 %v3511, 64
        %v3530 = vpop.permute.xlu0 %3529
        %3531 = vrot.lane.b32.xlu0 %v3513, 64
        %v3532 = vpop.permute.xlu0 %3531
        %3533 = vrot.lane.b32.xlu0 %v3515, 64
        %v3534 = vpop.permute.xlu0 %3533
        %3535 = vrot.lane.b32.xlu0 %v3517, 64
        %v3536 = vpop.permute.xlu0 %3535
        %3537 = vrot.lane.b32.xlu0 %v3519, 64
        %v3538 = vpop.permute.xlu0 %3537
        %v3545 = vmax.f32 %v3509, %v3528
        %v3546 = vmax.f32 %v3511, %v3530
        %v3547 = vmax.f32 %v3513, %v3532
        %v3548 = vmax.f32 %v3515, %v3534
        %v3549 = vmax.f32 %v3517, %v3536
        %v3550 = vmax.f32 %v3519, %v3538
        %vm3551 = vcmask 523264
        %3552 = vst.msk [vmem:[#allocation7] sm:$0xff] %vm3551, %v3545
        %3553 = vst.msk [vmem:[#allocation7 + $0x8] sm:$0xff] %vm3551, %v3546
        %3554 = vst.msk [vmem:[#allocation7 + $0x10] sm:$0xff] %vm3551, %v3547
        %3555 = vst.msk [vmem:[#allocation7 + $0x18] sm:$0xff] %vm3551, %v3548
        %3556 = vst.msk [vmem:[#allocation7 + $0x20] sm:$0xff] %vm3551, %v3549
        %vm3557 = vcmask 521216
        %3558 = vst.msk [vmem:[#allocation7 + $0x28] sm:$0x3f] %vm3557, %v3550
        %3565 = vrot.lane.b32.xlu0 %v3510, 64
        %v3566 = vpop.permute.xlu0 %3565
        %3567 = vrot.lane.b32.xlu0 %v3512, 64
        %v3568 = vpop.permute.xlu0 %3567
        %3569 = vrot.lane.b32.xlu0 %v3514, 64
        %v3570 = vpop.permute.xlu0 %3569
        %3571 = vrot.lane.b32.xlu0 %v3516, 64
        %v3572 = vpop.permute.xlu0 %3571
        %3573 = vrot.lane.b32.xlu0 %v3518, 64
        %v3574 = vpop.permute.xlu0 %3573
        %3575 = vrot.lane.b32.xlu0 %v3520, 64
        %v3576 = vpop.permute.xlu0 %3575
        %v3583 = vmax.f32 %v3510, %v3566
        %v3584 = vmax.f32 %v3512, %v3568
        %v3585 = vmax.f32 %v3514, %v3570
        %v3586 = vmax.f32 %v3516, %v3572
        %v3587 = vmax.f32 %v3518, %v3574
        %v3588 = vmax.f32 %v3520, %v3576
        %3595 = vrot.lane.b32.xlu0 %v3583, 64
        %v3596 = vpop.permute.xlu0 %3595
        %3597 = vrot.lane.b32.xlu0 %v3584, 64
        %v3598 = vpop.permute.xlu0 %3597
        %3599 = vrot.lane.b32.xlu0 %v3585, 64
        %v3600 = vpop.permute.xlu0 %3599
        %3601 = vrot.lane.b32.xlu0 %v3586, 64
        %v3602 = vpop.permute.xlu0 %3601
        %3603 = vrot.lane.b32.xlu0 %v3587, 64
        %v3604 = vpop.permute.xlu0 %3603
        %3605 = vrot.lane.b32.xlu0 %v3588, 64
        %v3606 = vpop.permute.xlu0 %3605
        %vm3613 = vcmask 1048064
        %3614 = vst.msk [vmem:[#allocation7] sm:$0xff] %vm3613, %v3596
        %3615 = vst.msk [vmem:[#allocation7 + $0x8] sm:$0xff] %vm3613, %v3598
        %3616 = vst.msk [vmem:[#allocation7 + $0x10] sm:$0xff] %vm3613, %v3600
        %3617 = vst.msk [vmem:[#allocation7 + $0x18] sm:$0xff] %vm3613, %v3602
        %3618 = vst.msk [vmem:[#allocation7 + $0x20] sm:$0xff] %vm3613, %v3604
        %vm3619 = vcmask 1046016
        %3620 = vst.msk [vmem:[#allocation7 + $0x28] sm:$0x3f] %vm3619, %v3606
        %v3621 = vld [vmem:[#allocation7] ss:$6 sm:$0xff]
        %s3622 = scalar_lea.vmem [#allocation7], 1
        %v3623 = vld [vmem:[%s3622] ss:$6 sm:$0xff]
        %v3624 = vmax.f32 %v3621, %v3623
        %s3625 = scalar_lea.vmem [#allocation7], 2
        %v3626 = vld [vmem:[%s3625] ss:$6 sm:$0xff]
        %s3627 = scalar_lea.vmem [#allocation7], 3
        %v3628 = vld [vmem:[%s3627] ss:$6 sm:$0xff]
        %v3629 = vmax.f32 %v3626, %v3628
        %v3630 = vld [vmem:[#allocation17] sm:$0xff]
        %v3631 = vld [vmem:[#allocation17 + $0x8] sm:$0xff]
        %v3632 = vld [vmem:[#allocation17 + $0x10] sm:$0xff]
        %v3633 = vld [vmem:[#allocation17 + $0x18] sm:$0xff]
        %v3634 = vld [vmem:[#allocation17 + $0x20] sm:$0xff]
        %v3635 = vld [vmem:[#allocation17 + $0x28] sm:$0xff]
        %v3636 = vld [vmem:[#allocation17 + $0x30] sm:$0xff]
        %v3637 = vld [vmem:[#allocation17 + $0x38] sm:$0xff]
        %v3638 = vld [vmem:[#allocation17 + $0x40] sm:$0xff]
        %v3639 = vld [vmem:[#allocation17 + $0x48] sm:$0xff]
        %v3640 = vld [vmem:[#allocation17 + $0x50] sm:$0xff]
        %v3641 = vld [vmem:[#allocation17 + $0x58] sm:$0xff]
        %v3642 = vld [vmem:[#allocation17 + $0x60] sm:$0xff]
        %v3643 = vld [vmem:[#allocation17 + $0x68] sm:$0xff]
        %v3644 = vld [vmem:[#allocation17 + $0x70] sm:$0xff]
        %v3645 = vld [vmem:[#allocation17 + $0x78] sm:$0xff]
        %v3646 = vld [vmem:[#allocation17 + $0x80] sm:$0xff]
        %v3647 = vld [vmem:[#allocation17 + $0x88] sm:$0xff]
        %v3648 = vld [vmem:[#allocation17 + $0x90] sm:$0xff]
        %v3649 = vld [vmem:[#allocation17 + $0x98] sm:$0xff]
        %v3650 = vld [vmem:[#allocation17 + $0xa0] sm:$0xff]
        %v3651 = vld [vmem:[#allocation17 + $0xa8] sm:$0xff]
        %v3652 = vld [vmem:[#allocation17 + $0xb0] sm:$0xff]
        %v3653 = vld [vmem:[#allocation17 + $0xb8] sm:$0xff]
        %v3654 = vld [vmem:[#allocation17 + $0xc0] sm:$0xff]
        %v3655 = vld [vmem:[#allocation17 + $0xc8] sm:$0xff]
        %v3656 = vld [vmem:[#allocation17 + $0xd0] sm:$0xff]
        %v3657 = vld [vmem:[#allocation17 + $0xd8] sm:$0xff]
        %v3658 = vld [vmem:[#allocation17 + $0xe0] sm:$0xff]
        %v3659 = vld [vmem:[#allocation17 + $0xe8] sm:$0xff]
        %v3660 = vld [vmem:[#allocation17 + $0xf0] sm:$0xff]
        %v3661 = vld [vmem:[#allocation17 + $0xf8] sm:$0xff]
        %v3662 = vld [vmem:[%s14] sm:$0xff]
        %v3663 = vld [vmem:[%s14 + $0x8] sm:$0xff]
        %v3664 = vld [vmem:[%s14 + $0x10] sm:$0xff]
        %v3665 = vld [vmem:[%s14 + $0x18] sm:$0xff]
        %v3666 = vld [vmem:[%s14 + $0x20] sm:$0xff]
        %v3667 = vld [vmem:[%s14 + $0x28] sm:$0xff]
        %v3668 = vld [vmem:[%s14 + $0x30] sm:$0xff]
        %v3669 = vld [vmem:[%s14 + $0x38] sm:$0xff]
        %v3670 = vld [vmem:[%s14 + $0x40] sm:$0xff]
        %v3671 = vld [vmem:[%s14 + $0x48] sm:$0xff]
        %v3672 = vld [vmem:[%s14 + $0x50] sm:$0xff]
        %v3673 = vld [vmem:[%s14 + $0x58] sm:$0xff]
        %v3674 = vld [vmem:[%s14 + $0x60] sm:$0xff]
        %v3675 = vld [vmem:[%s14 + $0x68] sm:$0xff]
        %v3676 = vld [vmem:[%s14 + $0x70] sm:$0xff]
        %v3677 = vld [vmem:[%s14 + $0x78] sm:$0xff]
        %v3678 = vld [vmem:[%s14 + $0x80] sm:$0xff]
        %v3679 = vld [vmem:[%s14 + $0x88] sm:$0xff]
        %v3680 = vld [vmem:[%s14 + $0x90] sm:$0xff]
        %v3681 = vld [vmem:[%s14 + $0x98] sm:$0xff]
        %v3682 = vld [vmem:[%s14 + $0xa0] sm:$0xff]
        %v3683 = vld [vmem:[%s14 + $0xa8] sm:$0xff]
        %v3684 = vld [vmem:[%s14 + $0xb0] sm:$0xff]
        %v3685 = vld [vmem:[%s14 + $0xb8] sm:$0xff]
        %v3686 = vld [vmem:[%s14 + $0xc0] sm:$0xff]
        %v3687 = vld [vmem:[%s14 + $0xc8] sm:$0xff]
        %v3688 = vld [vmem:[%s14 + $0xd0] sm:$0xff]
        %v3689 = vld [vmem:[%s14 + $0xd8] sm:$0xff]
        %v3690 = vld [vmem:[%s14 + $0xe0] sm:$0xff]
        %v3691 = vld [vmem:[%s14 + $0xe8] sm:$0xff]
        %v3692 = vld [vmem:[%s14 + $0xf0] sm:$0xff]
        %v3693 = vld [vmem:[%s14 + $0xf8] sm:$0xff]
        %3694 = vmatprep.subr.mxu0 %v3663
        %3695 = vmatpush1.msra.mxu0 %v3662
        %3696 = vmatprep.subr.mxu0 %v3665
        %3697 = vmatpush1.msra.mxu0 %v3664
        %3698 = vmatprep.subr.mxu0 %v3667
        %3699 = vmatpush1.msra.mxu0 %v3666
        %3700 = vmatprep.subr.mxu0 %v3669
        %3701 = vmatpush1.msra.mxu0 %v3668
        %3702 = vmatprep.subr.mxu0 %v3671
        %3703 = vmatpush1.msra.mxu0 %v3670
        %3704 = vmatprep.subr.mxu0 %v3673
        %3705 = vmatpush1.msra.mxu0 %v3672
        %3706 = vmatprep.subr.mxu0 %v3675
        %3707 = vmatpush1.msra.mxu0 %v3674
        %3708 = vmatprep.subr.mxu0 %v3677
        %3709 = vmatpush1.msra.mxu0 %v3676
        %3710 = vmatprep.subr.mxu0 %v3679
        %3711 = vmatpush1.msra.mxu0 %v3678
        %3712 = vmatprep.subr.mxu0 %v3681
        %3713 = vmatpush1.msra.mxu0 %v3680
        %3714 = vmatprep.subr.mxu0 %v3683
        %3715 = vmatpush1.msra.mxu0 %v3682
        %3716 = vmatprep.subr.mxu0 %v3685
        %3717 = vmatpush1.msra.mxu0 %v3684
        %3718 = vmatprep.subr.mxu0 %v3687
        %3719 = vmatpush1.msra.mxu0 %v3686
        %3720 = vmatprep.subr.mxu0 %v3689
        %3721 = vmatpush1.msra.mxu0 %v3688
        %3722 = vmatprep.subr.mxu0 %v3691
        %3723 = vmatpush1.msra.mxu0 %v3690
        %3724 = vmatprep.subr.mxu0 %v3693
        %3725 = vmatpush1.msra.mxu0 %v3692
        %3726 = vmatprep.subr.mxu0 0.0
        %3727 = vmatpush1.msra.mxu0 0.0
        %3728 = vmatprep.subr.mxu0 0.0
        %3729 = vmatpush1.msra.mxu0 0.0
        %3730 = vmatprep.subr.mxu0 0.0
        %3731 = vmatpush1.msra.mxu0 0.0
        %3732 = vmatprep.subr.mxu0 0.0
        %3733 = vmatpush1.msra.mxu0 0.0
        %3734 = vmatprep.subr.mxu0 0.0
        %3735 = vmatpush1.msra.mxu0 0.0
        %3736 = vmatprep.subr.mxu0 0.0
        %3737 = vmatpush1.msra.mxu0 0.0
        %3738 = vmatprep.subr.mxu0 0.0
        %3739 = vmatpush1.msra.mxu0 0.0
        %3740 = vmatprep.subr.mxu0 0.0
        %3741 = vmatpush1.msra.mxu0 0.0
        %3742 = vmatprep.subr.mxu0 0.0
        %3743 = vmatpush1.msra.mxu0 0.0
        %3744 = vmatprep.subr.mxu0 0.0
        %3745 = vmatpush1.msra.mxu0 0.0
        %3746 = vmatprep.subr.mxu0 0.0
        %3747 = vmatpush1.msra.mxu0 0.0
        %3748 = vmatprep.subr.mxu0 0.0
        %3749 = vmatpush1.msra.mxu0 0.0
        %3750 = vmatprep.subr.mxu0 0.0
        %3751 = vmatpush1.msra.mxu0 0.0
        %3752 = vmatprep.subr.mxu0 0.0
        %3753 = vmatpush1.msra.mxu0 0.0
        %3754 = vmatprep.subr.mxu0 0.0
        %3755 = vmatpush1.msra.mxu0 0.0
        %3756 = vmatprep.subr.mxu0 0.0
        %3757 = vmatpush1.msra.mxu0 0.0
        %3758 = vmatprep.mubr.f32.mxu0 0.0
        %3759 = vmatmul.mubr.f32.gmra.mrb[0].mxu0 %v3629
        %v3760 = vpop.f32.mrb[0].mxu0
        %v3761 = vadd.f32 0.0, %v3760
        %v3762 = vpop.f32.mrb[0].mxu0
        %v3763 = vadd.f32 0.0, %v3762
        %3764 = vdwg.mxu0
        %3765 = vmatprep.subr.mxu0 %v3631
        %3766 = vmatpush1.msra.mxu0 %v3630
        %3767 = vmatprep.subr.mxu0 %v3633
        %3768 = vmatpush1.msra.mxu0 %v3632
        %3769 = vmatprep.subr.mxu0 %v3635
        %3770 = vmatpush1.msra.mxu0 %v3634
        %3771 = vmatprep.subr.mxu0 %v3637
        %3772 = vmatpush1.msra.mxu0 %v3636
        %3773 = vmatprep.subr.mxu0 %v3639
        %3774 = vmatpush1.msra.mxu0 %v3638
        %3775 = vmatprep.subr.mxu0 %v3641
        %3776 = vmatpush1.msra.mxu0 %v3640
        %3777 = vmatprep.subr.mxu0 %v3643
        %3778 = vmatpush1.msra.mxu0 %v3642
        %3779 = vmatprep.subr.mxu0 %v3645
        %3780 = vmatpush1.msra.mxu0 %v3644
        %3781 = vmatprep.subr.mxu0 %v3647
        %3782 = vmatpush1.msra.mxu0 %v3646
        %3783 = vmatprep.subr.mxu0 %v3649
        %3784 = vmatpush1.msra.mxu0 %v3648
        %3785 = vmatprep.subr.mxu0 %v3651
        %3786 = vmatpush1.msra.mxu0 %v3650
        %3787 = vmatprep.subr.mxu0 %v3653
        %3788 = vmatpush1.msra.mxu0 %v3652
        %3789 = vmatprep.subr.mxu0 %v3655
        %3790 = vmatpush1.msra.mxu0 %v3654
        %3791 = vmatprep.subr.mxu0 %v3657
        %3792 = vmatpush1.msra.mxu0 %v3656
        %3793 = vmatprep.subr.mxu0 %v3659
        %3794 = vmatpush1.msra.mxu0 %v3658
        %3795 = vmatprep.subr.mxu0 %v3661
        %3796 = vmatpush1.msra.mxu0 %v3660
        %3797 = vmatprep.subr.mxu0 0.0
        %3798 = vmatpush1.msra.mxu0 0.0
        %3799 = vmatprep.subr.mxu0 0.0
        %3800 = vmatpush1.msra.mxu0 0.0
        %3801 = vmatprep.subr.mxu0 0.0
        %3802 = vmatpush1.msra.mxu0 0.0
        %3803 = vmatprep.subr.mxu0 0.0
        %3804 = vmatpush1.msra.mxu0 0.0
        %3805 = vmatprep.subr.mxu0 0.0
        %3806 = vmatpush1.msra.mxu0 0.0
        %3807 = vmatprep.subr.mxu0 0.0
        %3808 = vmatpush1.msra.mxu0 0.0
        %3809 = vmatprep.subr.mxu0 0.0
        %3810 = vmatpush1.msra.mxu0 0.0
        %3811 = vmatprep.subr.mxu0 0.0
        %3812 = vmatpush1.msra.mxu0 0.0
        %3813 = vmatprep.subr.mxu0 0.0
        %3814 = vmatpush1.msra.mxu0 0.0
        %3815 = vmatprep.subr.mxu0 0.0
        %3816 = vmatpush1.msra.mxu0 0.0
        %3817 = vmatprep.subr.mxu0 0.0
        %3818 = vmatpush1.msra.mxu0 0.0
        %3819 = vmatprep.subr.mxu0 0.0
        %3820 = vmatpush1.msra.mxu0 0.0
        %3821 = vmatprep.subr.mxu0 0.0
        %3822 = vmatpush1.msra.mxu0 0.0
        %3823 = vmatprep.subr.mxu0 0.0
        %3824 = vmatpush1.msra.mxu0 0.0
        %3825 = vmatprep.subr.mxu0 0.0
        %3826 = vmatpush1.msra.mxu0 0.0
        %3827 = vmatprep.subr.mxu0 0.0
        %3828 = vmatpush1.msra.mxu0 0.0
        %3829 = vmatprep.mubr.f32.mxu0 0.0
        %3830 = vmatmul.mubr.f32.gmra.mrb[0].mxu0 %v3624
        %v3831 = vpop.f32.mrb[0].mxu0
        %v3832 = vadd.f32 %v3761, %v3831
        %v3833 = vpop.f32.mrb[0].mxu0
        %v3834 = vadd.f32 %v3763, %v3833
        %3835 = vdwg.mxu0
        %v3836 = vld [vmem:[%s15] sm:$0x3]
        %v3838 = vlaneseq
        %v3839 = vshrl.u32 %v3838, 7
        %v3840 = vsub.s32 0, %v3839
        %v3841 = vrot.slane %v3836, %v3840
        %v3842 = vlaneseq
        %v3843 = vshrl.u32 %v3842, 7
        %v3844 = vsub.s32 1, %v3843
        %v3845 = vrot.slane %v3836, %v3844
        %v3848 = vmul.f32 %v3832, %v3841
        %v3849 = vmul.f32 %v3834, %v3845
        %v3850 = vld [vmem:[%s16] sm:$0x3]
        %v3852 = vlaneseq
        %v3853 = vshrl.u32 %v3852, 7
        %v3854 = vsub.s32 0, %v3853
        %v3855 = vrot.slane %v3850, %v3854
        %v3856 = vlaneseq
        %v3857 = vshrl.u32 %v3856, 7
        %v3858 = vsub.s32 1, %v3857
        %v3859 = vrot.slane %v3850, %v3858
        %v3862 = vadd.f32 %v3848, %v3855
        %v3863 = vadd.f32 %v3849, %v3859
        %v3864 = vmax.f32 %v3862, 0.0
        %v3865 = vmax.f32 %v3863, 0.0
        %v3866 = vld [vmem:[%s17] sm:$0xff]
        %v3867 = vld [vmem:[%s17 + $0x8] sm:$0xff]
        %v3868 = vld [vmem:[%s17 + $0x10] sm:$0xff]
        %v3869 = vld [vmem:[%s17 + $0x18] sm:$0xff]
        %v3870 = vld [vmem:[%s17 + $0x20] sm:$0xff]
        %v3871 = vld [vmem:[%s17 + $0x28] sm:$0xff]
        %v3872 = vld [vmem:[%s17 + $0x30] sm:$0xff]
        %v3873 = vld [vmem:[%s17 + $0x38] sm:$0xff]
        %v3874 = vld [vmem:[%s17 + $0x40] sm:$0xff]
        %v3875 = vld [vmem:[%s17 + $0x48] sm:$0xff]
        %v3876 = vld [vmem:[%s17 + $0x50] sm:$0xff]
        %v3877 = vld [vmem:[%s17 + $0x58] sm:$0xff]
        %v3878 = vld [vmem:[%s17 + $0x60] sm:$0xff]
        %v3879 = vld [vmem:[%s17 + $0x68] sm:$0xff]
        %v3880 = vld [vmem:[%s17 + $0x70] sm:$0xff]
        %v3881 = vld [vmem:[%s17 + $0x78] sm:$0xff]
        %v3882 = vld [vmem:[%s17 + $0x80] sm:$0xff]
        %v3883 = vld [vmem:[%s17 + $0x88] sm:$0xff]
        %v3884 = vld [vmem:[%s17 + $0x90] sm:$0xff]
        %v3885 = vld [vmem:[%s17 + $0x98] sm:$0xff]
        %v3886 = vld [vmem:[%s17 + $0xa0] sm:$0xff]
        %v3887 = vld [vmem:[%s17 + $0xa8] sm:$0xff]
        %v3888 = vld [vmem:[%s17 + $0xb0] sm:$0xff]
        %v3889 = vld [vmem:[%s17 + $0xb8] sm:$0xff]
        %v3890 = vld [vmem:[%s17 + $0xc0] sm:$0xff]
        %v3891 = vld [vmem:[%s17 + $0xc8] sm:$0xff]
        %v3892 = vld [vmem:[%s17 + $0xd0] sm:$0xff]
        %v3893 = vld [vmem:[%s17 + $0xd8] sm:$0xff]
        %v3894 = vld [vmem:[%s17 + $0xe0] sm:$0xff]
        %v3895 = vld [vmem:[%s17 + $0xe8] sm:$0xff]
        %v3896 = vld [vmem:[%s17 + $0xf0] sm:$0xff]
        %v3897 = vld [vmem:[%s17 + $0xf8] sm:$0xff]
        %3898 = vmatprep.subr.mxu0 0.0
        %3899 = vmatpush1.msra.mxu0 %v3866
        %3900 = vmatprep.subr.mxu0 0.0
        %3901 = vmatpush1.msra.mxu0 %v3867
        %3902 = vmatprep.subr.mxu0 0.0
        %3903 = vmatpush1.msra.mxu0 %v3868
        %3904 = vmatprep.subr.mxu0 0.0
        %3905 = vmatpush1.msra.mxu0 %v3869
        %3906 = vmatprep.subr.mxu0 0.0
        %3907 = vmatpush1.msra.mxu0 %v3870
        %3908 = vmatprep.subr.mxu0 0.0
        %3909 = vmatpush1.msra.mxu0 %v3871
        %3910 = vmatprep.subr.mxu0 0.0
        %3911 = vmatpush1.msra.mxu0 %v3872
        %3912 = vmatprep.subr.mxu0 0.0
        %3913 = vmatpush1.msra.mxu0 %v3873
        %3914 = vmatprep.subr.mxu0 0.0
        %3915 = vmatpush1.msra.mxu0 %v3874
        %3916 = vmatprep.subr.mxu0 0.0
        %3917 = vmatpush1.msra.mxu0 %v3875
        %3918 = vmatprep.subr.mxu0 0.0
        %3919 = vmatpush1.msra.mxu0 %v3876
        %3920 = vmatprep.subr.mxu0 0.0
        %3921 = vmatpush1.msra.mxu0 %v3877
        %3922 = vmatprep.subr.mxu0 0.0
        %3923 = vmatpush1.msra.mxu0 %v3878
        %3924 = vmatprep.subr.mxu0 0.0
        %3925 = vmatpush1.msra.mxu0 %v3879
        %3926 = vmatprep.subr.mxu0 0.0
        %3927 = vmatpush1.msra.mxu0 %v3880
        %3928 = vmatprep.subr.mxu0 0.0
        %3929 = vmatpush1.msra.mxu0 %v3881
        %3930 = vmatprep.subr.mxu0 0.0
        %3931 = vmatpush1.msra.mxu0 %v3882
        %3932 = vmatprep.subr.mxu0 0.0
        %3933 = vmatpush1.msra.mxu0 %v3883
        %3934 = vmatprep.subr.mxu0 0.0
        %3935 = vmatpush1.msra.mxu0 %v3884
        %3936 = vmatprep.subr.mxu0 0.0
        %3937 = vmatpush1.msra.mxu0 %v3885
        %3938 = vmatprep.subr.mxu0 0.0
        %3939 = vmatpush1.msra.mxu0 %v3886
        %3940 = vmatprep.subr.mxu0 0.0
        %3941 = vmatpush1.msra.mxu0 %v3887
        %3942 = vmatprep.subr.mxu0 0.0
        %3943 = vmatpush1.msra.mxu0 %v3888
        %3944 = vmatprep.subr.mxu0 0.0
        %3945 = vmatpush1.msra.mxu0 %v3889
        %3946 = vmatprep.subr.mxu0 0.0
        %3947 = vmatpush1.msra.mxu0 %v3890
        %3948 = vmatprep.subr.mxu0 0.0
        %3949 = vmatpush1.msra.mxu0 %v3891
        %3950 = vmatprep.subr.mxu0 0.0
        %3951 = vmatpush1.msra.mxu0 %v3892
        %3952 = vmatprep.subr.mxu0 0.0
        %3953 = vmatpush1.msra.mxu0 %v3893
        %3954 = vmatprep.subr.mxu0 0.0
        %3955 = vmatpush1.msra.mxu0 %v3894
        %3956 = vmatprep.subr.mxu0 0.0
        %3957 = vmatpush1.msra.mxu0 %v3895
        %3958 = vmatprep.subr.mxu0 0.0
        %3959 = vmatpush1.msra.mxu0 %v3896
        %3960 = vmatprep.subr.mxu0 0.0
        %3961 = vmatpush1.msra.mxu0 %v3897
        %3962 = vmatprep.mubr.f32.mxu0 %v3865
        %3963 = vmatmul.mubr.f32.gmra.mrb[0].mxu0 %v3864
        %v3964 = vpop.f32.mrb[0].mxu0
        %v3965 = vadd.f32 0.0, %v3964
        %v3966 = vpop.f32.mrb[0].mxu0
        %3967 = vdwg.mxu0
        %v3968 = vld [vmem:[%s18] sm:$0x1]
        %v3970 = vlaneseq
        %v3971 = vshrl.u32 %v3970, 7
        %v3972 = vsub.s32 0, %v3971
        %v3973 = vrot.slane %v3968, %v3972
        %v3975 = vmul.f32 %v3965, %v3973
        %v3976 = vld [vmem:[%s19] sm:$0x1]
        %v3978 = vlaneseq
        %v3979 = vshrl.u32 %v3978, 7
        %v3980 = vsub.s32 0, %v3979
        %v3981 = vrot.slane %v3976, %v3980
        %v3983 = vadd.f32 %v3975, %v3981
        %v3984 = vmax.f32 %v3983, 0.0
        %v3985 = vld [vmem:[%s20] sm:$0xff]
        %v3986 = vld [vmem:[%s20 + $0x8] sm:$0xff]
        %v3987 = vld [vmem:[%s20 + $0x10] sm:$0xff]
        %v3988 = vld [vmem:[%s20 + $0x18] sm:$0xff]
        %v3989 = vld [vmem:[%s20 + $0x20] sm:$0xff]
        %v3990 = vld [vmem:[%s20 + $0x28] sm:$0xff]
        %v3991 = vld [vmem:[%s20 + $0x30] sm:$0xff]
        %v3992 = vld [vmem:[%s20 + $0x38] sm:$0xff]
        %v3993 = vld [vmem:[%s20 + $0x40] sm:$0xff]
        %v3994 = vld [vmem:[%s20 + $0x48] sm:$0xff]
        %v3995 = vld [vmem:[%s20 + $0x50] sm:$0xff]
        %v3996 = vld [vmem:[%s20 + $0x58] sm:$0xff]
        %v3997 = vld [vmem:[%s20 + $0x60] sm:$0xff]
        %v3998 = vld [vmem:[%s20 + $0x68] sm:$0xff]
        %v3999 = vld [vmem:[%s20 + $0x70] sm:$0xff]
        %v4000 = vld [vmem:[%s20 + $0x78] sm:$0xff]
        %v4001 = vld [vmem:[%s21] sm:$0x1]
        %v4003 = vlaneseq
        %v4004 = vshrl.u32 %v4003, 7
        %v4005 = vsub.s32 0, %v4004
        %v4006 = vrot.slane %v4001, %v4005
        %4008 = vmatprep.subr.mxu0 0.0
        %4009 = vmatpush1.msra.mxu0 %v3985
        %4010 = vmatprep.subr.mxu0 0.0
        %4011 = vmatpush1.msra.mxu0 %v3986
        %4012 = vmatprep.subr.mxu0 0.0
        %4013 = vmatpush1.msra.mxu0 %v3987
        %4014 = vmatprep.subr.mxu0 0.0
        %4015 = vmatpush1.msra.mxu0 %v3988
        %4016 = vmatprep.subr.mxu0 0.0
        %4017 = vmatpush1.msra.mxu0 %v3989
        %4018 = vmatprep.subr.mxu0 0.0
        %4019 = vmatpush1.msra.mxu0 %v3990
        %4020 = vmatprep.subr.mxu0 0.0
        %4021 = vmatpush1.msra.mxu0 %v3991
        %4022 = vmatprep.subr.mxu0 0.0
        %4023 = vmatpush1.msra.mxu0 %v3992
        %4024 = vmatprep.subr.mxu0 0.0
        %4025 = vmatpush1.msra.mxu0 %v3993
        %4026 = vmatprep.subr.mxu0 0.0
        %4027 = vmatpush1.msra.mxu0 %v3994
        %4028 = vmatprep.subr.mxu0 0.0
        %4029 = vmatpush1.msra.mxu0 %v3995
        %4030 = vmatprep.subr.mxu0 0.0
        %4031 = vmatpush1.msra.mxu0 %v3996
        %4032 = vmatprep.subr.mxu0 0.0
        %4033 = vmatpush1.msra.mxu0 %v3997
        %4034 = vmatprep.subr.mxu0 0.0
        %4035 = vmatpush1.msra.mxu0 %v3998
        %4036 = vmatprep.subr.mxu0 0.0
        %4037 = vmatpush1.msra.mxu0 %v3999
        %4038 = vmatprep.subr.mxu0 0.0
        %4039 = vmatpush1.msra.mxu0 %v4000
        %4040 = vmatprep.subr.mxu0 0.0
        %4041 = vmatpush1.msra.mxu0 0.0
        %4042 = vmatprep.subr.mxu0 0.0
        %4043 = vmatpush1.msra.mxu0 0.0
        %4044 = vmatprep.subr.mxu0 0.0
        %4045 = vmatpush1.msra.mxu0 0.0
        %4046 = vmatprep.subr.mxu0 0.0
        %4047 = vmatpush1.msra.mxu0 0.0
        %4048 = vmatprep.subr.mxu0 0.0
        %4049 = vmatpush1.msra.mxu0 0.0
        %4050 = vmatprep.subr.mxu0 0.0
        %4051 = vmatpush1.msra.mxu0 0.0
        %4052 = vmatprep.subr.mxu0 0.0
        %4053 = vmatpush1.msra.mxu0 0.0
        %4054 = vmatprep.subr.mxu0 0.0
        %4055 = vmatpush1.msra.mxu0 0.0
        %4056 = vmatprep.subr.mxu0 0.0
        %4057 = vmatpush1.msra.mxu0 0.0
        %4058 = vmatprep.subr.mxu0 0.0
        %4059 = vmatpush1.msra.mxu0 0.0
        %4060 = vmatprep.subr.mxu0 0.0
        %4061 = vmatpush1.msra.mxu0 0.0
        %4062 = vmatprep.subr.mxu0 0.0
        %4063 = vmatpush1.msra.mxu0 0.0
        %4064 = vmatprep.subr.mxu0 0.0
        %4065 = vmatpush1.msra.mxu0 0.0
        %4066 = vmatprep.subr.mxu0 0.0
        %4067 = vmatpush1.msra.mxu0 0.0
        %4068 = vmatprep.subr.mxu0 0.0
        %4069 = vmatpush1.msra.mxu0 0.0
        %4070 = vmatprep.subr.mxu0 0.0
        %4071 = vmatpush1.msra.mxu0 0.0
        %4072 = vmatprep.mubr.f32.mxu0 0.0
        %4073 = vmatmul.mubr.f32.gmra.mrb[0].mxu0 %v3984
        %v4074 = vpop.f32.mrb[0].mxu0
        %v4075 = vadd.f32 %v4006, %v4074
        %v4076 = vpop.f32.mrb[0].mxu0
        %4077 = vdwg.mxu0
        %vm4078 = vcmask 80896
        %4079 = vst.msk [vmem:[%s761] sm:$0xff] %vm4078, %v4075
        %s4080 = sand.u32 %s515, 1
        %s4081 = scalar_lea.sflag [#allocation10], %s4080
        %s4082 = sand.u32 %s515, 1
        %s4083 = smul.addr %s4082, 8
        %s4084 = scalar_lea.vmem [#allocation19], %s4083
        // Predicated region
        $region133: #{_lambda_.1} parent=107 // pred_check
          %p4085 = pneg %p525
        $region134: #{_lambda_.1} parent=107 // pred_check_branch
          %4087 = sbr.rel (%p4085) target = $region136
        $region135: #{_lambda_.1} parent=107 // pred_region
          %s4089 = ssub.s32 128, 128
          %4090 = vsyncadd %s4081, %s4089
          %s4091 = smul.addr %s40, 128
          %s4092 = scalar_lea.hbm %s22, %s4091
          %s4094 = sshll.u32 %s4084, 4
          %s4095 = int_to_ptr.vmem [resolvable:$true] %s4094
          %4097 = dma.vmem_to_hbm [thread:$0]  %s4095, 128, %s4092, %s4081
        $region136: #{_lambda_.1} parent=107 // pred_fallthru
          _
      $region108: #{_lambda_.1} parent=5 // pred_fallthru
        _
      %p4098 = scmp.le.s32.totalorder 2, %s35
      // Predicated region
      $region137: #{_lambda_.1} parent=5 // pred_check
        %p4099 = pneg %p4098
      $region138: #{_lambda_.1} parent=5 // pred_check_branch
        %4101 = sbr.rel (%p4099) target = $region140
      $region139: #{_lambda_.1} parent=5 // pred_region
        %s4102 = ssub.s32 %s35, 2
        // Predicated region
        $region141: #{_lambda_.1} parent=139 // pred_check
          %p4103 = pneg %p531
        $region142: #{_lambda_.1} parent=139 // pred_check_branch
          %4105 = sbr.rel (%p4103) target = $region144
        $region143: #{_lambda_.1} parent=139 // pred_region
          %s4106 = sand.u32 %s516, 1
          %s4107 = scalar_lea.sflag [#allocation10], %s4106
          %s4108 = sand.u32 %s516, 1
          %s4109 = smul.addr %s4108, 8
          %s4110 = scalar_lea.vmem [#allocation19], %s4109
          %4111 = dma.done %s4107, 128
        $region144: #{_lambda_.1} parent=139 // pred_fallthru
          _
      $region140: #{_lambda_.1} parent=5 // pred_fallthru
        _
    $region6: #{_lambda_.1} parent=1 // loop_footer
      %s39 = sadd.s32 1, %s35
    $region7: #{_lambda_.1} parent=1 // loop_footer_branch
      %34 = sbr.rel target = $region3
    $region8: #{_lambda_.1} parent=1 // loop_exit
      _
    %4112 = vsyncpa [#allocation9], 1
    %s4113 = scalar_lea.sflag [#allocation9], 1
    %4114 = vsyncpa %s4113, 1
    %4115 = vsyncpa [#allocation12], 1
    %4116 = vsyncpa [#allocation15], 1
    %4117 = vsyncpa [#allocation18], 1
    %4118 = vsyncpa [#allocation10], 1
    %s4119 = scalar_lea.sflag [#allocation10], 1
    %4120 = vsyncpa %s4119, 1

</llo_original>
